<compile_context>
chip_gen: v6e
topology: v6e:2x2x1
jax: 0.10.0
libtpu: 0.0.40
codegen_flags: <defaults>
</compile_context>

<pallas_src>
import math

import jax
import jax.numpy as jnp
from jax.experimental import pallas as pl
from jax.experimental.pallas import tpu as pltpu

NEG_SLOPE = 0.2
SQRT2 = math.sqrt(2.0)

_SMALL_INPUT_BYTES = 256 * 1024  # below this, fused XLA elementwise wins on latency


def _scaled_leaky_relu_kernel(x_ref, o_ref):
    x = x_ref[...]
    pos = jnp.asarray(SQRT2, x.dtype)
    neg = jnp.asarray(NEG_SLOPE * SQRT2, x.dtype)
    # Folded scale: 3 VPU ops per vreg (cmp, select, mul).
    o_ref[...] = (x * jnp.where(x >= 0, pos, neg)).astype(o_ref.dtype)


def _reference(x):
    # Same math as the PyTorch module: leaky_relu(x, 0.2) * sqrt(2).
    return jnp.where(x >= 0, x, x * jnp.asarray(NEG_SLOPE, x.dtype)) * jnp.asarray(
        SQRT2, x.dtype
    )


def _tpu_generation() -> str:
    try:
        kind = jax.devices()[0].device_kind.lower()
    except Exception:
        return "unknown"
    for gen in ("v7", "v6", "v5"):
        if gen in kind:
            return gen
    return "unknown"


def _gen_config(gen: str) -> dict:
    if gen == "v7":
        # 2 TCs/chip, ~3.2 TB/s HBM: a 2 MiB block's DMA is ~1.3 us, so bigger
        # blocks are needed to amortize ~0.35 us/step overhead.  Double-buffered
        # in+out = 4 x 8 MiB = 32 MiB <= 40 MiB scoped (64 MiB physical VMEM).
        return dict(target_block_bytes=8 << 20, vmem_limit_bytes=40 << 20, two_cores=True)
    if gen == "v6":
        # 4 bufs x 4 MiB = 16 MiB fits the 32 MiB default scoped VMEM; single TC.
        return dict(target_block_bytes=4 << 20, vmem_limit_bytes=None, two_cores=False)
    # v5e has only a 16 MiB default scoped VMEM -> keep 2 MiB blocks (8 MiB total),
    # already ~85%+ of its 0.82 TB/s roofline.  Unknown chips: same conservative pick.
    return dict(target_block_bytes=2 << 20, vmem_limit_bytes=None, two_cores=False)


def _sublane_multiple(dtype) -> int:
    # f32 -> 8, bf16/f16 -> 16, int8/fp8 -> 32 (packed rows travel in pairs/quads).
    return {4: 8, 2: 16, 1: 32}.get(jnp.dtype(dtype).itemsize, 8)


def _round_up(v: int, m: int) -> int:
    return ((v + m - 1) // m) * m


def _pick_block_rows(rows, bytes_per_row, sublane, target_bytes, two_cores):
    if rows <= sublane:
        return rows
    br = max(sublane, (target_bytes // bytes_per_row) // sublane * sublane)
    br = min(br, rows)
    if two_cores:
        nb = pl.cdiv(rows, br)
        if nb == 1:
            nb = 2  # give both v7x TensorCores a block
        elif nb % 2 and nb <= 8:
            nb += 1  # avoid a ~20% tail imbalance on small grids
        br = min(rows, _round_up(pl.cdiv(rows, nb), sublane))
    return br


def scaled_leaky_relu(x: jax.Array, *, donate_input: bool = False) -> jax.Array:
    """Elementwise scaled leaky relu. Accepts any shape (NCHW expected)."""
    orig_shape = x.shape
    dtype = x.dtype
    n = x.size
    itemsize = jnp.dtype(dtype).itemsize

    # Fast-path bypass:
    #  - tiny tensors: pallas_call dispatch + per-step overhead > fused XLA cost;
    #  - non-128-divisible element counts: a Pallas path would need pad + slice
    #    (extra full HBM passes); XLA's fused elementwise is already at roofline.
    if n == 0 or n * itemsize < _SMALL_INPUT_BYTES or n % 128 != 0:
        return x * jnp.where(
            x >= 0,
            jnp.asarray(SQRT2, dtype),
            jnp.asarray(NEG_SLOPE * SQRT2, dtype),
        )

    # Widest lane dim (multiple of 128) that divides n: free reshape, no pad/slice.
    lane = 128
    for cand in (1024, 512, 256):
        if n % cand == 0:
            lane = cand
            break
    rows = n // lane
    slab = x.reshape(rows, lane)

    cfg = _gen_config(_tpu_generation())
    sublane = _sublane_multiple(dtype)
    block_rows = _pick_block_rows(
        rows, lane * itemsize, sublane, cfg["target_block_bytes"], cfg["two_cores"]
    )
    grid = (pl.cdiv(rows, block_rows),)  # partial last block is masked by Pallas

    out = pl.pallas_call(
        _scaled_leaky_relu_kernel,
        out_shape=jax.ShapeDtypeStruct((rows, lane), dtype),
        grid_spec=pltpu.PrefetchScalarGridSpec(
            num_scalar_prefetch=0,
            grid=grid,
            in_specs=[pl.BlockSpec((block_rows, lane), lambda i: (i, 0))],
            out_specs=pl.BlockSpec((block_rows, lane), lambda i: (i, 0)),
        ),
        compiler_params=pltpu.CompilerParams(
            dimension_semantics=("parallel",),
            vmem_limit_bytes=cfg["vmem_limit_bytes"],
        ),
        cost_estimate=pl.CostEstimate(
            flops=3 * n, transcendentals=0, bytes_accessed=2 * n * itemsize
        ),
        # Same-shape elementwise: allow buffer reuse when the caller donates x.
        input_output_aliases=({0: 0} if donate_input else {}),
    )(slab)

    return out.reshape(orig_shape)


if __name__ == "__main__":
    # Small NCHW input consistent with the discriminator activations
    # (hits the tiny-input XLA fast path on purpose).
    x = jax.random.normal(jax.random.PRNGKey(0), (2, 4, 16, 16), dtype=jnp.float32)
    y = scaled_leaky_relu(x)
    jax.block_until_ready(y)
    ref = _reference(x)
    assert y.shape == x.shape and y.dtype == x.dtype
    assert jnp.allclose(y, ref, atol=1e-6, rtol=1e-6), "mismatch vs reference (small)"

    # Larger input exercising the multi-block Pallas path (f32, sublane=8).
    x2 = jax.random.normal(jax.random.PRNGKey(1), (4, 64, 64, 64), dtype=jnp.float32)
    y2 = scaled_leaky_relu(x2)
    jax.block_until_ready(y2)
    assert jnp.allclose(y2, _reference(x2), atol=1e-6, rtol=1e-6), "mismatch (large f32)"

    # bf16 path (sublane multiple of 16).
    x3 = jax.random.normal(jax.random.PRNGKey(2), (2, 128, 32, 32), dtype=jnp.bfloat16)
    y3 = scaled_leaky_relu(x3)
    jax.block_until_ready(y3)
    assert jnp.allclose(
        y3.astype(jnp.float32), _reference(x3).astype(jnp.float32), atol=2e-2, rtol=2e-2
    ), "mismatch (bf16)"

    # Irregular element count -> single-pass XLA fallback (no pad/slice HBM passes).
    x4 = jax.random.normal(jax.random.PRNGKey(3), (3, 5, 7, 11), dtype=jnp.float32)
    y4 = scaled_leaky_relu(x4)
    jax.block_until_ready(y4)
    assert jnp.allclose(y4, _reference(x4), atol=1e-6, rtol=1e-6), "mismatch (irregular)"

    print("KERNEL_OK")
</pallas_src>

<mosaic_0001>
module attributes {stable_mosaic.version = 11 : i64} {
  func.func @_scaled_leaky_relu_kernel(%arg0: i32, %arg1: memref<512x1024xf32, #tpu.memory_space<vmem>>, %arg2: memref<512x1024xf32, #tpu.memory_space<vmem>>) attributes {dimension_semantics = [#tpu.dimension_semantics<parallel>], iteration_bounds = array<i64: 2>, scalar_prefetch = 0 : i64, scratch_operands = 0 : i64, tpu.core_type = #tpu.core_type<tc>, window_params = [{transform_indices = @transform_0, window_bounds = array<i64: 512, 1024>}, {transform_indices = @transform_1, window_bounds = array<i64: 512, 1024>}]} {
    %c0 = arith.constant 0 : index
    %c0_0 = arith.constant 0 : index
    %0 = vector.load %arg1[%c0, %c0_0] : memref<512x1024xf32, #tpu.memory_space<vmem>>, vector<512x1024xf32>
    %cst = arith.constant 0.000000e+00 : f32
    %1 = vector.broadcast %cst : f32 to vector<512x1024xf32>
    %2 = arith.cmpf oge, %0, %1 : vector<512x1024xf32>
    %cst_1 = arith.constant 1.41421354 : f32
    %cst_2 = arith.constant 0.282842726 : f32
    %3 = vector.broadcast %cst_1 : f32 to vector<512x1024xf32>
    %4 = vector.broadcast %cst_2 : f32 to vector<512x1024xf32>
    %5 = arith.select %2, %3, %4 : vector<512x1024xi1>, vector<512x1024xf32>
    %6 = arith.mulf %0, %5 : vector<512x1024xf32>
    %c0_3 = arith.constant 0 : index
    %c0_4 = arith.constant 0 : index
    %7 = vector.load %arg2[%c0_3, %c0_4] : memref<512x1024xf32, #tpu.memory_space<vmem>>, vector<512x1024xf32>
    tpu.vector_store %arg2[%c0_3, %c0_4], %6 {strides = array<i32>} : memref<512x1024xf32, #tpu.memory_space<vmem>>, vector<512x1024xf32>,
    return
  }
  func.func @transform_0(%arg0: i32) -> (i32, i32) {
    %c0_i32 = arith.constant 0 : i32
    %c0_i32_0 = arith.constant 0 : i32
    return %arg0, %c0_i32 : i32, i32
  }
  func.func @transform_1(%arg0: i32) -> (i32, i32) {
    %c0_i32 = arith.constant 0 : i32
    %c0_i32_0 = arith.constant 0 : i32
    return %arg0, %c0_i32 : i32, i32
  }
}

</mosaic_0001>

<llo_original>
// kernel: tpu_custom_call.1
$region0: #{tpu_custom_call.1}
  #allocation0 [shape = 'u32[]', space=smem, size = 0x4, offset = 0x4, fixed_abs, tag = 'smem constant byte address 0x4 - core index']
  #allocation1 [shape = 'u32[144,128]{1,0:T(1,128)}', space=vmem, size = 0x12000, scoped, tag = 'internal scratch']
  %s0 = inlined_call_operand.hbm [shape: f32[1024,1024], index: 0, kind: input, shape index: {}]
  %s1 = inlined_call_operand.hbm [shape: f32[1024,1024], index: 1, kind: output, shape index: {}]
  %s2 = sld [smem:[#allocation0]]
  $region41: #{tpu_custom_call.1} parent=0
    _
  %s4 = ssub.s32 1, %s2
  %s5 = scalar_select 0, %s4, %s2
  $region1: #{tpu_custom_call.1} parent=0
    #allocation2 [shape = 'u8[4194304]{0}', space=vmem, size = 0x400000, scoped, tag = 'input window, operand 0']
    #allocation3 [shape = 's32[2]{0}', space=sflag, size = 0x8, scoped, tag = 'scoped memory for tpu_custom_call.1']
    #allocation4 [shape = 's32[2]{0}', space=sflag, size = 0x8, scoped, tag = 'scoped memory for tpu_custom_call.1']
    #allocation5 [shape = 'u8[4194304]{0}', space=vmem, size = 0x400000, scoped, tag = 'output window, operand 0']
    %6 = vsyncpa [#allocation3], 0
    %s7 = scalar_lea.sflag [#allocation3], 1
    %8 = vsyncpa %s7, 0
    %9 = vsyncpa [#allocation4], 0
    %s10 = scalar_lea.sflag [#allocation4], 1
    %11 = vsyncpa %s10, 0
    loop: start=0, step=1, limit=4
    $region2: #{tpu_custom_call.1} parent=1 // loop_pre_header
      _
    $region3: #{tpu_custom_call.1} parent=1 // loop_header
      %s13 = sphi 0, %s17
      %p14 = scmp.ge.s32.totalorder %s13, 4
      %s23 = sphi 0, %s25
      %s26 = sphi 0, %s23
      %s27 = sphi 0, %s26
      %s43 = sphi 0, %s27
      %s49 = sphi 0, %s51
      %s52 = sphi 0, %s49
      %s53 = sphi 0, %s52
      %s69 = sphi 0, %s53
    $region4: #{tpu_custom_call.1} parent=1 // loop_header_branch
      %16 = sbr.rel (%p14) target = $region8
    $region5: #{tpu_custom_call.1} parent=1 // loop_body
      %s18 = ssub.s32 %s13, 1
      %s19 = ssub.s32 %s13, 2
      %s20 = sadd.s32 %s13, 1
      %s21 = ssub.s32 %s13, %s20
      %p22 = scmp.eq.s32.totalorder %s21, 0
      %s24 = sadd.s32 %s23, 1
      %s25 = scalar_select %p22, %s23, %s24
      %p28 = pneg %p22
      %p29 = scmp.eq.s32.totalorder %s13, 1
      %p30 = por %p28, %p29
      %p31 = scmp.ne.s32.totalorder %s23, %s26
      %p32 = scmp.eq.s32.totalorder %s13, 0
      %p33 = por %p31, %p32
      %p34 = scmp.ne.s32.totalorder %s23, %s26
      %p35 = scmp.eq.s32.totalorder %s18, 1
      %p36 = por %p34, %p35
      %p37 = scmp.ne.s32.totalorder %s26, %s27
      %p38 = scmp.eq.s32.totalorder %s18, 0
      %p39 = por %p37, %p38
      %p40 = scmp.ne.s32.totalorder %s26, %s27
      %p41 = scmp.eq.s32.totalorder %s19, 1
      %p42 = por %p40, %p41
      %p44 = scmp.ne.s32.totalorder %s27, %s43
      %p45 = scmp.eq.s32.totalorder %s19, 0
      %p46 = por %p44, %p45
      %s47 = ssub.s32 %s13, %s20
      %p48 = scmp.eq.s32.totalorder %s47, 0
      %s50 = sadd.s32 %s49, 1
      %s51 = scalar_select %p48, %s49, %s50
      %p54 = pneg %p48
      %p55 = scmp.eq.s32.totalorder %s13, 1
      %p56 = por %p54, %p55
      %p57 = scmp.ne.s32.totalorder %s49, %s52
      %p58 = scmp.eq.s32.totalorder %s13, 0
      %p59 = por %p57, %p58
      %p60 = scmp.ne.s32.totalorder %s49, %s52
      %p61 = scmp.eq.s32.totalorder %s18, 1
      %p62 = por %p60, %p61
      %p63 = scmp.ne.s32.totalorder %s52, %s53
      %p64 = scmp.eq.s32.totalorder %s18, 0
      %p65 = por %p63, %p64
      %p66 = scmp.ne.s32.totalorder %s52, %s53
      %p67 = scmp.eq.s32.totalorder %s19, 1
      %p68 = por %p66, %p67
      %p70 = scmp.ne.s32.totalorder %s53, %s69
      %p71 = scmp.eq.s32.totalorder %s19, 0
      %p72 = por %p70, %p71
      %p73 = scmp.le.s32.totalorder 1, %s13
      %p74 = scmp.lt.s32.totalorder %s13, 3
      %p75 = pnand %p73, %p74
      %p76 = pneg %p75
      // Predicated region
      $region9: #{tpu_custom_call.1} parent=5 // pred_check
        _
      $region10: #{tpu_custom_call.1} parent=5 // pred_check_branch
        %78 = sbr.rel (%p75) target = $region12
      $region11: #{tpu_custom_call.1} parent=5 // pred_region
        %s79 = ssub.s32 %s13, 1
      $region12: #{tpu_custom_call.1} parent=5 // pred_fallthru
        _
      %p80 = scmp.lt.s32.totalorder %s13, 2
      // Predicated region
      $region13: #{tpu_custom_call.1} parent=5 // pred_check
        %p81 = pneg %p80
      $region14: #{tpu_custom_call.1} parent=5 // pred_check_branch
        %83 = sbr.rel (%p81) target = $region16
      $region15: #{tpu_custom_call.1} parent=5 // pred_region
        // Predicated region
        $region17: #{tpu_custom_call.1} parent=15 // pred_check
          %p84 = pneg %p33
        $region18: #{tpu_custom_call.1} parent=15 // pred_check_branch
          %86 = sbr.rel (%p84) target = $region20
        $region19: #{tpu_custom_call.1} parent=15 // pred_region
          %s87 = sand.u32 %s23, 1
          %s88 = scalar_lea.sflag [#allocation3], %s87
          %s89 = sand.u32 %s23, 1
          %s90 = smul.addr %s89, 4096
          %s91 = scalar_lea.vmem [#allocation2], %s90
          %s92 = smul.u32 64, %s13
          %s94 = ssub.s32 65536, 65536
          %95 = vsyncadd %s88, %s94
          %s96 = smul.addr %s92, 8
          %s97 = smul.addr %s96, 128
          %s98 = scalar_lea.hbm %s0, %s97
          %s99 = sshll.u32 %s91, 4
          %s100 = int_to_ptr.vmem [resolvable:$true] %s99
          %105 = dma.hbm_to_vmem [thread:$0]  %s98, 65536, %s100, %s88, 1024, 1024, 64
        $region20: #{tpu_custom_call.1} parent=15 // pred_fallthru
          _
      $region16: #{tpu_custom_call.1} parent=5 // pred_fallthru
        _
      %p106 = scmp.le.s32.totalorder 1, %s13
      %p107 = scmp.lt.s32.totalorder %s13, 3
      %p108 = pnand %p106, %p107
      %p109 = pneg %p108
      // Predicated region
      $region21: #{tpu_custom_call.1} parent=5 // pred_check
        _
      $region22: #{tpu_custom_call.1} parent=5 // pred_check_branch
        %111 = sbr.rel (%p108) target = $region24
      $region23: #{tpu_custom_call.1} parent=5 // pred_region
        %s112 = ssub.s32 %s13, 1
        %s113 = sand.u32 %s26, 1
        %s114 = scalar_lea.sflag [#allocation3], %s113
        %s115 = sand.u32 %s26, 1
        %s116 = smul.addr %s115, 4096
        %s117 = scalar_lea.vmem [#allocation2], %s116
        // Predicated region
        $region25: #{tpu_custom_call.1} parent=23 // pred_check
          %p118 = pneg %p39
        $region26: #{tpu_custom_call.1} parent=23 // pred_check_branch
          %120 = sbr.rel (%p118) target = $region28
        $region27: #{tpu_custom_call.1} parent=23 // pred_region
          %121 = dma.done %s114, 65536
        $region28: #{tpu_custom_call.1} parent=23 // pred_fallthru
          _
        %s122 = sand.u32 %s26, 1
        %s123 = scalar_lea.sflag [#allocation3], %s122
        %s124 = sand.u32 %s26, 1
        %s125 = smul.addr %s124, 4096
        %s126 = scalar_lea.vmem [#allocation2], %s125
        %p127 = pneg %p39
        %p128 = pneg %p36
        %p129 = pneg %p65
        %p130 = pneg %p62
        %s131 = sand.u32 %s52, 1
        %s132 = scalar_lea.sflag [#allocation4], %s131
        %s133 = sand.u32 %s52, 1
        %s134 = smul.addr %s133, 4096
        %s135 = scalar_lea.vmem [#allocation5], %s134
        %s136 = smul.u32 64, %s18
        %s137 = smul.u32 64, %s18
        %v138 = vld [vmem:[%s117] sm:$0xff]
        %v139 = vld [vmem:[%s117 + $0x8] sm:$0xff]
        %v140 = vld [vmem:[%s117 + $0x10] sm:$0xff]
        %v141 = vld [vmem:[%s117 + $0x18] sm:$0xff]
        %v142 = vld [vmem:[%s117 + $0x20] sm:$0xff]
        %v143 = vld [vmem:[%s117 + $0x28] sm:$0xff]
        %v144 = vld [vmem:[%s117 + $0x30] sm:$0xff]
        %v145 = vld [vmem:[%s117 + $0x38] sm:$0xff]
        %v146 = vld [vmem:[%s117 + $0x40] sm:$0xff]
        %v147 = vld [vmem:[%s117 + $0x48] sm:$0xff]
        %v148 = vld [vmem:[%s117 + $0x50] sm:$0xff]
        %v149 = vld [vmem:[%s117 + $0x58] sm:$0xff]
        %v150 = vld [vmem:[%s117 + $0x60] sm:$0xff]
        %v151 = vld [vmem:[%s117 + $0x68] sm:$0xff]
        %v152 = vld [vmem:[%s117 + $0x70] sm:$0xff]
        %v153 = vld [vmem:[%s117 + $0x78] sm:$0xff]
        %v154 = vld [vmem:[%s117 + $0x80] sm:$0xff]
        %v155 = vld [vmem:[%s117 + $0x88] sm:$0xff]
        %v156 = vld [vmem:[%s117 + $0x90] sm:$0xff]
        %v157 = vld [vmem:[%s117 + $0x98] sm:$0xff]
        %v158 = vld [vmem:[%s117 + $0xa0] sm:$0xff]
        %v159 = vld [vmem:[%s117 + $0xa8] sm:$0xff]
        %v160 = vld [vmem:[%s117 + $0xb0] sm:$0xff]
        %v161 = vld [vmem:[%s117 + $0xb8] sm:$0xff]
        %v162 = vld [vmem:[%s117 + $0xc0] sm:$0xff]
        %v163 = vld [vmem:[%s117 + $0xc8] sm:$0xff]
        %v164 = vld [vmem:[%s117 + $0xd0] sm:$0xff]
        %v165 = vld [vmem:[%s117 + $0xd8] sm:$0xff]
        %v166 = vld [vmem:[%s117 + $0xe0] sm:$0xff]
        %v167 = vld [vmem:[%s117 + $0xe8] sm:$0xff]
        %v168 = vld [vmem:[%s117 + $0xf0] sm:$0xff]
        %v169 = vld [vmem:[%s117 + $0xf8] sm:$0xff]
        %v170 = vld [vmem:[%s117 + $0x100] sm:$0xff]
        %v171 = vld [vmem:[%s117 + $0x108] sm:$0xff]
        %v172 = vld [vmem:[%s117 + $0x110] sm:$0xff]
        %v173 = vld [vmem:[%s117 + $0x118] sm:$0xff]
        %v174 = vld [vmem:[%s117 + $0x120] sm:$0xff]
        %v175 = vld [vmem:[%s117 + $0x128] sm:$0xff]
        %v176 = vld [vmem:[%s117 + $0x130] sm:$0xff]
        %v177 = vld [vmem:[%s117 + $0x138] sm:$0xff]
        %v178 = vld [vmem:[%s117 + $0x140] sm:$0xff]
        %v179 = vld [vmem:[%s117 + $0x148] sm:$0xff]
        %v180 = vld [vmem:[%s117 + $0x150] sm:$0xff]
        %v181 = vld [vmem:[%s117 + $0x158] sm:$0xff]
        %v182 = vld [vmem:[%s117 + $0x160] sm:$0xff]
        %v183 = vld [vmem:[%s117 + $0x168] sm:$0xff]
        %v184 = vld [vmem:[%s117 + $0x170] sm:$0xff]
        %v185 = vld [vmem:[%s117 + $0x178] sm:$0xff]
        %v186 = vld [vmem:[%s117 + $0x180] sm:$0xff]
        %v187 = vld [vmem:[%s117 + $0x188] sm:$0xff]
        %v188 = vld [vmem:[%s117 + $0x190] sm:$0xff]
        %v189 = vld [vmem:[%s117 + $0x198] sm:$0xff]
        %v190 = vld [vmem:[%s117 + $0x1a0] sm:$0xff]
        %v191 = vld [vmem:[%s117 + $0x1a8] sm:$0xff]
        %v192 = vld [vmem:[%s117 + $0x1b0] sm:$0xff]
        %v193 = vld [vmem:[%s117 + $0x1b8] sm:$0xff]
        %v194 = vld [vmem:[%s117 + $0x1c0] sm:$0xff]
        %v195 = vld [vmem:[%s117 + $0x1c8] sm:$0xff]
        %v196 = vld [vmem:[%s117 + $0x1d0] sm:$0xff]
        %v197 = vld [vmem:[%s117 + $0x1d8] sm:$0xff]
        %v198 = vld [vmem:[%s117 + $0x1e0] sm:$0xff]
        %v199 = vld [vmem:[%s117 + $0x1e8] sm:$0xff]
        %v200 = vld [vmem:[%s117 + $0x1f0] sm:$0xff]
        %v201 = vld [vmem:[%s117 + $0x1f8] sm:$0xff]
        %v202 = vld [vmem:[%s117 + $0x200] sm:$0xff]
        %v203 = vld [vmem:[%s117 + $0x208] sm:$0xff]
        %v204 = vld [vmem:[%s117 + $0x210] sm:$0xff]
        %v205 = vld [vmem:[%s117 + $0x218] sm:$0xff]
        %v206 = vld [vmem:[%s117 + $0x220] sm:$0xff]
        %v207 = vld [vmem:[%s117 + $0x228] sm:$0xff]
        %v208 = vld [vmem:[%s117 + $0x230] sm:$0xff]
        %v209 = vld [vmem:[%s117 + $0x238] sm:$0xff]
        %v210 = vld [vmem:[%s117 + $0x240] sm:$0xff]
        %v211 = vld [vmem:[%s117 + $0x248] sm:$0xff]
        %v212 = vld [vmem:[%s117 + $0x250] sm:$0xff]
        %v213 = vld [vmem:[%s117 + $0x258] sm:$0xff]
        %v214 = vld [vmem:[%s117 + $0x260] sm:$0xff]
        %v215 = vld [vmem:[%s117 + $0x268] sm:$0xff]
        %v216 = vld [vmem:[%s117 + $0x270] sm:$0xff]
        %v217 = vld [vmem:[%s117 + $0x278] sm:$0xff]
        %v218 = vld [vmem:[%s117 + $0x280] sm:$0xff]
        %v219 = vld [vmem:[%s117 + $0x288] sm:$0xff]
        %v220 = vld [vmem:[%s117 + $0x290] sm:$0xff]
        %v221 = vld [vmem:[%s117 + $0x298] sm:$0xff]
        %v222 = vld [vmem:[%s117 + $0x2a0] sm:$0xff]
        %v223 = vld [vmem:[%s117 + $0x2a8] sm:$0xff]
        %v224 = vld [vmem:[%s117 + $0x2b0] sm:$0xff]
        %v225 = vld [vmem:[%s117 + $0x2b8] sm:$0xff]
        %v226 = vld [vmem:[%s117 + $0x2c0] sm:$0xff]
        %v227 = vld [vmem:[%s117 + $0x2c8] sm:$0xff]
        %v228 = vld [vmem:[%s117 + $0x2d0] sm:$0xff]
        %v229 = vld [vmem:[%s117 + $0x2d8] sm:$0xff]
        %v230 = vld [vmem:[%s117 + $0x2e0] sm:$0xff]
        %v231 = vld [vmem:[%s117 + $0x2e8] sm:$0xff]
        %v232 = vld [vmem:[%s117 + $0x2f0] sm:$0xff]
        %v233 = vld [vmem:[%s117 + $0x2f8] sm:$0xff]
        %v234 = vld [vmem:[%s117 + $0x300] sm:$0xff]
        %v235 = vld [vmem:[%s117 + $0x308] sm:$0xff]
        %v236 = vld [vmem:[%s117 + $0x310] sm:$0xff]
        %v237 = vld [vmem:[%s117 + $0x318] sm:$0xff]
        %v238 = vld [vmem:[%s117 + $0x320] sm:$0xff]
        %v239 = vld [vmem:[%s117 + $0x328] sm:$0xff]
        %v240 = vld [vmem:[%s117 + $0x330] sm:$0xff]
        %v241 = vld [vmem:[%s117 + $0x338] sm:$0xff]
        %v242 = vld [vmem:[%s117 + $0x340] sm:$0xff]
        %v243 = vld [vmem:[%s117 + $0x348] sm:$0xff]
        %v244 = vld [vmem:[%s117 + $0x350] sm:$0xff]
        %v245 = vld [vmem:[%s117 + $0x358] sm:$0xff]
        %v246 = vld [vmem:[%s117 + $0x360] sm:$0xff]
        %v247 = vld [vmem:[%s117 + $0x368] sm:$0xff]
        %v248 = vld [vmem:[%s117 + $0x370] sm:$0xff]
        %v249 = vld [vmem:[%s117 + $0x378] sm:$0xff]
        %v250 = vld [vmem:[%s117 + $0x380] sm:$0xff]
        %v251 = vld [vmem:[%s117 + $0x388] sm:$0xff]
        %v252 = vld [vmem:[%s117 + $0x390] sm:$0xff]
        %v253 = vld [vmem:[%s117 + $0x398] sm:$0xff]
        %v254 = vld [vmem:[%s117 + $0x3a0] sm:$0xff]
        %v255 = vld [vmem:[%s117 + $0x3a8] sm:$0xff]
        %v256 = vld [vmem:[%s117 + $0x3b0] sm:$0xff]
        %v257 = vld [vmem:[%s117 + $0x3b8] sm:$0xff]
        %v258 = vld [vmem:[%s117 + $0x3c0] sm:$0xff]
        %v259 = vld [vmem:[%s117 + $0x3c8] sm:$0xff]
        %v260 = vld [vmem:[%s117 + $0x3d0] sm:$0xff]
        %v261 = vld [vmem:[%s117 + $0x3d8] sm:$0xff]
        %v262 = vld [vmem:[%s117 + $0x3e0] sm:$0xff]
        %v263 = vld [vmem:[%s117 + $0x3e8] sm:$0xff]
        %v264 = vld [vmem:[%s117 + $0x3f0] sm:$0xff]
        %v265 = vld [vmem:[%s117 + $0x3f8] sm:$0xff]
        %v266 = vld [vmem:[%s117 + $0x400] sm:$0xff]
        %v267 = vld [vmem:[%s117 + $0x408] sm:$0xff]
        %v268 = vld [vmem:[%s117 + $0x410] sm:$0xff]
        %v269 = vld [vmem:[%s117 + $0x418] sm:$0xff]
        %v270 = vld [vmem:[%s117 + $0x420] sm:$0xff]
        %v271 = vld [vmem:[%s117 + $0x428] sm:$0xff]
        %v272 = vld [vmem:[%s117 + $0x430] sm:$0xff]
        %v273 = vld [vmem:[%s117 + $0x438] sm:$0xff]
        %v274 = vld [vmem:[%s117 + $0x440] sm:$0xff]
        %v275 = vld [vmem:[%s117 + $0x448] sm:$0xff]
        %v276 = vld [vmem:[%s117 + $0x450] sm:$0xff]
        %v277 = vld [vmem:[%s117 + $0x458] sm:$0xff]
        %v278 = vld [vmem:[%s117 + $0x460] sm:$0xff]
        %v279 = vld [vmem:[%s117 + $0x468] sm:$0xff]
        %v280 = vld [vmem:[%s117 + $0x470] sm:$0xff]
        %v281 = vld [vmem:[%s117 + $0x478] sm:$0xff]
        %v282 = vld [vmem:[%s117 + $0x480] sm:$0xff]
        %v283 = vld [vmem:[%s117 + $0x488] sm:$0xff]
        %v284 = vld [vmem:[%s117 + $0x490] sm:$0xff]
        %v285 = vld [vmem:[%s117 + $0x498] sm:$0xff]
        %v286 = vld [vmem:[%s117 + $0x4a0] sm:$0xff]
        %v287 = vld [vmem:[%s117 + $0x4a8] sm:$0xff]
        %v288 = vld [vmem:[%s117 + $0x4b0] sm:$0xff]
        %v289 = vld [vmem:[%s117 + $0x4b8] sm:$0xff]
        %v290 = vld [vmem:[%s117 + $0x4c0] sm:$0xff]
        %v291 = vld [vmem:[%s117 + $0x4c8] sm:$0xff]
        %v292 = vld [vmem:[%s117 + $0x4d0] sm:$0xff]
        %v293 = vld [vmem:[%s117 + $0x4d8] sm:$0xff]
        %v294 = vld [vmem:[%s117 + $0x4e0] sm:$0xff]
        %v295 = vld [vmem:[%s117 + $0x4e8] sm:$0xff]
        %v296 = vld [vmem:[%s117 + $0x4f0] sm:$0xff]
        %v297 = vld [vmem:[%s117 + $0x4f8] sm:$0xff]
        %v298 = vld [vmem:[%s117 + $0x500] sm:$0xff]
        %v299 = vld [vmem:[%s117 + $0x508] sm:$0xff]
        %v300 = vld [vmem:[%s117 + $0x510] sm:$0xff]
        %v301 = vld [vmem:[%s117 + $0x518] sm:$0xff]
        %v302 = vld [vmem:[%s117 + $0x520] sm:$0xff]
        %v303 = vld [vmem:[%s117 + $0x528] sm:$0xff]
        %v304 = vld [vmem:[%s117 + $0x530] sm:$0xff]
        %v305 = vld [vmem:[%s117 + $0x538] sm:$0xff]
        %v306 = vld [vmem:[%s117 + $0x540] sm:$0xff]
        %v307 = vld [vmem:[%s117 + $0x548] sm:$0xff]
        %v308 = vld [vmem:[%s117 + $0x550] sm:$0xff]
        %v309 = vld [vmem:[%s117 + $0x558] sm:$0xff]
        %v310 = vld [vmem:[%s117 + $0x560] sm:$0xff]
        %v311 = vld [vmem:[%s117 + $0x568] sm:$0xff]
        %v312 = vld [vmem:[%s117 + $0x570] sm:$0xff]
        %v313 = vld [vmem:[%s117 + $0x578] sm:$0xff]
        %v314 = vld [vmem:[%s117 + $0x580] sm:$0xff]
        %v315 = vld [vmem:[%s117 + $0x588] sm:$0xff]
        %v316 = vld [vmem:[%s117 + $0x590] sm:$0xff]
        %v317 = vld [vmem:[%s117 + $0x598] sm:$0xff]
        %v318 = vld [vmem:[%s117 + $0x5a0] sm:$0xff]
        %v319 = vld [vmem:[%s117 + $0x5a8] sm:$0xff]
        %v320 = vld [vmem:[%s117 + $0x5b0] sm:$0xff]
        %v321 = vld [vmem:[%s117 + $0x5b8] sm:$0xff]
        %v322 = vld [vmem:[%s117 + $0x5c0] sm:$0xff]
        %v323 = vld [vmem:[%s117 + $0x5c8] sm:$0xff]
        %v324 = vld [vmem:[%s117 + $0x5d0] sm:$0xff]
        %v325 = vld [vmem:[%s117 + $0x5d8] sm:$0xff]
        %v326 = vld [vmem:[%s117 + $0x5e0] sm:$0xff]
        %v327 = vld [vmem:[%s117 + $0x5e8] sm:$0xff]
        %v328 = vld [vmem:[%s117 + $0x5f0] sm:$0xff]
        %v329 = vld [vmem:[%s117 + $0x5f8] sm:$0xff]
        %v330 = vld [vmem:[%s117 + $0x600] sm:$0xff]
        %v331 = vld [vmem:[%s117 + $0x608] sm:$0xff]
        %v332 = vld [vmem:[%s117 + $0x610] sm:$0xff]
        %v333 = vld [vmem:[%s117 + $0x618] sm:$0xff]
        %v334 = vld [vmem:[%s117 + $0x620] sm:$0xff]
        %v335 = vld [vmem:[%s117 + $0x628] sm:$0xff]
        %v336 = vld [vmem:[%s117 + $0x630] sm:$0xff]
        %v337 = vld [vmem:[%s117 + $0x638] sm:$0xff]
        %v338 = vld [vmem:[%s117 + $0x640] sm:$0xff]
        %v339 = vld [vmem:[%s117 + $0x648] sm:$0xff]
        %v340 = vld [vmem:[%s117 + $0x650] sm:$0xff]
        %v341 = vld [vmem:[%s117 + $0x658] sm:$0xff]
        %v342 = vld [vmem:[%s117 + $0x660] sm:$0xff]
        %v343 = vld [vmem:[%s117 + $0x668] sm:$0xff]
        %v344 = vld [vmem:[%s117 + $0x670] sm:$0xff]
        %v345 = vld [vmem:[%s117 + $0x678] sm:$0xff]
        %v346 = vld [vmem:[%s117 + $0x680] sm:$0xff]
        %v347 = vld [vmem:[%s117 + $0x688] sm:$0xff]
        %v348 = vld [vmem:[%s117 + $0x690] sm:$0xff]
        %v349 = vld [vmem:[%s117 + $0x698] sm:$0xff]
        %v350 = vld [vmem:[%s117 + $0x6a0] sm:$0xff]
        %v351 = vld [vmem:[%s117 + $0x6a8] sm:$0xff]
        %v352 = vld [vmem:[%s117 + $0x6b0] sm:$0xff]
        %v353 = vld [vmem:[%s117 + $0x6b8] sm:$0xff]
        %v354 = vld [vmem:[%s117 + $0x6c0] sm:$0xff]
        %v355 = vld [vmem:[%s117 + $0x6c8] sm:$0xff]
        %v356 = vld [vmem:[%s117 + $0x6d0] sm:$0xff]
        %v357 = vld [vmem:[%s117 + $0x6d8] sm:$0xff]
        %v358 = vld [vmem:[%s117 + $0x6e0] sm:$0xff]
        %v359 = vld [vmem:[%s117 + $0x6e8] sm:$0xff]
        %v360 = vld [vmem:[%s117 + $0x6f0] sm:$0xff]
        %v361 = vld [vmem:[%s117 + $0x6f8] sm:$0xff]
        %v362 = vld [vmem:[%s117 + $0x700] sm:$0xff]
        %v363 = vld [vmem:[%s117 + $0x708] sm:$0xff]
        %v364 = vld [vmem:[%s117 + $0x710] sm:$0xff]
        %v365 = vld [vmem:[%s117 + $0x718] sm:$0xff]
        %v366 = vld [vmem:[%s117 + $0x720] sm:$0xff]
        %v367 = vld [vmem:[%s117 + $0x728] sm:$0xff]
        %v368 = vld [vmem:[%s117 + $0x730] sm:$0xff]
        %v369 = vld [vmem:[%s117 + $0x738] sm:$0xff]
        %v370 = vld [vmem:[%s117 + $0x740] sm:$0xff]
        %v371 = vld [vmem:[%s117 + $0x748] sm:$0xff]
        %v372 = vld [vmem:[%s117 + $0x750] sm:$0xff]
        %v373 = vld [vmem:[%s117 + $0x758] sm:$0xff]
        %v374 = vld [vmem:[%s117 + $0x760] sm:$0xff]
        %v375 = vld [vmem:[%s117 + $0x768] sm:$0xff]
        %v376 = vld [vmem:[%s117 + $0x770] sm:$0xff]
        %v377 = vld [vmem:[%s117 + $0x778] sm:$0xff]
        %v378 = vld [vmem:[%s117 + $0x780] sm:$0xff]
        %v379 = vld [vmem:[%s117 + $0x788] sm:$0xff]
        %v380 = vld [vmem:[%s117 + $0x790] sm:$0xff]
        %v381 = vld [vmem:[%s117 + $0x798] sm:$0xff]
        %v382 = vld [vmem:[%s117 + $0x7a0] sm:$0xff]
        %v383 = vld [vmem:[%s117 + $0x7a8] sm:$0xff]
        %v384 = vld [vmem:[%s117 + $0x7b0] sm:$0xff]
        %v385 = vld [vmem:[%s117 + $0x7b8] sm:$0xff]
        %v386 = vld [vmem:[%s117 + $0x7c0] sm:$0xff]
        %v387 = vld [vmem:[%s117 + $0x7c8] sm:$0xff]
        %v388 = vld [vmem:[%s117 + $0x7d0] sm:$0xff]
        %v389 = vld [vmem:[%s117 + $0x7d8] sm:$0xff]
        %v390 = vld [vmem:[%s117 + $0x7e0] sm:$0xff]
        %v391 = vld [vmem:[%s117 + $0x7e8] sm:$0xff]
        %v392 = vld [vmem:[%s117 + $0x7f0] sm:$0xff]
        %v393 = vld [vmem:[%s117 + $0x7f8] sm:$0xff]
        %v394 = vld [vmem:[%s117 + $0x800] sm:$0xff]
        %v395 = vld [vmem:[%s117 + $0x808] sm:$0xff]
        %v396 = vld [vmem:[%s117 + $0x810] sm:$0xff]
        %v397 = vld [vmem:[%s117 + $0x818] sm:$0xff]
        %v398 = vld [vmem:[%s117 + $0x820] sm:$0xff]
        %v399 = vld [vmem:[%s117 + $0x828] sm:$0xff]
        %v400 = vld [vmem:[%s117 + $0x830] sm:$0xff]
        %v401 = vld [vmem:[%s117 + $0x838] sm:$0xff]
        %v402 = vld [vmem:[%s117 + $0x840] sm:$0xff]
        %v403 = vld [vmem:[%s117 + $0x848] sm:$0xff]
        %v404 = vld [vmem:[%s117 + $0x850] sm:$0xff]
        %v405 = vld [vmem:[%s117 + $0x858] sm:$0xff]
        %v406 = vld [vmem:[%s117 + $0x860] sm:$0xff]
        %v407 = vld [vmem:[%s117 + $0x868] sm:$0xff]
        %v408 = vld [vmem:[%s117 + $0x870] sm:$0xff]
        %v409 = vld [vmem:[%s117 + $0x878] sm:$0xff]
        %v410 = vld [vmem:[%s117 + $0x880] sm:$0xff]
        %v411 = vld [vmem:[%s117 + $0x888] sm:$0xff]
        %v412 = vld [vmem:[%s117 + $0x890] sm:$0xff]
        %v413 = vld [vmem:[%s117 + $0x898] sm:$0xff]
        %v414 = vld [vmem:[%s117 + $0x8a0] sm:$0xff]
        %v415 = vld [vmem:[%s117 + $0x8a8] sm:$0xff]
        %v416 = vld [vmem:[%s117 + $0x8b0] sm:$0xff]
        %v417 = vld [vmem:[%s117 + $0x8b8] sm:$0xff]
        %v418 = vld [vmem:[%s117 + $0x8c0] sm:$0xff]
        %v419 = vld [vmem:[%s117 + $0x8c8] sm:$0xff]
        %v420 = vld [vmem:[%s117 + $0x8d0] sm:$0xff]
        %v421 = vld [vmem:[%s117 + $0x8d8] sm:$0xff]
        %v422 = vld [vmem:[%s117 + $0x8e0] sm:$0xff]
        %v423 = vld [vmem:[%s117 + $0x8e8] sm:$0xff]
        %v424 = vld [vmem:[%s117 + $0x8f0] sm:$0xff]
        %v425 = vld [vmem:[%s117 + $0x8f8] sm:$0xff]
        %v426 = vld [vmem:[%s117 + $0x900] sm:$0xff]
        %v427 = vld [vmem:[%s117 + $0x908] sm:$0xff]
        %v428 = vld [vmem:[%s117 + $0x910] sm:$0xff]
        %v429 = vld [vmem:[%s117 + $0x918] sm:$0xff]
        %v430 = vld [vmem:[%s117 + $0x920] sm:$0xff]
        %v431 = vld [vmem:[%s117 + $0x928] sm:$0xff]
        %v432 = vld [vmem:[%s117 + $0x930] sm:$0xff]
        %v433 = vld [vmem:[%s117 + $0x938] sm:$0xff]
        %v434 = vld [vmem:[%s117 + $0x940] sm:$0xff]
        %v435 = vld [vmem:[%s117 + $0x948] sm:$0xff]
        %v436 = vld [vmem:[%s117 + $0x950] sm:$0xff]
        %v437 = vld [vmem:[%s117 + $0x958] sm:$0xff]
        %v438 = vld [vmem:[%s117 + $0x960] sm:$0xff]
        %v439 = vld [vmem:[%s117 + $0x968] sm:$0xff]
        %v440 = vld [vmem:[%s117 + $0x970] sm:$0xff]
        %v441 = vld [vmem:[%s117 + $0x978] sm:$0xff]
        %v442 = vld [vmem:[%s117 + $0x980] sm:$0xff]
        %v443 = vld [vmem:[%s117 + $0x988] sm:$0xff]
        %v444 = vld [vmem:[%s117 + $0x990] sm:$0xff]
        %v445 = vld [vmem:[%s117 + $0x998] sm:$0xff]
        %v446 = vld [vmem:[%s117 + $0x9a0] sm:$0xff]
        %v447 = vld [vmem:[%s117 + $0x9a8] sm:$0xff]
        %v448 = vld [vmem:[%s117 + $0x9b0] sm:$0xff]
        %v449 = vld [vmem:[%s117 + $0x9b8] sm:$0xff]
        %v450 = vld [vmem:[%s117 + $0x9c0] sm:$0xff]
        %v451 = vld [vmem:[%s117 + $0x9c8] sm:$0xff]
        %v452 = vld [vmem:[%s117 + $0x9d0] sm:$0xff]
        %v453 = vld [vmem:[%s117 + $0x9d8] sm:$0xff]
        %v454 = vld [vmem:[%s117 + $0x9e0] sm:$0xff]
        %v455 = vld [vmem:[%s117 + $0x9e8] sm:$0xff]
        %v456 = vld [vmem:[%s117 + $0x9f0] sm:$0xff]
        %v457 = vld [vmem:[%s117 + $0x9f8] sm:$0xff]
        %v458 = vld [vmem:[%s117 + $0xa00] sm:$0xff]
        %v459 = vld [vmem:[%s117 + $0xa08] sm:$0xff]
        %v460 = vld [vmem:[%s117 + $0xa10] sm:$0xff]
        %v461 = vld [vmem:[%s117 + $0xa18] sm:$0xff]
        %v462 = vld [vmem:[%s117 + $0xa20] sm:$0xff]
        %v463 = vld [vmem:[%s117 + $0xa28] sm:$0xff]
        %v464 = vld [vmem:[%s117 + $0xa30] sm:$0xff]
        %v465 = vld [vmem:[%s117 + $0xa38] sm:$0xff]
        %v466 = vld [vmem:[%s117 + $0xa40] sm:$0xff]
        %v467 = vld [vmem:[%s117 + $0xa48] sm:$0xff]
        %v468 = vld [vmem:[%s117 + $0xa50] sm:$0xff]
        %v469 = vld [vmem:[%s117 + $0xa58] sm:$0xff]
        %v470 = vld [vmem:[%s117 + $0xa60] sm:$0xff]
        %v471 = vld [vmem:[%s117 + $0xa68] sm:$0xff]
        %v472 = vld [vmem:[%s117 + $0xa70] sm:$0xff]
        %v473 = vld [vmem:[%s117 + $0xa78] sm:$0xff]
        %v474 = vld [vmem:[%s117 + $0xa80] sm:$0xff]
        %v475 = vld [vmem:[%s117 + $0xa88] sm:$0xff]
        %v476 = vld [vmem:[%s117 + $0xa90] sm:$0xff]
        %v477 = vld [vmem:[%s117 + $0xa98] sm:$0xff]
        %v478 = vld [vmem:[%s117 + $0xaa0] sm:$0xff]
        %v479 = vld [vmem:[%s117 + $0xaa8] sm:$0xff]
        %v480 = vld [vmem:[%s117 + $0xab0] sm:$0xff]
        %v481 = vld [vmem:[%s117 + $0xab8] sm:$0xff]
        %v482 = vld [vmem:[%s117 + $0xac0] sm:$0xff]
        %v483 = vld [vmem:[%s117 + $0xac8] sm:$0xff]
        %v484 = vld [vmem:[%s117 + $0xad0] sm:$0xff]
        %v485 = vld [vmem:[%s117 + $0xad8] sm:$0xff]
        %v486 = vld [vmem:[%s117 + $0xae0] sm:$0xff]
        %v487 = vld [vmem:[%s117 + $0xae8] sm:$0xff]
        %v488 = vld [vmem:[%s117 + $0xaf0] sm:$0xff]
        %v489 = vld [vmem:[%s117 + $0xaf8] sm:$0xff]
        %v490 = vld [vmem:[%s117 + $0xb00] sm:$0xff]
        %v491 = vld [vmem:[%s117 + $0xb08] sm:$0xff]
        %v492 = vld [vmem:[%s117 + $0xb10] sm:$0xff]
        %v493 = vld [vmem:[%s117 + $0xb18] sm:$0xff]
        %v494 = vld [vmem:[%s117 + $0xb20] sm:$0xff]
        %v495 = vld [vmem:[%s117 + $0xb28] sm:$0xff]
        %v496 = vld [vmem:[%s117 + $0xb30] sm:$0xff]
        %v497 = vld [vmem:[%s117 + $0xb38] sm:$0xff]
        %v498 = vld [vmem:[%s117 + $0xb40] sm:$0xff]
        %v499 = vld [vmem:[%s117 + $0xb48] sm:$0xff]
        %v500 = vld [vmem:[%s117 + $0xb50] sm:$0xff]
        %v501 = vld [vmem:[%s117 + $0xb58] sm:$0xff]
        %v502 = vld [vmem:[%s117 + $0xb60] sm:$0xff]
        %v503 = vld [vmem:[%s117 + $0xb68] sm:$0xff]
        %v504 = vld [vmem:[%s117 + $0xb70] sm:$0xff]
        %v505 = vld [vmem:[%s117 + $0xb78] sm:$0xff]
        %v506 = vld [vmem:[%s117 + $0xb80] sm:$0xff]
        %v507 = vld [vmem:[%s117 + $0xb88] sm:$0xff]
        %v508 = vld [vmem:[%s117 + $0xb90] sm:$0xff]
        %v509 = vld [vmem:[%s117 + $0xb98] sm:$0xff]
        %v510 = vld [vmem:[%s117 + $0xba0] sm:$0xff]
        %v511 = vld [vmem:[%s117 + $0xba8] sm:$0xff]
        %v512 = vld [vmem:[%s117 + $0xbb0] sm:$0xff]
        %v513 = vld [vmem:[%s117 + $0xbb8] sm:$0xff]
        %v514 = vld [vmem:[%s117 + $0xbc0] sm:$0xff]
        %v515 = vld [vmem:[%s117 + $0xbc8] sm:$0xff]
        %v516 = vld [vmem:[%s117 + $0xbd0] sm:$0xff]
        %v517 = vld [vmem:[%s117 + $0xbd8] sm:$0xff]
        %v518 = vld [vmem:[%s117 + $0xbe0] sm:$0xff]
        %v519 = vld [vmem:[%s117 + $0xbe8] sm:$0xff]
        %v520 = vld [vmem:[%s117 + $0xbf0] sm:$0xff]
        %v521 = vld [vmem:[%s117 + $0xbf8] sm:$0xff]
        %v522 = vld [vmem:[%s117 + $0xc00] sm:$0xff]
        %v523 = vld [vmem:[%s117 + $0xc08] sm:$0xff]
        %v524 = vld [vmem:[%s117 + $0xc10] sm:$0xff]
        %v525 = vld [vmem:[%s117 + $0xc18] sm:$0xff]
        %v526 = vld [vmem:[%s117 + $0xc20] sm:$0xff]
        %v527 = vld [vmem:[%s117 + $0xc28] sm:$0xff]
        %v528 = vld [vmem:[%s117 + $0xc30] sm:$0xff]
        %v529 = vld [vmem:[%s117 + $0xc38] sm:$0xff]
        %v530 = vld [vmem:[%s117 + $0xc40] sm:$0xff]
        %v531 = vld [vmem:[%s117 + $0xc48] sm:$0xff]
        %v532 = vld [vmem:[%s117 + $0xc50] sm:$0xff]
        %v533 = vld [vmem:[%s117 + $0xc58] sm:$0xff]
        %v534 = vld [vmem:[%s117 + $0xc60] sm:$0xff]
        %v535 = vld [vmem:[%s117 + $0xc68] sm:$0xff]
        %v536 = vld [vmem:[%s117 + $0xc70] sm:$0xff]
        %v537 = vld [vmem:[%s117 + $0xc78] sm:$0xff]
        %v538 = vld [vmem:[%s117 + $0xc80] sm:$0xff]
        %v539 = vld [vmem:[%s117 + $0xc88] sm:$0xff]
        %v540 = vld [vmem:[%s117 + $0xc90] sm:$0xff]
        %v541 = vld [vmem:[%s117 + $0xc98] sm:$0xff]
        %v542 = vld [vmem:[%s117 + $0xca0] sm:$0xff]
        %v543 = vld [vmem:[%s117 + $0xca8] sm:$0xff]
        %v544 = vld [vmem:[%s117 + $0xcb0] sm:$0xff]
        %v545 = vld [vmem:[%s117 + $0xcb8] sm:$0xff]
        %v546 = vld [vmem:[%s117 + $0xcc0] sm:$0xff]
        %v547 = vld [vmem:[%s117 + $0xcc8] sm:$0xff]
        %v548 = vld [vmem:[%s117 + $0xcd0] sm:$0xff]
        %v549 = vld [vmem:[%s117 + $0xcd8] sm:$0xff]
        %v550 = vld [vmem:[%s117 + $0xce0] sm:$0xff]
        %v551 = vld [vmem:[%s117 + $0xce8] sm:$0xff]
        %v552 = vld [vmem:[%s117 + $0xcf0] sm:$0xff]
        %v553 = vld [vmem:[%s117 + $0xcf8] sm:$0xff]
        %v554 = vld [vmem:[%s117 + $0xd00] sm:$0xff]
        %v555 = vld [vmem:[%s117 + $0xd08] sm:$0xff]
        %v556 = vld [vmem:[%s117 + $0xd10] sm:$0xff]
        %v557 = vld [vmem:[%s117 + $0xd18] sm:$0xff]
        %v558 = vld [vmem:[%s117 + $0xd20] sm:$0xff]
        %v559 = vld [vmem:[%s117 + $0xd28] sm:$0xff]
        %v560 = vld [vmem:[%s117 + $0xd30] sm:$0xff]
        %v561 = vld [vmem:[%s117 + $0xd38] sm:$0xff]
        %v562 = vld [vmem:[%s117 + $0xd40] sm:$0xff]
        %v563 = vld [vmem:[%s117 + $0xd48] sm:$0xff]
        %v564 = vld [vmem:[%s117 + $0xd50] sm:$0xff]
        %v565 = vld [vmem:[%s117 + $0xd58] sm:$0xff]
        %v566 = vld [vmem:[%s117 + $0xd60] sm:$0xff]
        %v567 = vld [vmem:[%s117 + $0xd68] sm:$0xff]
        %v568 = vld [vmem:[%s117 + $0xd70] sm:$0xff]
        %v569 = vld [vmem:[%s117 + $0xd78] sm:$0xff]
        %v570 = vld [vmem:[%s117 + $0xd80] sm:$0xff]
        %v571 = vld [vmem:[%s117 + $0xd88] sm:$0xff]
        %v572 = vld [vmem:[%s117 + $0xd90] sm:$0xff]
        %v573 = vld [vmem:[%s117 + $0xd98] sm:$0xff]
        %v574 = vld [vmem:[%s117 + $0xda0] sm:$0xff]
        %v575 = vld [vmem:[%s117 + $0xda8] sm:$0xff]
        %v576 = vld [vmem:[%s117 + $0xdb0] sm:$0xff]
        %v577 = vld [vmem:[%s117 + $0xdb8] sm:$0xff]
        %v578 = vld [vmem:[%s117 + $0xdc0] sm:$0xff]
        %v579 = vld [vmem:[%s117 + $0xdc8] sm:$0xff]
        %v580 = vld [vmem:[%s117 + $0xdd0] sm:$0xff]
        %v581 = vld [vmem:[%s117 + $0xdd8] sm:$0xff]
        %v582 = vld [vmem:[%s117 + $0xde0] sm:$0xff]
        %v583 = vld [vmem:[%s117 + $0xde8] sm:$0xff]
        %v584 = vld [vmem:[%s117 + $0xdf0] sm:$0xff]
        %v585 = vld [vmem:[%s117 + $0xdf8] sm:$0xff]
        %v586 = vld [vmem:[%s117 + $0xe00] sm:$0xff]
        %v587 = vld [vmem:[%s117 + $0xe08] sm:$0xff]
        %v588 = vld [vmem:[%s117 + $0xe10] sm:$0xff]
        %v589 = vld [vmem:[%s117 + $0xe18] sm:$0xff]
        %v590 = vld [vmem:[%s117 + $0xe20] sm:$0xff]
        %v591 = vld [vmem:[%s117 + $0xe28] sm:$0xff]
        %v592 = vld [vmem:[%s117 + $0xe30] sm:$0xff]
        %v593 = vld [vmem:[%s117 + $0xe38] sm:$0xff]
        %v594 = vld [vmem:[%s117 + $0xe40] sm:$0xff]
        %v595 = vld [vmem:[%s117 + $0xe48] sm:$0xff]
        %v596 = vld [vmem:[%s117 + $0xe50] sm:$0xff]
        %v597 = vld [vmem:[%s117 + $0xe58] sm:$0xff]
        %v598 = vld [vmem:[%s117 + $0xe60] sm:$0xff]
        %v599 = vld [vmem:[%s117 + $0xe68] sm:$0xff]
        %v600 = vld [vmem:[%s117 + $0xe70] sm:$0xff]
        %v601 = vld [vmem:[%s117 + $0xe78] sm:$0xff]
        %v602 = vld [vmem:[%s117 + $0xe80] sm:$0xff]
        %v603 = vld [vmem:[%s117 + $0xe88] sm:$0xff]
        %v604 = vld [vmem:[%s117 + $0xe90] sm:$0xff]
        %v605 = vld [vmem:[%s117 + $0xe98] sm:$0xff]
        %v606 = vld [vmem:[%s117 + $0xea0] sm:$0xff]
        %v607 = vld [vmem:[%s117 + $0xea8] sm:$0xff]
        %v608 = vld [vmem:[%s117 + $0xeb0] sm:$0xff]
        %v609 = vld [vmem:[%s117 + $0xeb8] sm:$0xff]
        %v610 = vld [vmem:[%s117 + $0xec0] sm:$0xff]
        %v611 = vld [vmem:[%s117 + $0xec8] sm:$0xff]
        %v612 = vld [vmem:[%s117 + $0xed0] sm:$0xff]
        %v613 = vld [vmem:[%s117 + $0xed8] sm:$0xff]
        %v614 = vld [vmem:[%s117 + $0xee0] sm:$0xff]
        %v615 = vld [vmem:[%s117 + $0xee8] sm:$0xff]
        %v616 = vld [vmem:[%s117 + $0xef0] sm:$0xff]
        %v617 = vld [vmem:[%s117 + $0xef8] sm:$0xff]
        %v618 = vld [vmem:[%s117 + $0xf00] sm:$0xff]
        %v619 = vld [vmem:[%s117 + $0xf08] sm:$0xff]
        %v620 = vld [vmem:[%s117 + $0xf10] sm:$0xff]
        %v621 = vld [vmem:[%s117 + $0xf18] sm:$0xff]
        %v622 = vld [vmem:[%s117 + $0xf20] sm:$0xff]
        %v623 = vld [vmem:[%s117 + $0xf28] sm:$0xff]
        %v624 = vld [vmem:[%s117 + $0xf30] sm:$0xff]
        %v625 = vld [vmem:[%s117 + $0xf38] sm:$0xff]
        %v626 = vld [vmem:[%s117 + $0xf40] sm:$0xff]
        %v627 = vld [vmem:[%s117 + $0xf48] sm:$0xff]
        %v628 = vld [vmem:[%s117 + $0xf50] sm:$0xff]
        %v629 = vld [vmem:[%s117 + $0xf58] sm:$0xff]
        %v630 = vld [vmem:[%s117 + $0xf60] sm:$0xff]
        %v631 = vld [vmem:[%s117 + $0xf68] sm:$0xff]
        %v632 = vld [vmem:[%s117 + $0xf70] sm:$0xff]
        %v633 = vld [vmem:[%s117 + $0xf78] sm:$0xff]
        %v634 = vld [vmem:[%s117 + $0xf80] sm:$0xff]
        %v635 = vld [vmem:[%s117 + $0xf88] sm:$0xff]
        %v636 = vld [vmem:[%s117 + $0xf90] sm:$0xff]
        %v637 = vld [vmem:[%s117 + $0xf98] sm:$0xff]
        %v638 = vld [vmem:[%s117 + $0xfa0] sm:$0xff]
        %v639 = vld [vmem:[%s117 + $0xfa8] sm:$0xff]
        %v640 = vld [vmem:[%s117 + $0xfb0] sm:$0xff]
        %v641 = vld [vmem:[%s117 + $0xfb8] sm:$0xff]
        %v642 = vld [vmem:[%s117 + $0xfc0] sm:$0xff]
        %v643 = vld [vmem:[%s117 + $0xfc8] sm:$0xff]
        %v644 = vld [vmem:[%s117 + $0xfd0] sm:$0xff]
        %v645 = vld [vmem:[%s117 + $0xfd8] sm:$0xff]
        %v646 = vld [vmem:[%s117 + $0xfe0] sm:$0xff]
        %v647 = vld [vmem:[%s117 + $0xfe8] sm:$0xff]
        %v648 = vld [vmem:[%s117 + $0xff0] sm:$0xff]
        %v649 = vld [vmem:[%s117 + $0xff8] sm:$0xff]
        %vm650 = vcmp.ge.f32.partialorder %v138, 0.0
        %vm651 = vcmp.ge.f32.partialorder %v139, 0.0
        %vm652 = vcmp.ge.f32.partialorder %v140, 0.0
        %vm653 = vcmp.ge.f32.partialorder %v141, 0.0
        %vm654 = vcmp.ge.f32.partialorder %v142, 0.0
        %vm655 = vcmp.ge.f32.partialorder %v143, 0.0
        %vm656 = vcmp.ge.f32.partialorder %v144, 0.0
        %vm657 = vcmp.ge.f32.partialorder %v145, 0.0
        %vm658 = vcmp.ge.f32.partialorder %v146, 0.0
        %vm659 = vcmp.ge.f32.partialorder %v147, 0.0
        %vm660 = vcmp.ge.f32.partialorder %v148, 0.0
        %vm661 = vcmp.ge.f32.partialorder %v149, 0.0
        %vm662 = vcmp.ge.f32.partialorder %v150, 0.0
        %vm663 = vcmp.ge.f32.partialorder %v151, 0.0
        %vm664 = vcmp.ge.f32.partialorder %v152, 0.0
        %vm665 = vcmp.ge.f32.partialorder %v153, 0.0
        %vm666 = vcmp.ge.f32.partialorder %v154, 0.0
        %vm667 = vcmp.ge.f32.partialorder %v155, 0.0
        %vm668 = vcmp.ge.f32.partialorder %v156, 0.0
        %vm669 = vcmp.ge.f32.partialorder %v157, 0.0
        %vm670 = vcmp.ge.f32.partialorder %v158, 0.0
        %vm671 = vcmp.ge.f32.partialorder %v159, 0.0
        %vm672 = vcmp.ge.f32.partialorder %v160, 0.0
        %vm673 = vcmp.ge.f32.partialorder %v161, 0.0
        %vm674 = vcmp.ge.f32.partialorder %v162, 0.0
        %vm675 = vcmp.ge.f32.partialorder %v163, 0.0
        %vm676 = vcmp.ge.f32.partialorder %v164, 0.0
        %vm677 = vcmp.ge.f32.partialorder %v165, 0.0
        %vm678 = vcmp.ge.f32.partialorder %v166, 0.0
        %vm679 = vcmp.ge.f32.partialorder %v167, 0.0
        %vm680 = vcmp.ge.f32.partialorder %v168, 0.0
        %vm681 = vcmp.ge.f32.partialorder %v169, 0.0
        %vm682 = vcmp.ge.f32.partialorder %v170, 0.0
        %vm683 = vcmp.ge.f32.partialorder %v171, 0.0
        %vm684 = vcmp.ge.f32.partialorder %v172, 0.0
        %vm685 = vcmp.ge.f32.partialorder %v173, 0.0
        %vm686 = vcmp.ge.f32.partialorder %v174, 0.0
        %vm687 = vcmp.ge.f32.partialorder %v175, 0.0
        %vm688 = vcmp.ge.f32.partialorder %v176, 0.0
        %vm689 = vcmp.ge.f32.partialorder %v177, 0.0
        %vm690 = vcmp.ge.f32.partialorder %v178, 0.0
        %vm691 = vcmp.ge.f32.partialorder %v179, 0.0
        %vm692 = vcmp.ge.f32.partialorder %v180, 0.0
        %vm693 = vcmp.ge.f32.partialorder %v181, 0.0
        %vm694 = vcmp.ge.f32.partialorder %v182, 0.0
        %vm695 = vcmp.ge.f32.partialorder %v183, 0.0
        %vm696 = vcmp.ge.f32.partialorder %v184, 0.0
        %vm697 = vcmp.ge.f32.partialorder %v185, 0.0
        %vm698 = vcmp.ge.f32.partialorder %v186, 0.0
        %vm699 = vcmp.ge.f32.partialorder %v187, 0.0
        %vm700 = vcmp.ge.f32.partialorder %v188, 0.0
        %vm701 = vcmp.ge.f32.partialorder %v189, 0.0
        %vm702 = vcmp.ge.f32.partialorder %v190, 0.0
        %vm703 = vcmp.ge.f32.partialorder %v191, 0.0
        %vm704 = vcmp.ge.f32.partialorder %v192, 0.0
        %vm705 = vcmp.ge.f32.partialorder %v193, 0.0
        %vm706 = vcmp.ge.f32.partialorder %v194, 0.0
        %vm707 = vcmp.ge.f32.partialorder %v195, 0.0
        %vm708 = vcmp.ge.f32.partialorder %v196, 0.0
        %vm709 = vcmp.ge.f32.partialorder %v197, 0.0
        %vm710 = vcmp.ge.f32.partialorder %v198, 0.0
        %vm711 = vcmp.ge.f32.partialorder %v199, 0.0
        %vm712 = vcmp.ge.f32.partialorder %v200, 0.0
        %vm713 = vcmp.ge.f32.partialorder %v201, 0.0
        %vm714 = vcmp.ge.f32.partialorder %v202, 0.0
        %vm715 = vcmp.ge.f32.partialorder %v203, 0.0
        %vm716 = vcmp.ge.f32.partialorder %v204, 0.0
        %vm717 = vcmp.ge.f32.partialorder %v205, 0.0
        %vm718 = vcmp.ge.f32.partialorder %v206, 0.0
        %vm719 = vcmp.ge.f32.partialorder %v207, 0.0
        %vm720 = vcmp.ge.f32.partialorder %v208, 0.0
        %vm721 = vcmp.ge.f32.partialorder %v209, 0.0
        %vm722 = vcmp.ge.f32.partialorder %v210, 0.0
        %vm723 = vcmp.ge.f32.partialorder %v211, 0.0
        %vm724 = vcmp.ge.f32.partialorder %v212, 0.0
        %vm725 = vcmp.ge.f32.partialorder %v213, 0.0
        %vm726 = vcmp.ge.f32.partialorder %v214, 0.0
        %vm727 = vcmp.ge.f32.partialorder %v215, 0.0
        %vm728 = vcmp.ge.f32.partialorder %v216, 0.0
        %vm729 = vcmp.ge.f32.partialorder %v217, 0.0
        %vm730 = vcmp.ge.f32.partialorder %v218, 0.0
        %vm731 = vcmp.ge.f32.partialorder %v219, 0.0
        %vm732 = vcmp.ge.f32.partialorder %v220, 0.0
        %vm733 = vcmp.ge.f32.partialorder %v221, 0.0
        %vm734 = vcmp.ge.f32.partialorder %v222, 0.0
        %vm735 = vcmp.ge.f32.partialorder %v223, 0.0
        %vm736 = vcmp.ge.f32.partialorder %v224, 0.0
        %vm737 = vcmp.ge.f32.partialorder %v225, 0.0
        %vm738 = vcmp.ge.f32.partialorder %v226, 0.0
        %vm739 = vcmp.ge.f32.partialorder %v227, 0.0
        %vm740 = vcmp.ge.f32.partialorder %v228, 0.0
        %vm741 = vcmp.ge.f32.partialorder %v229, 0.0
        %vm742 = vcmp.ge.f32.partialorder %v230, 0.0
        %vm743 = vcmp.ge.f32.partialorder %v231, 0.0
        %vm744 = vcmp.ge.f32.partialorder %v232, 0.0
        %vm745 = vcmp.ge.f32.partialorder %v233, 0.0
        %vm746 = vcmp.ge.f32.partialorder %v234, 0.0
        %vm747 = vcmp.ge.f32.partialorder %v235, 0.0
        %vm748 = vcmp.ge.f32.partialorder %v236, 0.0
        %vm749 = vcmp.ge.f32.partialorder %v237, 0.0
        %vm750 = vcmp.ge.f32.partialorder %v238, 0.0
        %vm751 = vcmp.ge.f32.partialorder %v239, 0.0
        %vm752 = vcmp.ge.f32.partialorder %v240, 0.0
        %vm753 = vcmp.ge.f32.partialorder %v241, 0.0
        %vm754 = vcmp.ge.f32.partialorder %v242, 0.0
        %vm755 = vcmp.ge.f32.partialorder %v243, 0.0
        %vm756 = vcmp.ge.f32.partialorder %v244, 0.0
        %vm757 = vcmp.ge.f32.partialorder %v245, 0.0
        %vm758 = vcmp.ge.f32.partialorder %v246, 0.0
        %vm759 = vcmp.ge.f32.partialorder %v247, 0.0
        %vm760 = vcmp.ge.f32.partialorder %v248, 0.0
        %vm761 = vcmp.ge.f32.partialorder %v249, 0.0
        %vm762 = vcmp.ge.f32.partialorder %v250, 0.0
        %vm763 = vcmp.ge.f32.partialorder %v251, 0.0
        %vm764 = vcmp.ge.f32.partialorder %v252, 0.0
        %vm765 = vcmp.ge.f32.partialorder %v253, 0.0
        %vm766 = vcmp.ge.f32.partialorder %v254, 0.0
        %vm767 = vcmp.ge.f32.partialorder %v255, 0.0
        %vm768 = vcmp.ge.f32.partialorder %v256, 0.0
        %vm769 = vcmp.ge.f32.partialorder %v257, 0.0
        %vm770 = vcmp.ge.f32.partialorder %v258, 0.0
        %vm771 = vcmp.ge.f32.partialorder %v259, 0.0
        %vm772 = vcmp.ge.f32.partialorder %v260, 0.0
        %vm773 = vcmp.ge.f32.partialorder %v261, 0.0
        %vm774 = vcmp.ge.f32.partialorder %v262, 0.0
        %vm775 = vcmp.ge.f32.partialorder %v263, 0.0
        %vm776 = vcmp.ge.f32.partialorder %v264, 0.0
        %vm777 = vcmp.ge.f32.partialorder %v265, 0.0
        %vm778 = vcmp.ge.f32.partialorder %v266, 0.0
        %vm779 = vcmp.ge.f32.partialorder %v267, 0.0
        %vm780 = vcmp.ge.f32.partialorder %v268, 0.0
        %vm781 = vcmp.ge.f32.partialorder %v269, 0.0
        %vm782 = vcmp.ge.f32.partialorder %v270, 0.0
        %vm783 = vcmp.ge.f32.partialorder %v271, 0.0
        %vm784 = vcmp.ge.f32.partialorder %v272, 0.0
        %vm785 = vcmp.ge.f32.partialorder %v273, 0.0
        %vm786 = vcmp.ge.f32.partialorder %v274, 0.0
        %vm787 = vcmp.ge.f32.partialorder %v275, 0.0
        %vm788 = vcmp.ge.f32.partialorder %v276, 0.0
        %vm789 = vcmp.ge.f32.partialorder %v277, 0.0
        %vm790 = vcmp.ge.f32.partialorder %v278, 0.0
        %vm791 = vcmp.ge.f32.partialorder %v279, 0.0
        %vm792 = vcmp.ge.f32.partialorder %v280, 0.0
        %vm793 = vcmp.ge.f32.partialorder %v281, 0.0
        %vm794 = vcmp.ge.f32.partialorder %v282, 0.0
        %vm795 = vcmp.ge.f32.partialorder %v283, 0.0
        %vm796 = vcmp.ge.f32.partialorder %v284, 0.0
        %vm797 = vcmp.ge.f32.partialorder %v285, 0.0
        %vm798 = vcmp.ge.f32.partialorder %v286, 0.0
        %vm799 = vcmp.ge.f32.partialorder %v287, 0.0
        %vm800 = vcmp.ge.f32.partialorder %v288, 0.0
        %vm801 = vcmp.ge.f32.partialorder %v289, 0.0
        %vm802 = vcmp.ge.f32.partialorder %v290, 0.0
        %vm803 = vcmp.ge.f32.partialorder %v291, 0.0
        %vm804 = vcmp.ge.f32.partialorder %v292, 0.0
        %vm805 = vcmp.ge.f32.partialorder %v293, 0.0
        %vm806 = vcmp.ge.f32.partialorder %v294, 0.0
        %vm807 = vcmp.ge.f32.partialorder %v295, 0.0
        %vm808 = vcmp.ge.f32.partialorder %v296, 0.0
        %vm809 = vcmp.ge.f32.partialorder %v297, 0.0
        %vm810 = vcmp.ge.f32.partialorder %v298, 0.0
        %vm811 = vcmp.ge.f32.partialorder %v299, 0.0
        %vm812 = vcmp.ge.f32.partialorder %v300, 0.0
        %vm813 = vcmp.ge.f32.partialorder %v301, 0.0
        %vm814 = vcmp.ge.f32.partialorder %v302, 0.0
        %vm815 = vcmp.ge.f32.partialorder %v303, 0.0
        %vm816 = vcmp.ge.f32.partialorder %v304, 0.0
        %vm817 = vcmp.ge.f32.partialorder %v305, 0.0
        %vm818 = vcmp.ge.f32.partialorder %v306, 0.0
        %vm819 = vcmp.ge.f32.partialorder %v307, 0.0
        %vm820 = vcmp.ge.f32.partialorder %v308, 0.0
        %vm821 = vcmp.ge.f32.partialorder %v309, 0.0
        %vm822 = vcmp.ge.f32.partialorder %v310, 0.0
        %vm823 = vcmp.ge.f32.partialorder %v311, 0.0
        %vm824 = vcmp.ge.f32.partialorder %v312, 0.0
        %vm825 = vcmp.ge.f32.partialorder %v313, 0.0
        %vm826 = vcmp.ge.f32.partialorder %v314, 0.0
        %vm827 = vcmp.ge.f32.partialorder %v315, 0.0
        %vm828 = vcmp.ge.f32.partialorder %v316, 0.0
        %vm829 = vcmp.ge.f32.partialorder %v317, 0.0
        %vm830 = vcmp.ge.f32.partialorder %v318, 0.0
        %vm831 = vcmp.ge.f32.partialorder %v319, 0.0
        %vm832 = vcmp.ge.f32.partialorder %v320, 0.0
        %vm833 = vcmp.ge.f32.partialorder %v321, 0.0
        %vm834 = vcmp.ge.f32.partialorder %v322, 0.0
        %vm835 = vcmp.ge.f32.partialorder %v323, 0.0
        %vm836 = vcmp.ge.f32.partialorder %v324, 0.0
        %vm837 = vcmp.ge.f32.partialorder %v325, 0.0
        %vm838 = vcmp.ge.f32.partialorder %v326, 0.0
        %vm839 = vcmp.ge.f32.partialorder %v327, 0.0
        %vm840 = vcmp.ge.f32.partialorder %v328, 0.0
        %vm841 = vcmp.ge.f32.partialorder %v329, 0.0
        %vm842 = vcmp.ge.f32.partialorder %v330, 0.0
        %vm843 = vcmp.ge.f32.partialorder %v331, 0.0
        %vm844 = vcmp.ge.f32.partialorder %v332, 0.0
        %vm845 = vcmp.ge.f32.partialorder %v333, 0.0
        %vm846 = vcmp.ge.f32.partialorder %v334, 0.0
        %vm847 = vcmp.ge.f32.partialorder %v335, 0.0
        %vm848 = vcmp.ge.f32.partialorder %v336, 0.0
        %vm849 = vcmp.ge.f32.partialorder %v337, 0.0
        %vm850 = vcmp.ge.f32.partialorder %v338, 0.0
        %vm851 = vcmp.ge.f32.partialorder %v339, 0.0
        %vm852 = vcmp.ge.f32.partialorder %v340, 0.0
        %vm853 = vcmp.ge.f32.partialorder %v341, 0.0
        %vm854 = vcmp.ge.f32.partialorder %v342, 0.0
        %vm855 = vcmp.ge.f32.partialorder %v343, 0.0
        %vm856 = vcmp.ge.f32.partialorder %v344, 0.0
        %vm857 = vcmp.ge.f32.partialorder %v345, 0.0
        %vm858 = vcmp.ge.f32.partialorder %v346, 0.0
        %vm859 = vcmp.ge.f32.partialorder %v347, 0.0
        %vm860 = vcmp.ge.f32.partialorder %v348, 0.0
        %vm861 = vcmp.ge.f32.partialorder %v349, 0.0
        %vm862 = vcmp.ge.f32.partialorder %v350, 0.0
        %vm863 = vcmp.ge.f32.partialorder %v351, 0.0
        %vm864 = vcmp.ge.f32.partialorder %v352, 0.0
        %vm865 = vcmp.ge.f32.partialorder %v353, 0.0
        %vm866 = vcmp.ge.f32.partialorder %v354, 0.0
        %vm867 = vcmp.ge.f32.partialorder %v355, 0.0
        %vm868 = vcmp.ge.f32.partialorder %v356, 0.0
        %vm869 = vcmp.ge.f32.partialorder %v357, 0.0
        %vm870 = vcmp.ge.f32.partialorder %v358, 0.0
        %vm871 = vcmp.ge.f32.partialorder %v359, 0.0
        %vm872 = vcmp.ge.f32.partialorder %v360, 0.0
        %vm873 = vcmp.ge.f32.partialorder %v361, 0.0
        %vm874 = vcmp.ge.f32.partialorder %v362, 0.0
        %vm875 = vcmp.ge.f32.partialorder %v363, 0.0
        %vm876 = vcmp.ge.f32.partialorder %v364, 0.0
        %vm877 = vcmp.ge.f32.partialorder %v365, 0.0
        %vm878 = vcmp.ge.f32.partialorder %v366, 0.0
        %vm879 = vcmp.ge.f32.partialorder %v367, 0.0
        %vm880 = vcmp.ge.f32.partialorder %v368, 0.0
        %vm881 = vcmp.ge.f32.partialorder %v369, 0.0
        %vm882 = vcmp.ge.f32.partialorder %v370, 0.0
        %vm883 = vcmp.ge.f32.partialorder %v371, 0.0
        %vm884 = vcmp.ge.f32.partialorder %v372, 0.0
        %vm885 = vcmp.ge.f32.partialorder %v373, 0.0
        %vm886 = vcmp.ge.f32.partialorder %v374, 0.0
        %vm887 = vcmp.ge.f32.partialorder %v375, 0.0
        %vm888 = vcmp.ge.f32.partialorder %v376, 0.0
        %vm889 = vcmp.ge.f32.partialorder %v377, 0.0
        %vm890 = vcmp.ge.f32.partialorder %v378, 0.0
        %vm891 = vcmp.ge.f32.partialorder %v379, 0.0
        %vm892 = vcmp.ge.f32.partialorder %v380, 0.0
        %vm893 = vcmp.ge.f32.partialorder %v381, 0.0
        %vm894 = vcmp.ge.f32.partialorder %v382, 0.0
        %vm895 = vcmp.ge.f32.partialorder %v383, 0.0
        %vm896 = vcmp.ge.f32.partialorder %v384, 0.0
        %vm897 = vcmp.ge.f32.partialorder %v385, 0.0
        %vm898 = vcmp.ge.f32.partialorder %v386, 0.0
        %vm899 = vcmp.ge.f32.partialorder %v387, 0.0
        %vm900 = vcmp.ge.f32.partialorder %v388, 0.0
        %vm901 = vcmp.ge.f32.partialorder %v389, 0.0
        %vm902 = vcmp.ge.f32.partialorder %v390, 0.0
        %vm903 = vcmp.ge.f32.partialorder %v391, 0.0
        %vm904 = vcmp.ge.f32.partialorder %v392, 0.0
        %vm905 = vcmp.ge.f32.partialorder %v393, 0.0
        %vm906 = vcmp.ge.f32.partialorder %v394, 0.0
        %vm907 = vcmp.ge.f32.partialorder %v395, 0.0
        %vm908 = vcmp.ge.f32.partialorder %v396, 0.0
        %vm909 = vcmp.ge.f32.partialorder %v397, 0.0
        %vm910 = vcmp.ge.f32.partialorder %v398, 0.0
        %vm911 = vcmp.ge.f32.partialorder %v399, 0.0
        %vm912 = vcmp.ge.f32.partialorder %v400, 0.0
        %vm913 = vcmp.ge.f32.partialorder %v401, 0.0
        %vm914 = vcmp.ge.f32.partialorder %v402, 0.0
        %vm915 = vcmp.ge.f32.partialorder %v403, 0.0
        %vm916 = vcmp.ge.f32.partialorder %v404, 0.0
        %vm917 = vcmp.ge.f32.partialorder %v405, 0.0
        %vm918 = vcmp.ge.f32.partialorder %v406, 0.0
        %vm919 = vcmp.ge.f32.partialorder %v407, 0.0
        %vm920 = vcmp.ge.f32.partialorder %v408, 0.0
        %vm921 = vcmp.ge.f32.partialorder %v409, 0.0
        %vm922 = vcmp.ge.f32.partialorder %v410, 0.0
        %vm923 = vcmp.ge.f32.partialorder %v411, 0.0
        %vm924 = vcmp.ge.f32.partialorder %v412, 0.0
        %vm925 = vcmp.ge.f32.partialorder %v413, 0.0
        %vm926 = vcmp.ge.f32.partialorder %v414, 0.0
        %vm927 = vcmp.ge.f32.partialorder %v415, 0.0
        %vm928 = vcmp.ge.f32.partialorder %v416, 0.0
        %vm929 = vcmp.ge.f32.partialorder %v417, 0.0
        %vm930 = vcmp.ge.f32.partialorder %v418, 0.0
        %vm931 = vcmp.ge.f32.partialorder %v419, 0.0
        %vm932 = vcmp.ge.f32.partialorder %v420, 0.0
        %vm933 = vcmp.ge.f32.partialorder %v421, 0.0
        %vm934 = vcmp.ge.f32.partialorder %v422, 0.0
        %vm935 = vcmp.ge.f32.partialorder %v423, 0.0
        %vm936 = vcmp.ge.f32.partialorder %v424, 0.0
        %vm937 = vcmp.ge.f32.partialorder %v425, 0.0
        %vm938 = vcmp.ge.f32.partialorder %v426, 0.0
        %vm939 = vcmp.ge.f32.partialorder %v427, 0.0
        %vm940 = vcmp.ge.f32.partialorder %v428, 0.0
        %vm941 = vcmp.ge.f32.partialorder %v429, 0.0
        %vm942 = vcmp.ge.f32.partialorder %v430, 0.0
        %vm943 = vcmp.ge.f32.partialorder %v431, 0.0
        %vm944 = vcmp.ge.f32.partialorder %v432, 0.0
        %vm945 = vcmp.ge.f32.partialorder %v433, 0.0
        %vm946 = vcmp.ge.f32.partialorder %v434, 0.0
        %vm947 = vcmp.ge.f32.partialorder %v435, 0.0
        %vm948 = vcmp.ge.f32.partialorder %v436, 0.0
        %vm949 = vcmp.ge.f32.partialorder %v437, 0.0
        %vm950 = vcmp.ge.f32.partialorder %v438, 0.0
        %vm951 = vcmp.ge.f32.partialorder %v439, 0.0
        %vm952 = vcmp.ge.f32.partialorder %v440, 0.0
        %vm953 = vcmp.ge.f32.partialorder %v441, 0.0
        %vm954 = vcmp.ge.f32.partialorder %v442, 0.0
        %vm955 = vcmp.ge.f32.partialorder %v443, 0.0
        %vm956 = vcmp.ge.f32.partialorder %v444, 0.0
        %vm957 = vcmp.ge.f32.partialorder %v445, 0.0
        %vm958 = vcmp.ge.f32.partialorder %v446, 0.0
        %vm959 = vcmp.ge.f32.partialorder %v447, 0.0
        %vm960 = vcmp.ge.f32.partialorder %v448, 0.0
        %vm961 = vcmp.ge.f32.partialorder %v449, 0.0
        %vm962 = vcmp.ge.f32.partialorder %v450, 0.0
        %vm963 = vcmp.ge.f32.partialorder %v451, 0.0
        %vm964 = vcmp.ge.f32.partialorder %v452, 0.0
        %vm965 = vcmp.ge.f32.partialorder %v453, 0.0
        %vm966 = vcmp.ge.f32.partialorder %v454, 0.0
        %vm967 = vcmp.ge.f32.partialorder %v455, 0.0
        %vm968 = vcmp.ge.f32.partialorder %v456, 0.0
        %vm969 = vcmp.ge.f32.partialorder %v457, 0.0
        %vm970 = vcmp.ge.f32.partialorder %v458, 0.0
        %vm971 = vcmp.ge.f32.partialorder %v459, 0.0
        %vm972 = vcmp.ge.f32.partialorder %v460, 0.0
        %vm973 = vcmp.ge.f32.partialorder %v461, 0.0
        %vm974 = vcmp.ge.f32.partialorder %v462, 0.0
        %vm975 = vcmp.ge.f32.partialorder %v463, 0.0
        %vm976 = vcmp.ge.f32.partialorder %v464, 0.0
        %vm977 = vcmp.ge.f32.partialorder %v465, 0.0
        %vm978 = vcmp.ge.f32.partialorder %v466, 0.0
        %vm979 = vcmp.ge.f32.partialorder %v467, 0.0
        %vm980 = vcmp.ge.f32.partialorder %v468, 0.0
        %vm981 = vcmp.ge.f32.partialorder %v469, 0.0
        %vm982 = vcmp.ge.f32.partialorder %v470, 0.0
        %vm983 = vcmp.ge.f32.partialorder %v471, 0.0
        %vm984 = vcmp.ge.f32.partialorder %v472, 0.0
        %vm985 = vcmp.ge.f32.partialorder %v473, 0.0
        %vm986 = vcmp.ge.f32.partialorder %v474, 0.0
        %vm987 = vcmp.ge.f32.partialorder %v475, 0.0
        %vm988 = vcmp.ge.f32.partialorder %v476, 0.0
        %vm989 = vcmp.ge.f32.partialorder %v477, 0.0
        %vm990 = vcmp.ge.f32.partialorder %v478, 0.0
        %vm991 = vcmp.ge.f32.partialorder %v479, 0.0
        %vm992 = vcmp.ge.f32.partialorder %v480, 0.0
        %vm993 = vcmp.ge.f32.partialorder %v481, 0.0
        %vm994 = vcmp.ge.f32.partialorder %v482, 0.0
        %vm995 = vcmp.ge.f32.partialorder %v483, 0.0
        %vm996 = vcmp.ge.f32.partialorder %v484, 0.0
        %vm997 = vcmp.ge.f32.partialorder %v485, 0.0
        %vm998 = vcmp.ge.f32.partialorder %v486, 0.0
        %vm999 = vcmp.ge.f32.partialorder %v487, 0.0
        %vm1000 = vcmp.ge.f32.partialorder %v488, 0.0
        %vm1001 = vcmp.ge.f32.partialorder %v489, 0.0
        %vm1002 = vcmp.ge.f32.partialorder %v490, 0.0
        %vm1003 = vcmp.ge.f32.partialorder %v491, 0.0
        %vm1004 = vcmp.ge.f32.partialorder %v492, 0.0
        %vm1005 = vcmp.ge.f32.partialorder %v493, 0.0
        %vm1006 = vcmp.ge.f32.partialorder %v494, 0.0
        %vm1007 = vcmp.ge.f32.partialorder %v495, 0.0
        %vm1008 = vcmp.ge.f32.partialorder %v496, 0.0
        %vm1009 = vcmp.ge.f32.partialorder %v497, 0.0
        %vm1010 = vcmp.ge.f32.partialorder %v498, 0.0
        %vm1011 = vcmp.ge.f32.partialorder %v499, 0.0
        %vm1012 = vcmp.ge.f32.partialorder %v500, 0.0
        %vm1013 = vcmp.ge.f32.partialorder %v501, 0.0
        %vm1014 = vcmp.ge.f32.partialorder %v502, 0.0
        %vm1015 = vcmp.ge.f32.partialorder %v503, 0.0
        %vm1016 = vcmp.ge.f32.partialorder %v504, 0.0
        %vm1017 = vcmp.ge.f32.partialorder %v505, 0.0
        %vm1018 = vcmp.ge.f32.partialorder %v506, 0.0
        %vm1019 = vcmp.ge.f32.partialorder %v507, 0.0
        %vm1020 = vcmp.ge.f32.partialorder %v508, 0.0
        %vm1021 = vcmp.ge.f32.partialorder %v509, 0.0
        %vm1022 = vcmp.ge.f32.partialorder %v510, 0.0
        %vm1023 = vcmp.ge.f32.partialorder %v511, 0.0
        %vm1024 = vcmp.ge.f32.partialorder %v512, 0.0
        %vm1025 = vcmp.ge.f32.partialorder %v513, 0.0
        %vm1026 = vcmp.ge.f32.partialorder %v514, 0.0
        %vm1027 = vcmp.ge.f32.partialorder %v515, 0.0
        %vm1028 = vcmp.ge.f32.partialorder %v516, 0.0
        %vm1029 = vcmp.ge.f32.partialorder %v517, 0.0
        %vm1030 = vcmp.ge.f32.partialorder %v518, 0.0
        %vm1031 = vcmp.ge.f32.partialorder %v519, 0.0
        %vm1032 = vcmp.ge.f32.partialorder %v520, 0.0
        %vm1033 = vcmp.ge.f32.partialorder %v521, 0.0
        %vm1034 = vcmp.ge.f32.partialorder %v522, 0.0
        %vm1035 = vcmp.ge.f32.partialorder %v523, 0.0
        %vm1036 = vcmp.ge.f32.partialorder %v524, 0.0
        %vm1037 = vcmp.ge.f32.partialorder %v525, 0.0
        %vm1038 = vcmp.ge.f32.partialorder %v526, 0.0
        %vm1039 = vcmp.ge.f32.partialorder %v527, 0.0
        %vm1040 = vcmp.ge.f32.partialorder %v528, 0.0
        %vm1041 = vcmp.ge.f32.partialorder %v529, 0.0
        %vm1042 = vcmp.ge.f32.partialorder %v530, 0.0
        %vm1043 = vcmp.ge.f32.partialorder %v531, 0.0
        %vm1044 = vcmp.ge.f32.partialorder %v532, 0.0
        %vm1045 = vcmp.ge.f32.partialorder %v533, 0.0
        %vm1046 = vcmp.ge.f32.partialorder %v534, 0.0
        %vm1047 = vcmp.ge.f32.partialorder %v535, 0.0
        %vm1048 = vcmp.ge.f32.partialorder %v536, 0.0
        %vm1049 = vcmp.ge.f32.partialorder %v537, 0.0
        %vm1050 = vcmp.ge.f32.partialorder %v538, 0.0
        %vm1051 = vcmp.ge.f32.partialorder %v539, 0.0
        %vm1052 = vcmp.ge.f32.partialorder %v540, 0.0
        %vm1053 = vcmp.ge.f32.partialorder %v541, 0.0
        %vm1054 = vcmp.ge.f32.partialorder %v542, 0.0
        %vm1055 = vcmp.ge.f32.partialorder %v543, 0.0
        %vm1056 = vcmp.ge.f32.partialorder %v544, 0.0
        %vm1057 = vcmp.ge.f32.partialorder %v545, 0.0
        %vm1058 = vcmp.ge.f32.partialorder %v546, 0.0
        %vm1059 = vcmp.ge.f32.partialorder %v547, 0.0
        %vm1060 = vcmp.ge.f32.partialorder %v548, 0.0
        %vm1061 = vcmp.ge.f32.partialorder %v549, 0.0
        %vm1062 = vcmp.ge.f32.partialorder %v550, 0.0
        %vm1063 = vcmp.ge.f32.partialorder %v551, 0.0
        %vm1064 = vcmp.ge.f32.partialorder %v552, 0.0
        %vm1065 = vcmp.ge.f32.partialorder %v553, 0.0
        %vm1066 = vcmp.ge.f32.partialorder %v554, 0.0
        %vm1067 = vcmp.ge.f32.partialorder %v555, 0.0
        %vm1068 = vcmp.ge.f32.partialorder %v556, 0.0
        %vm1069 = vcmp.ge.f32.partialorder %v557, 0.0
        %vm1070 = vcmp.ge.f32.partialorder %v558, 0.0
        %vm1071 = vcmp.ge.f32.partialorder %v559, 0.0
        %vm1072 = vcmp.ge.f32.partialorder %v560, 0.0
        %vm1073 = vcmp.ge.f32.partialorder %v561, 0.0
        %vm1074 = vcmp.ge.f32.partialorder %v562, 0.0
        %vm1075 = vcmp.ge.f32.partialorder %v563, 0.0
        %vm1076 = vcmp.ge.f32.partialorder %v564, 0.0
        %vm1077 = vcmp.ge.f32.partialorder %v565, 0.0
        %vm1078 = vcmp.ge.f32.partialorder %v566, 0.0
        %vm1079 = vcmp.ge.f32.partialorder %v567, 0.0
        %vm1080 = vcmp.ge.f32.partialorder %v568, 0.0
        %vm1081 = vcmp.ge.f32.partialorder %v569, 0.0
        %vm1082 = vcmp.ge.f32.partialorder %v570, 0.0
        %vm1083 = vcmp.ge.f32.partialorder %v571, 0.0
        %vm1084 = vcmp.ge.f32.partialorder %v572, 0.0
        %vm1085 = vcmp.ge.f32.partialorder %v573, 0.0
        %vm1086 = vcmp.ge.f32.partialorder %v574, 0.0
        %vm1087 = vcmp.ge.f32.partialorder %v575, 0.0
        %vm1088 = vcmp.ge.f32.partialorder %v576, 0.0
        %vm1089 = vcmp.ge.f32.partialorder %v577, 0.0
        %vm1090 = vcmp.ge.f32.partialorder %v578, 0.0
        %vm1091 = vcmp.ge.f32.partialorder %v579, 0.0
        %vm1092 = vcmp.ge.f32.partialorder %v580, 0.0
        %vm1093 = vcmp.ge.f32.partialorder %v581, 0.0
        %vm1094 = vcmp.ge.f32.partialorder %v582, 0.0
        %vm1095 = vcmp.ge.f32.partialorder %v583, 0.0
        %vm1096 = vcmp.ge.f32.partialorder %v584, 0.0
        %vm1097 = vcmp.ge.f32.partialorder %v585, 0.0
        %vm1098 = vcmp.ge.f32.partialorder %v586, 0.0
        %vm1099 = vcmp.ge.f32.partialorder %v587, 0.0
        %vm1100 = vcmp.ge.f32.partialorder %v588, 0.0
        %vm1101 = vcmp.ge.f32.partialorder %v589, 0.0
        %vm1102 = vcmp.ge.f32.partialorder %v590, 0.0
        %vm1103 = vcmp.ge.f32.partialorder %v591, 0.0
        %vm1104 = vcmp.ge.f32.partialorder %v592, 0.0
        %vm1105 = vcmp.ge.f32.partialorder %v593, 0.0
        %vm1106 = vcmp.ge.f32.partialorder %v594, 0.0
        %vm1107 = vcmp.ge.f32.partialorder %v595, 0.0
        %vm1108 = vcmp.ge.f32.partialorder %v596, 0.0
        %vm1109 = vcmp.ge.f32.partialorder %v597, 0.0
        %vm1110 = vcmp.ge.f32.partialorder %v598, 0.0
        %vm1111 = vcmp.ge.f32.partialorder %v599, 0.0
        %vm1112 = vcmp.ge.f32.partialorder %v600, 0.0
        %vm1113 = vcmp.ge.f32.partialorder %v601, 0.0
        %vm1114 = vcmp.ge.f32.partialorder %v602, 0.0
        %vm1115 = vcmp.ge.f32.partialorder %v603, 0.0
        %vm1116 = vcmp.ge.f32.partialorder %v604, 0.0
        %vm1117 = vcmp.ge.f32.partialorder %v605, 0.0
        %vm1118 = vcmp.ge.f32.partialorder %v606, 0.0
        %vm1119 = vcmp.ge.f32.partialorder %v607, 0.0
        %vm1120 = vcmp.ge.f32.partialorder %v608, 0.0
        %vm1121 = vcmp.ge.f32.partialorder %v609, 0.0
        %vm1122 = vcmp.ge.f32.partialorder %v610, 0.0
        %vm1123 = vcmp.ge.f32.partialorder %v611, 0.0
        %vm1124 = vcmp.ge.f32.partialorder %v612, 0.0
        %vm1125 = vcmp.ge.f32.partialorder %v613, 0.0
        %vm1126 = vcmp.ge.f32.partialorder %v614, 0.0
        %vm1127 = vcmp.ge.f32.partialorder %v615, 0.0
        %vm1128 = vcmp.ge.f32.partialorder %v616, 0.0
        %vm1129 = vcmp.ge.f32.partialorder %v617, 0.0
        %vm1130 = vcmp.ge.f32.partialorder %v618, 0.0
        %vm1131 = vcmp.ge.f32.partialorder %v619, 0.0
        %vm1132 = vcmp.ge.f32.partialorder %v620, 0.0
        %vm1133 = vcmp.ge.f32.partialorder %v621, 0.0
        %vm1134 = vcmp.ge.f32.partialorder %v622, 0.0
        %vm1135 = vcmp.ge.f32.partialorder %v623, 0.0
        %vm1136 = vcmp.ge.f32.partialorder %v624, 0.0
        %vm1137 = vcmp.ge.f32.partialorder %v625, 0.0
        %vm1138 = vcmp.ge.f32.partialorder %v626, 0.0
        %vm1139 = vcmp.ge.f32.partialorder %v627, 0.0
        %vm1140 = vcmp.ge.f32.partialorder %v628, 0.0
        %vm1141 = vcmp.ge.f32.partialorder %v629, 0.0
        %vm1142 = vcmp.ge.f32.partialorder %v630, 0.0
        %vm1143 = vcmp.ge.f32.partialorder %v631, 0.0
        %vm1144 = vcmp.ge.f32.partialorder %v632, 0.0
        %vm1145 = vcmp.ge.f32.partialorder %v633, 0.0
        %vm1146 = vcmp.ge.f32.partialorder %v634, 0.0
        %vm1147 = vcmp.ge.f32.partialorder %v635, 0.0
        %vm1148 = vcmp.ge.f32.partialorder %v636, 0.0
        %vm1149 = vcmp.ge.f32.partialorder %v637, 0.0
        %vm1150 = vcmp.ge.f32.partialorder %v638, 0.0
        %vm1151 = vcmp.ge.f32.partialorder %v639, 0.0
        %vm1152 = vcmp.ge.f32.partialorder %v640, 0.0
        %vm1153 = vcmp.ge.f32.partialorder %v641, 0.0
        %vm1154 = vcmp.ge.f32.partialorder %v642, 0.0
        %vm1155 = vcmp.ge.f32.partialorder %v643, 0.0
        %vm1156 = vcmp.ge.f32.partialorder %v644, 0.0
        %vm1157 = vcmp.ge.f32.partialorder %v645, 0.0
        %vm1158 = vcmp.ge.f32.partialorder %v646, 0.0
        %vm1159 = vcmp.ge.f32.partialorder %v647, 0.0
        %vm1160 = vcmp.ge.f32.partialorder %v648, 0.0
        %vm1161 = vcmp.ge.f32.partialorder %v649, 0.0
        %v1162 = vsel %vm650, 1.4142135, 0.28284273
        %v1163 = vsel %vm651, 1.4142135, 0.28284273
        %v1164 = vsel %vm652, 1.4142135, 0.28284273
        %v1165 = vsel %vm653, 1.4142135, 0.28284273
        %v1166 = vsel %vm654, 1.4142135, 0.28284273
        %v1167 = vsel %vm655, 1.4142135, 0.28284273
        %v1168 = vsel %vm656, 1.4142135, 0.28284273
        %v1169 = vsel %vm657, 1.4142135, 0.28284273
        %v1170 = vsel %vm658, 1.4142135, 0.28284273
        %v1171 = vsel %vm659, 1.4142135, 0.28284273
        %v1172 = vsel %vm660, 1.4142135, 0.28284273
        %v1173 = vsel %vm661, 1.4142135, 0.28284273
        %v1174 = vsel %vm662, 1.4142135, 0.28284273
        %v1175 = vsel %vm663, 1.4142135, 0.28284273
        %v1176 = vsel %vm664, 1.4142135, 0.28284273
        %v1177 = vsel %vm665, 1.4142135, 0.28284273
        %v1178 = vsel %vm666, 1.4142135, 0.28284273
        %v1179 = vsel %vm667, 1.4142135, 0.28284273
        %v1180 = vsel %vm668, 1.4142135, 0.28284273
        %v1181 = vsel %vm669, 1.4142135, 0.28284273
        %v1182 = vsel %vm670, 1.4142135, 0.28284273
        %v1183 = vsel %vm671, 1.4142135, 0.28284273
        %v1184 = vsel %vm672, 1.4142135, 0.28284273
        %v1185 = vsel %vm673, 1.4142135, 0.28284273
        %v1186 = vsel %vm674, 1.4142135, 0.28284273
        %v1187 = vsel %vm675, 1.4142135, 0.28284273
        %v1188 = vsel %vm676, 1.4142135, 0.28284273
        %v1189 = vsel %vm677, 1.4142135, 0.28284273
        %v1190 = vsel %vm678, 1.4142135, 0.28284273
        %v1191 = vsel %vm679, 1.4142135, 0.28284273
        %v1192 = vsel %vm680, 1.4142135, 0.28284273
        %v1193 = vsel %vm681, 1.4142135, 0.28284273
        %v1194 = vsel %vm682, 1.4142135, 0.28284273
        %v1195 = vsel %vm683, 1.4142135, 0.28284273
        %v1196 = vsel %vm684, 1.4142135, 0.28284273
        %v1197 = vsel %vm685, 1.4142135, 0.28284273
        %v1198 = vsel %vm686, 1.4142135, 0.28284273
        %v1199 = vsel %vm687, 1.4142135, 0.28284273
        %v1200 = vsel %vm688, 1.4142135, 0.28284273
        %v1201 = vsel %vm689, 1.4142135, 0.28284273
        %v1202 = vsel %vm690, 1.4142135, 0.28284273
        %v1203 = vsel %vm691, 1.4142135, 0.28284273
        %v1204 = vsel %vm692, 1.4142135, 0.28284273
        %v1205 = vsel %vm693, 1.4142135, 0.28284273
        %v1206 = vsel %vm694, 1.4142135, 0.28284273
        %v1207 = vsel %vm695, 1.4142135, 0.28284273
        %v1208 = vsel %vm696, 1.4142135, 0.28284273
        %v1209 = vsel %vm697, 1.4142135, 0.28284273
        %v1210 = vsel %vm698, 1.4142135, 0.28284273
        %v1211 = vsel %vm699, 1.4142135, 0.28284273
        %v1212 = vsel %vm700, 1.4142135, 0.28284273
        %v1213 = vsel %vm701, 1.4142135, 0.28284273
        %v1214 = vsel %vm702, 1.4142135, 0.28284273
        %v1215 = vsel %vm703, 1.4142135, 0.28284273
        %v1216 = vsel %vm704, 1.4142135, 0.28284273
        %v1217 = vsel %vm705, 1.4142135, 0.28284273
        %v1218 = vsel %vm706, 1.4142135, 0.28284273
        %v1219 = vsel %vm707, 1.4142135, 0.28284273
        %v1220 = vsel %vm708, 1.4142135, 0.28284273
        %v1221 = vsel %vm709, 1.4142135, 0.28284273
        %v1222 = vsel %vm710, 1.4142135, 0.28284273
        %v1223 = vsel %vm711, 1.4142135, 0.28284273
        %v1224 = vsel %vm712, 1.4142135, 0.28284273
        %v1225 = vsel %vm713, 1.4142135, 0.28284273
        %v1226 = vsel %vm714, 1.4142135, 0.28284273
        %v1227 = vsel %vm715, 1.4142135, 0.28284273
        %v1228 = vsel %vm716, 1.4142135, 0.28284273
        %v1229 = vsel %vm717, 1.4142135, 0.28284273
        %v1230 = vsel %vm718, 1.4142135, 0.28284273
        %v1231 = vsel %vm719, 1.4142135, 0.28284273
        %v1232 = vsel %vm720, 1.4142135, 0.28284273
        %v1233 = vsel %vm721, 1.4142135, 0.28284273
        %v1234 = vsel %vm722, 1.4142135, 0.28284273
        %v1235 = vsel %vm723, 1.4142135, 0.28284273
        %v1236 = vsel %vm724, 1.4142135, 0.28284273
        %v1237 = vsel %vm725, 1.4142135, 0.28284273
        %v1238 = vsel %vm726, 1.4142135, 0.28284273
        %v1239 = vsel %vm727, 1.4142135, 0.28284273
        %v1240 = vsel %vm728, 1.4142135, 0.28284273
        %v1241 = vsel %vm729, 1.4142135, 0.28284273
        %v1242 = vsel %vm730, 1.4142135, 0.28284273
        %v1243 = vsel %vm731, 1.4142135, 0.28284273
        %v1244 = vsel %vm732, 1.4142135, 0.28284273
        %v1245 = vsel %vm733, 1.4142135, 0.28284273
        %v1246 = vsel %vm734, 1.4142135, 0.28284273
        %v1247 = vsel %vm735, 1.4142135, 0.28284273
        %v1248 = vsel %vm736, 1.4142135, 0.28284273
        %v1249 = vsel %vm737, 1.4142135, 0.28284273
        %v1250 = vsel %vm738, 1.4142135, 0.28284273
        %v1251 = vsel %vm739, 1.4142135, 0.28284273
        %v1252 = vsel %vm740, 1.4142135, 0.28284273
        %v1253 = vsel %vm741, 1.4142135, 0.28284273
        %v1254 = vsel %vm742, 1.4142135, 0.28284273
        %v1255 = vsel %vm743, 1.4142135, 0.28284273
        %v1256 = vsel %vm744, 1.4142135, 0.28284273
        %v1257 = vsel %vm745, 1.4142135, 0.28284273
        %v1258 = vsel %vm746, 1.4142135, 0.28284273
        %v1259 = vsel %vm747, 1.4142135, 0.28284273
        %v1260 = vsel %vm748, 1.4142135, 0.28284273
        %v1261 = vsel %vm749, 1.4142135, 0.28284273
        %v1262 = vsel %vm750, 1.4142135, 0.28284273
        %v1263 = vsel %vm751, 1.4142135, 0.28284273
        %v1264 = vsel %vm752, 1.4142135, 0.28284273
        %v1265 = vsel %vm753, 1.4142135, 0.28284273
        %v1266 = vsel %vm754, 1.4142135, 0.28284273
        %v1267 = vsel %vm755, 1.4142135, 0.28284273
        %v1268 = vsel %vm756, 1.4142135, 0.28284273
        %v1269 = vsel %vm757, 1.4142135, 0.28284273
        %v1270 = vsel %vm758, 1.4142135, 0.28284273
        %v1271 = vsel %vm759, 1.4142135, 0.28284273
        %v1272 = vsel %vm760, 1.4142135, 0.28284273
        %v1273 = vsel %vm761, 1.4142135, 0.28284273
        %v1274 = vsel %vm762, 1.4142135, 0.28284273
        %v1275 = vsel %vm763, 1.4142135, 0.28284273
        %v1276 = vsel %vm764, 1.4142135, 0.28284273
        %v1277 = vsel %vm765, 1.4142135, 0.28284273
        %v1278 = vsel %vm766, 1.4142135, 0.28284273
        %v1279 = vsel %vm767, 1.4142135, 0.28284273
        %v1280 = vsel %vm768, 1.4142135, 0.28284273
        %v1281 = vsel %vm769, 1.4142135, 0.28284273
        %v1282 = vsel %vm770, 1.4142135, 0.28284273
        %v1283 = vsel %vm771, 1.4142135, 0.28284273
        %v1284 = vsel %vm772, 1.4142135, 0.28284273
        %v1285 = vsel %vm773, 1.4142135, 0.28284273
        %v1286 = vsel %vm774, 1.4142135, 0.28284273
        %v1287 = vsel %vm775, 1.4142135, 0.28284273
        %v1288 = vsel %vm776, 1.4142135, 0.28284273
        %v1289 = vsel %vm777, 1.4142135, 0.28284273
        %v1290 = vsel %vm778, 1.4142135, 0.28284273
        %v1291 = vsel %vm779, 1.4142135, 0.28284273
        %v1292 = vsel %vm780, 1.4142135, 0.28284273
        %v1293 = vsel %vm781, 1.4142135, 0.28284273
        %v1294 = vsel %vm782, 1.4142135, 0.28284273
        %v1295 = vsel %vm783, 1.4142135, 0.28284273
        %v1296 = vsel %vm784, 1.4142135, 0.28284273
        %v1297 = vsel %vm785, 1.4142135, 0.28284273
        %v1298 = vsel %vm786, 1.4142135, 0.28284273
        %v1299 = vsel %vm787, 1.4142135, 0.28284273
        %v1300 = vsel %vm788, 1.4142135, 0.28284273
        %v1301 = vsel %vm789, 1.4142135, 0.28284273
        %v1302 = vsel %vm790, 1.4142135, 0.28284273
        %v1303 = vsel %vm791, 1.4142135, 0.28284273
        %v1304 = vsel %vm792, 1.4142135, 0.28284273
        %v1305 = vsel %vm793, 1.4142135, 0.28284273
        %v1306 = vsel %vm794, 1.4142135, 0.28284273
        %v1307 = vsel %vm795, 1.4142135, 0.28284273
        %v1308 = vsel %vm796, 1.4142135, 0.28284273
        %v1309 = vsel %vm797, 1.4142135, 0.28284273
        %v1310 = vsel %vm798, 1.4142135, 0.28284273
        %v1311 = vsel %vm799, 1.4142135, 0.28284273
        %v1312 = vsel %vm800, 1.4142135, 0.28284273
        %v1313 = vsel %vm801, 1.4142135, 0.28284273
        %v1314 = vsel %vm802, 1.4142135, 0.28284273
        %v1315 = vsel %vm803, 1.4142135, 0.28284273
        %v1316 = vsel %vm804, 1.4142135, 0.28284273
        %v1317 = vsel %vm805, 1.4142135, 0.28284273
        %v1318 = vsel %vm806, 1.4142135, 0.28284273
        %v1319 = vsel %vm807, 1.4142135, 0.28284273
        %v1320 = vsel %vm808, 1.4142135, 0.28284273
        %v1321 = vsel %vm809, 1.4142135, 0.28284273
        %v1322 = vsel %vm810, 1.4142135, 0.28284273
        %v1323 = vsel %vm811, 1.4142135, 0.28284273
        %v1324 = vsel %vm812, 1.4142135, 0.28284273
        %v1325 = vsel %vm813, 1.4142135, 0.28284273
        %v1326 = vsel %vm814, 1.4142135, 0.28284273
        %v1327 = vsel %vm815, 1.4142135, 0.28284273
        %v1328 = vsel %vm816, 1.4142135, 0.28284273
        %v1329 = vsel %vm817, 1.4142135, 0.28284273
        %v1330 = vsel %vm818, 1.4142135, 0.28284273
        %v1331 = vsel %vm819, 1.4142135, 0.28284273
        %v1332 = vsel %vm820, 1.4142135, 0.28284273
        %v1333 = vsel %vm821, 1.4142135, 0.28284273
        %v1334 = vsel %vm822, 1.4142135, 0.28284273
        %v1335 = vsel %vm823, 1.4142135, 0.28284273
        %v1336 = vsel %vm824, 1.4142135, 0.28284273
        %v1337 = vsel %vm825, 1.4142135, 0.28284273
        %v1338 = vsel %vm826, 1.4142135, 0.28284273
        %v1339 = vsel %vm827, 1.4142135, 0.28284273
        %v1340 = vsel %vm828, 1.4142135, 0.28284273
        %v1341 = vsel %vm829, 1.4142135, 0.28284273
        %v1342 = vsel %vm830, 1.4142135, 0.28284273
        %v1343 = vsel %vm831, 1.4142135, 0.28284273
        %v1344 = vsel %vm832, 1.4142135, 0.28284273
        %v1345 = vsel %vm833, 1.4142135, 0.28284273
        %v1346 = vsel %vm834, 1.4142135, 0.28284273
        %v1347 = vsel %vm835, 1.4142135, 0.28284273
        %v1348 = vsel %vm836, 1.4142135, 0.28284273
        %v1349 = vsel %vm837, 1.4142135, 0.28284273
        %v1350 = vsel %vm838, 1.4142135, 0.28284273
        %v1351 = vsel %vm839, 1.4142135, 0.28284273
        %v1352 = vsel %vm840, 1.4142135, 0.28284273
        %v1353 = vsel %vm841, 1.4142135, 0.28284273
        %v1354 = vsel %vm842, 1.4142135, 0.28284273
        %v1355 = vsel %vm843, 1.4142135, 0.28284273
        %v1356 = vsel %vm844, 1.4142135, 0.28284273
        %v1357 = vsel %vm845, 1.4142135, 0.28284273
        %v1358 = vsel %vm846, 1.4142135, 0.28284273
        %v1359 = vsel %vm847, 1.4142135, 0.28284273
        %v1360 = vsel %vm848, 1.4142135, 0.28284273
        %v1361 = vsel %vm849, 1.4142135, 0.28284273
        %v1362 = vsel %vm850, 1.4142135, 0.28284273
        %v1363 = vsel %vm851, 1.4142135, 0.28284273
        %v1364 = vsel %vm852, 1.4142135, 0.28284273
        %v1365 = vsel %vm853, 1.4142135, 0.28284273
        %v1366 = vsel %vm854, 1.4142135, 0.28284273
        %v1367 = vsel %vm855, 1.4142135, 0.28284273
        %v1368 = vsel %vm856, 1.4142135, 0.28284273
        %v1369 = vsel %vm857, 1.4142135, 0.28284273
        %v1370 = vsel %vm858, 1.4142135, 0.28284273
        %v1371 = vsel %vm859, 1.4142135, 0.28284273
        %v1372 = vsel %vm860, 1.4142135, 0.28284273
        %v1373 = vsel %vm861, 1.4142135, 0.28284273
        %v1374 = vsel %vm862, 1.4142135, 0.28284273
        %v1375 = vsel %vm863, 1.4142135, 0.28284273
        %v1376 = vsel %vm864, 1.4142135, 0.28284273
        %v1377 = vsel %vm865, 1.4142135, 0.28284273
        %v1378 = vsel %vm866, 1.4142135, 0.28284273
        %v1379 = vsel %vm867, 1.4142135, 0.28284273
        %v1380 = vsel %vm868, 1.4142135, 0.28284273
        %v1381 = vsel %vm869, 1.4142135, 0.28284273
        %v1382 = vsel %vm870, 1.4142135, 0.28284273
        %v1383 = vsel %vm871, 1.4142135, 0.28284273
        %v1384 = vsel %vm872, 1.4142135, 0.28284273
        %v1385 = vsel %vm873, 1.4142135, 0.28284273
        %v1386 = vsel %vm874, 1.4142135, 0.28284273
        %v1387 = vsel %vm875, 1.4142135, 0.28284273
        %v1388 = vsel %vm876, 1.4142135, 0.28284273
        %v1389 = vsel %vm877, 1.4142135, 0.28284273
        %v1390 = vsel %vm878, 1.4142135, 0.28284273
        %v1391 = vsel %vm879, 1.4142135, 0.28284273
        %v1392 = vsel %vm880, 1.4142135, 0.28284273
        %v1393 = vsel %vm881, 1.4142135, 0.28284273
        %v1394 = vsel %vm882, 1.4142135, 0.28284273
        %v1395 = vsel %vm883, 1.4142135, 0.28284273
        %v1396 = vsel %vm884, 1.4142135, 0.28284273
        %v1397 = vsel %vm885, 1.4142135, 0.28284273
        %v1398 = vsel %vm886, 1.4142135, 0.28284273
        %v1399 = vsel %vm887, 1.4142135, 0.28284273
        %v1400 = vsel %vm888, 1.4142135, 0.28284273
        %v1401 = vsel %vm889, 1.4142135, 0.28284273
        %v1402 = vsel %vm890, 1.4142135, 0.28284273
        %v1403 = vsel %vm891, 1.4142135, 0.28284273
        %v1404 = vsel %vm892, 1.4142135, 0.28284273
        %v1405 = vsel %vm893, 1.4142135, 0.28284273
        %v1406 = vsel %vm894, 1.4142135, 0.28284273
        %v1407 = vsel %vm895, 1.4142135, 0.28284273
        %v1408 = vsel %vm896, 1.4142135, 0.28284273
        %v1409 = vsel %vm897, 1.4142135, 0.28284273
        %v1410 = vsel %vm898, 1.4142135, 0.28284273
        %v1411 = vsel %vm899, 1.4142135, 0.28284273
        %v1412 = vsel %vm900, 1.4142135, 0.28284273
        %v1413 = vsel %vm901, 1.4142135, 0.28284273
        %v1414 = vsel %vm902, 1.4142135, 0.28284273
        %v1415 = vsel %vm903, 1.4142135, 0.28284273
        %v1416 = vsel %vm904, 1.4142135, 0.28284273
        %v1417 = vsel %vm905, 1.4142135, 0.28284273
        %v1418 = vsel %vm906, 1.4142135, 0.28284273
        %v1419 = vsel %vm907, 1.4142135, 0.28284273
        %v1420 = vsel %vm908, 1.4142135, 0.28284273
        %v1421 = vsel %vm909, 1.4142135, 0.28284273
        %v1422 = vsel %vm910, 1.4142135, 0.28284273
        %v1423 = vsel %vm911, 1.4142135, 0.28284273
        %v1424 = vsel %vm912, 1.4142135, 0.28284273
        %v1425 = vsel %vm913, 1.4142135, 0.28284273
        %v1426 = vsel %vm914, 1.4142135, 0.28284273
        %v1427 = vsel %vm915, 1.4142135, 0.28284273
        %v1428 = vsel %vm916, 1.4142135, 0.28284273
        %v1429 = vsel %vm917, 1.4142135, 0.28284273
        %v1430 = vsel %vm918, 1.4142135, 0.28284273
        %v1431 = vsel %vm919, 1.4142135, 0.28284273
        %v1432 = vsel %vm920, 1.4142135, 0.28284273
        %v1433 = vsel %vm921, 1.4142135, 0.28284273
        %v1434 = vsel %vm922, 1.4142135, 0.28284273
        %v1435 = vsel %vm923, 1.4142135, 0.28284273
        %v1436 = vsel %vm924, 1.4142135, 0.28284273
        %v1437 = vsel %vm925, 1.4142135, 0.28284273
        %v1438 = vsel %vm926, 1.4142135, 0.28284273
        %v1439 = vsel %vm927, 1.4142135, 0.28284273
        %v1440 = vsel %vm928, 1.4142135, 0.28284273
        %v1441 = vsel %vm929, 1.4142135, 0.28284273
        %v1442 = vsel %vm930, 1.4142135, 0.28284273
        %v1443 = vsel %vm931, 1.4142135, 0.28284273
        %v1444 = vsel %vm932, 1.4142135, 0.28284273
        %v1445 = vsel %vm933, 1.4142135, 0.28284273
        %v1446 = vsel %vm934, 1.4142135, 0.28284273
        %v1447 = vsel %vm935, 1.4142135, 0.28284273
        %v1448 = vsel %vm936, 1.4142135, 0.28284273
        %v1449 = vsel %vm937, 1.4142135, 0.28284273
        %v1450 = vsel %vm938, 1.4142135, 0.28284273
        %v1451 = vsel %vm939, 1.4142135, 0.28284273
        %v1452 = vsel %vm940, 1.4142135, 0.28284273
        %v1453 = vsel %vm941, 1.4142135, 0.28284273
        %v1454 = vsel %vm942, 1.4142135, 0.28284273
        %v1455 = vsel %vm943, 1.4142135, 0.28284273
        %v1456 = vsel %vm944, 1.4142135, 0.28284273
        %v1457 = vsel %vm945, 1.4142135, 0.28284273
        %v1458 = vsel %vm946, 1.4142135, 0.28284273
        %v1459 = vsel %vm947, 1.4142135, 0.28284273
        %v1460 = vsel %vm948, 1.4142135, 0.28284273
        %v1461 = vsel %vm949, 1.4142135, 0.28284273
        %v1462 = vsel %vm950, 1.4142135, 0.28284273
        %v1463 = vsel %vm951, 1.4142135, 0.28284273
        %v1464 = vsel %vm952, 1.4142135, 0.28284273
        %v1465 = vsel %vm953, 1.4142135, 0.28284273
        %v1466 = vsel %vm954, 1.4142135, 0.28284273
        %v1467 = vsel %vm955, 1.4142135, 0.28284273
        %v1468 = vsel %vm956, 1.4142135, 0.28284273
        %v1469 = vsel %vm957, 1.4142135, 0.28284273
        %v1470 = vsel %vm958, 1.4142135, 0.28284273
        %v1471 = vsel %vm959, 1.4142135, 0.28284273
        %v1472 = vsel %vm960, 1.4142135, 0.28284273
        %v1473 = vsel %vm961, 1.4142135, 0.28284273
        %v1474 = vsel %vm962, 1.4142135, 0.28284273
        %v1475 = vsel %vm963, 1.4142135, 0.28284273
        %v1476 = vsel %vm964, 1.4142135, 0.28284273
        %v1477 = vsel %vm965, 1.4142135, 0.28284273
        %v1478 = vsel %vm966, 1.4142135, 0.28284273
        %v1479 = vsel %vm967, 1.4142135, 0.28284273
        %v1480 = vsel %vm968, 1.4142135, 0.28284273
        %v1481 = vsel %vm969, 1.4142135, 0.28284273
        %v1482 = vsel %vm970, 1.4142135, 0.28284273
        %v1483 = vsel %vm971, 1.4142135, 0.28284273
        %v1484 = vsel %vm972, 1.4142135, 0.28284273
        %v1485 = vsel %vm973, 1.4142135, 0.28284273
        %v1486 = vsel %vm974, 1.4142135, 0.28284273
        %v1487 = vsel %vm975, 1.4142135, 0.28284273
        %v1488 = vsel %vm976, 1.4142135, 0.28284273
        %v1489 = vsel %vm977, 1.4142135, 0.28284273
        %v1490 = vsel %vm978, 1.4142135, 0.28284273
        %v1491 = vsel %vm979, 1.4142135, 0.28284273
        %v1492 = vsel %vm980, 1.4142135, 0.28284273
        %v1493 = vsel %vm981, 1.4142135, 0.28284273
        %v1494 = vsel %vm982, 1.4142135, 0.28284273
        %v1495 = vsel %vm983, 1.4142135, 0.28284273
        %v1496 = vsel %vm984, 1.4142135, 0.28284273
        %v1497 = vsel %vm985, 1.4142135, 0.28284273
        %v1498 = vsel %vm986, 1.4142135, 0.28284273
        %v1499 = vsel %vm987, 1.4142135, 0.28284273
        %v1500 = vsel %vm988, 1.4142135, 0.28284273
        %v1501 = vsel %vm989, 1.4142135, 0.28284273
        %v1502 = vsel %vm990, 1.4142135, 0.28284273
        %v1503 = vsel %vm991, 1.4142135, 0.28284273
        %v1504 = vsel %vm992, 1.4142135, 0.28284273
        %v1505 = vsel %vm993, 1.4142135, 0.28284273
        %v1506 = vsel %vm994, 1.4142135, 0.28284273
        %v1507 = vsel %vm995, 1.4142135, 0.28284273
        %v1508 = vsel %vm996, 1.4142135, 0.28284273
        %v1509 = vsel %vm997, 1.4142135, 0.28284273
        %v1510 = vsel %vm998, 1.4142135, 0.28284273
        %v1511 = vsel %vm999, 1.4142135, 0.28284273
        %v1512 = vsel %vm1000, 1.4142135, 0.28284273
        %v1513 = vsel %vm1001, 1.4142135, 0.28284273
        %v1514 = vsel %vm1002, 1.4142135, 0.28284273
        %v1515 = vsel %vm1003, 1.4142135, 0.28284273
        %v1516 = vsel %vm1004, 1.4142135, 0.28284273
        %v1517 = vsel %vm1005, 1.4142135, 0.28284273
        %v1518 = vsel %vm1006, 1.4142135, 0.28284273
        %v1519 = vsel %vm1007, 1.4142135, 0.28284273
        %v1520 = vsel %vm1008, 1.4142135, 0.28284273
        %v1521 = vsel %vm1009, 1.4142135, 0.28284273
        %v1522 = vsel %vm1010, 1.4142135, 0.28284273
        %v1523 = vsel %vm1011, 1.4142135, 0.28284273
        %v1524 = vsel %vm1012, 1.4142135, 0.28284273
        %v1525 = vsel %vm1013, 1.4142135, 0.28284273
        %v1526 = vsel %vm1014, 1.4142135, 0.28284273
        %v1527 = vsel %vm1015, 1.4142135, 0.28284273
        %v1528 = vsel %vm1016, 1.4142135, 0.28284273
        %v1529 = vsel %vm1017, 1.4142135, 0.28284273
        %v1530 = vsel %vm1018, 1.4142135, 0.28284273
        %v1531 = vsel %vm1019, 1.4142135, 0.28284273
        %v1532 = vsel %vm1020, 1.4142135, 0.28284273
        %v1533 = vsel %vm1021, 1.4142135, 0.28284273
        %v1534 = vsel %vm1022, 1.4142135, 0.28284273
        %v1535 = vsel %vm1023, 1.4142135, 0.28284273
        %v1536 = vsel %vm1024, 1.4142135, 0.28284273
        %v1537 = vsel %vm1025, 1.4142135, 0.28284273
        %v1538 = vsel %vm1026, 1.4142135, 0.28284273
        %v1539 = vsel %vm1027, 1.4142135, 0.28284273
        %v1540 = vsel %vm1028, 1.4142135, 0.28284273
        %v1541 = vsel %vm1029, 1.4142135, 0.28284273
        %v1542 = vsel %vm1030, 1.4142135, 0.28284273
        %v1543 = vsel %vm1031, 1.4142135, 0.28284273
        %v1544 = vsel %vm1032, 1.4142135, 0.28284273
        %v1545 = vsel %vm1033, 1.4142135, 0.28284273
        %v1546 = vsel %vm1034, 1.4142135, 0.28284273
        %v1547 = vsel %vm1035, 1.4142135, 0.28284273
        %v1548 = vsel %vm1036, 1.4142135, 0.28284273
        %v1549 = vsel %vm1037, 1.4142135, 0.28284273
        %v1550 = vsel %vm1038, 1.4142135, 0.28284273
        %v1551 = vsel %vm1039, 1.4142135, 0.28284273
        %v1552 = vsel %vm1040, 1.4142135, 0.28284273
        %v1553 = vsel %vm1041, 1.4142135, 0.28284273
        %v1554 = vsel %vm1042, 1.4142135, 0.28284273
        %v1555 = vsel %vm1043, 1.4142135, 0.28284273
        %v1556 = vsel %vm1044, 1.4142135, 0.28284273
        %v1557 = vsel %vm1045, 1.4142135, 0.28284273
        %v1558 = vsel %vm1046, 1.4142135, 0.28284273
        %v1559 = vsel %vm1047, 1.4142135, 0.28284273
        %v1560 = vsel %vm1048, 1.4142135, 0.28284273
        %v1561 = vsel %vm1049, 1.4142135, 0.28284273
        %v1562 = vsel %vm1050, 1.4142135, 0.28284273
        %v1563 = vsel %vm1051, 1.4142135, 0.28284273
        %v1564 = vsel %vm1052, 1.4142135, 0.28284273
        %v1565 = vsel %vm1053, 1.4142135, 0.28284273
        %v1566 = vsel %vm1054, 1.4142135, 0.28284273
        %v1567 = vsel %vm1055, 1.4142135, 0.28284273
        %v1568 = vsel %vm1056, 1.4142135, 0.28284273
        %v1569 = vsel %vm1057, 1.4142135, 0.28284273
        %v1570 = vsel %vm1058, 1.4142135, 0.28284273
        %v1571 = vsel %vm1059, 1.4142135, 0.28284273
        %v1572 = vsel %vm1060, 1.4142135, 0.28284273
        %v1573 = vsel %vm1061, 1.4142135, 0.28284273
        %v1574 = vsel %vm1062, 1.4142135, 0.28284273
        %v1575 = vsel %vm1063, 1.4142135, 0.28284273
        %v1576 = vsel %vm1064, 1.4142135, 0.28284273
        %v1577 = vsel %vm1065, 1.4142135, 0.28284273
        %v1578 = vsel %vm1066, 1.4142135, 0.28284273
        %v1579 = vsel %vm1067, 1.4142135, 0.28284273
        %v1580 = vsel %vm1068, 1.4142135, 0.28284273
        %v1581 = vsel %vm1069, 1.4142135, 0.28284273
        %v1582 = vsel %vm1070, 1.4142135, 0.28284273
        %v1583 = vsel %vm1071, 1.4142135, 0.28284273
        %v1584 = vsel %vm1072, 1.4142135, 0.28284273
        %v1585 = vsel %vm1073, 1.4142135, 0.28284273
        %v1586 = vsel %vm1074, 1.4142135, 0.28284273
        %v1587 = vsel %vm1075, 1.4142135, 0.28284273
        %v1588 = vsel %vm1076, 1.4142135, 0.28284273
        %v1589 = vsel %vm1077, 1.4142135, 0.28284273
        %v1590 = vsel %vm1078, 1.4142135, 0.28284273
        %v1591 = vsel %vm1079, 1.4142135, 0.28284273
        %v1592 = vsel %vm1080, 1.4142135, 0.28284273
        %v1593 = vsel %vm1081, 1.4142135, 0.28284273
        %v1594 = vsel %vm1082, 1.4142135, 0.28284273
        %v1595 = vsel %vm1083, 1.4142135, 0.28284273
        %v1596 = vsel %vm1084, 1.4142135, 0.28284273
        %v1597 = vsel %vm1085, 1.4142135, 0.28284273
        %v1598 = vsel %vm1086, 1.4142135, 0.28284273
        %v1599 = vsel %vm1087, 1.4142135, 0.28284273
        %v1600 = vsel %vm1088, 1.4142135, 0.28284273
        %v1601 = vsel %vm1089, 1.4142135, 0.28284273
        %v1602 = vsel %vm1090, 1.4142135, 0.28284273
        %v1603 = vsel %vm1091, 1.4142135, 0.28284273
        %v1604 = vsel %vm1092, 1.4142135, 0.28284273
        %v1605 = vsel %vm1093, 1.4142135, 0.28284273
        %v1606 = vsel %vm1094, 1.4142135, 0.28284273
        %v1607 = vsel %vm1095, 1.4142135, 0.28284273
        %v1608 = vsel %vm1096, 1.4142135, 0.28284273
        %v1609 = vsel %vm1097, 1.4142135, 0.28284273
        %v1610 = vsel %vm1098, 1.4142135, 0.28284273
        %v1611 = vsel %vm1099, 1.4142135, 0.28284273
        %v1612 = vsel %vm1100, 1.4142135, 0.28284273
        %v1613 = vsel %vm1101, 1.4142135, 0.28284273
        %v1614 = vsel %vm1102, 1.4142135, 0.28284273
        %v1615 = vsel %vm1103, 1.4142135, 0.28284273
        %v1616 = vsel %vm1104, 1.4142135, 0.28284273
        %v1617 = vsel %vm1105, 1.4142135, 0.28284273
        %v1618 = vsel %vm1106, 1.4142135, 0.28284273
        %v1619 = vsel %vm1107, 1.4142135, 0.28284273
        %v1620 = vsel %vm1108, 1.4142135, 0.28284273
        %v1621 = vsel %vm1109, 1.4142135, 0.28284273
        %v1622 = vsel %vm1110, 1.4142135, 0.28284273
        %v1623 = vsel %vm1111, 1.4142135, 0.28284273
        %v1624 = vsel %vm1112, 1.4142135, 0.28284273
        %v1625 = vsel %vm1113, 1.4142135, 0.28284273
        %v1626 = vsel %vm1114, 1.4142135, 0.28284273
        %v1627 = vsel %vm1115, 1.4142135, 0.28284273
        %v1628 = vsel %vm1116, 1.4142135, 0.28284273
        %v1629 = vsel %vm1117, 1.4142135, 0.28284273
        %v1630 = vsel %vm1118, 1.4142135, 0.28284273
        %v1631 = vsel %vm1119, 1.4142135, 0.28284273
        %v1632 = vsel %vm1120, 1.4142135, 0.28284273
        %v1633 = vsel %vm1121, 1.4142135, 0.28284273
        %v1634 = vsel %vm1122, 1.4142135, 0.28284273
        %v1635 = vsel %vm1123, 1.4142135, 0.28284273
        %v1636 = vsel %vm1124, 1.4142135, 0.28284273
        %v1637 = vsel %vm1125, 1.4142135, 0.28284273
        %v1638 = vsel %vm1126, 1.4142135, 0.28284273
        %v1639 = vsel %vm1127, 1.4142135, 0.28284273
        %v1640 = vsel %vm1128, 1.4142135, 0.28284273
        %v1641 = vsel %vm1129, 1.4142135, 0.28284273
        %v1642 = vsel %vm1130, 1.4142135, 0.28284273
        %v1643 = vsel %vm1131, 1.4142135, 0.28284273
        %v1644 = vsel %vm1132, 1.4142135, 0.28284273
        %v1645 = vsel %vm1133, 1.4142135, 0.28284273
        %v1646 = vsel %vm1134, 1.4142135, 0.28284273
        %v1647 = vsel %vm1135, 1.4142135, 0.28284273
        %v1648 = vsel %vm1136, 1.4142135, 0.28284273
        %v1649 = vsel %vm1137, 1.4142135, 0.28284273
        %v1650 = vsel %vm1138, 1.4142135, 0.28284273
        %v1651 = vsel %vm1139, 1.4142135, 0.28284273
        %v1652 = vsel %vm1140, 1.4142135, 0.28284273
        %v1653 = vsel %vm1141, 1.4142135, 0.28284273
        %v1654 = vsel %vm1142, 1.4142135, 0.28284273
        %v1655 = vsel %vm1143, 1.4142135, 0.28284273
        %v1656 = vsel %vm1144, 1.4142135, 0.28284273
        %v1657 = vsel %vm1145, 1.4142135, 0.28284273
        %v1658 = vsel %vm1146, 1.4142135, 0.28284273
        %v1659 = vsel %vm1147, 1.4142135, 0.28284273
        %v1660 = vsel %vm1148, 1.4142135, 0.28284273
        %v1661 = vsel %vm1149, 1.4142135, 0.28284273
        %v1662 = vsel %vm1150, 1.4142135, 0.28284273
        %v1663 = vsel %vm1151, 1.4142135, 0.28284273
        %v1664 = vsel %vm1152, 1.4142135, 0.28284273
        %v1665 = vsel %vm1153, 1.4142135, 0.28284273
        %v1666 = vsel %vm1154, 1.4142135, 0.28284273
        %v1667 = vsel %vm1155, 1.4142135, 0.28284273
        %v1668 = vsel %vm1156, 1.4142135, 0.28284273
        %v1669 = vsel %vm1157, 1.4142135, 0.28284273
        %v1670 = vsel %vm1158, 1.4142135, 0.28284273
        %v1671 = vsel %vm1159, 1.4142135, 0.28284273
        %v1672 = vsel %vm1160, 1.4142135, 0.28284273
        %v1673 = vsel %vm1161, 1.4142135, 0.28284273
        %v1674 = vmul.f32 %v138, %v1162
        %v1675 = vmul.f32 %v139, %v1163
        %v1676 = vmul.f32 %v140, %v1164
        %v1677 = vmul.f32 %v141, %v1165
        %v1678 = vmul.f32 %v142, %v1166
        %v1679 = vmul.f32 %v143, %v1167
        %v1680 = vmul.f32 %v144, %v1168
        %v1681 = vmul.f32 %v145, %v1169
        %v1682 = vmul.f32 %v146, %v1170
        %v1683 = vmul.f32 %v147, %v1171
        %v1684 = vmul.f32 %v148, %v1172
        %v1685 = vmul.f32 %v149, %v1173
        %v1686 = vmul.f32 %v150, %v1174
        %v1687 = vmul.f32 %v151, %v1175
        %v1688 = vmul.f32 %v152, %v1176
        %v1689 = vmul.f32 %v153, %v1177
        %v1690 = vmul.f32 %v154, %v1178
        %v1691 = vmul.f32 %v155, %v1179
        %v1692 = vmul.f32 %v156, %v1180
        %v1693 = vmul.f32 %v157, %v1181
        %v1694 = vmul.f32 %v158, %v1182
        %v1695 = vmul.f32 %v159, %v1183
        %v1696 = vmul.f32 %v160, %v1184
        %v1697 = vmul.f32 %v161, %v1185
        %v1698 = vmul.f32 %v162, %v1186
        %v1699 = vmul.f32 %v163, %v1187
        %v1700 = vmul.f32 %v164, %v1188
        %v1701 = vmul.f32 %v165, %v1189
        %v1702 = vmul.f32 %v166, %v1190
        %v1703 = vmul.f32 %v167, %v1191
        %v1704 = vmul.f32 %v168, %v1192
        %v1705 = vmul.f32 %v169, %v1193
        %v1706 = vmul.f32 %v170, %v1194
        %v1707 = vmul.f32 %v171, %v1195
        %v1708 = vmul.f32 %v172, %v1196
        %v1709 = vmul.f32 %v173, %v1197
        %v1710 = vmul.f32 %v174, %v1198
        %v1711 = vmul.f32 %v175, %v1199
        %v1712 = vmul.f32 %v176, %v1200
        %v1713 = vmul.f32 %v177, %v1201
        %v1714 = vmul.f32 %v178, %v1202
        %v1715 = vmul.f32 %v179, %v1203
        %v1716 = vmul.f32 %v180, %v1204
        %v1717 = vmul.f32 %v181, %v1205
        %v1718 = vmul.f32 %v182, %v1206
        %v1719 = vmul.f32 %v183, %v1207
        %v1720 = vmul.f32 %v184, %v1208
        %v1721 = vmul.f32 %v185, %v1209
        %v1722 = vmul.f32 %v186, %v1210
        %v1723 = vmul.f32 %v187, %v1211
        %v1724 = vmul.f32 %v188, %v1212
        %v1725 = vmul.f32 %v189, %v1213
        %v1726 = vmul.f32 %v190, %v1214
        %v1727 = vmul.f32 %v191, %v1215
        %v1728 = vmul.f32 %v192, %v1216
        %v1729 = vmul.f32 %v193, %v1217
        %v1730 = vmul.f32 %v194, %v1218
        %v1731 = vmul.f32 %v195, %v1219
        %v1732 = vmul.f32 %v196, %v1220
        %v1733 = vmul.f32 %v197, %v1221
        %v1734 = vmul.f32 %v198, %v1222
        %v1735 = vmul.f32 %v199, %v1223
        %v1736 = vmul.f32 %v200, %v1224
        %v1737 = vmul.f32 %v201, %v1225
        %v1738 = vmul.f32 %v202, %v1226
        %v1739 = vmul.f32 %v203, %v1227
        %v1740 = vmul.f32 %v204, %v1228
        %v1741 = vmul.f32 %v205, %v1229
        %v1742 = vmul.f32 %v206, %v1230
        %v1743 = vmul.f32 %v207, %v1231
        %v1744 = vmul.f32 %v208, %v1232
        %v1745 = vmul.f32 %v209, %v1233
        %v1746 = vmul.f32 %v210, %v1234
        %v1747 = vmul.f32 %v211, %v1235
        %v1748 = vmul.f32 %v212, %v1236
        %v1749 = vmul.f32 %v213, %v1237
        %v1750 = vmul.f32 %v214, %v1238
        %v1751 = vmul.f32 %v215, %v1239
        %v1752 = vmul.f32 %v216, %v1240
        %v1753 = vmul.f32 %v217, %v1241
        %v1754 = vmul.f32 %v218, %v1242
        %v1755 = vmul.f32 %v219, %v1243
        %v1756 = vmul.f32 %v220, %v1244
        %v1757 = vmul.f32 %v221, %v1245
        %v1758 = vmul.f32 %v222, %v1246
        %v1759 = vmul.f32 %v223, %v1247
        %v1760 = vmul.f32 %v224, %v1248
        %v1761 = vmul.f32 %v225, %v1249
        %v1762 = vmul.f32 %v226, %v1250
        %v1763 = vmul.f32 %v227, %v1251
        %v1764 = vmul.f32 %v228, %v1252
        %v1765 = vmul.f32 %v229, %v1253
        %v1766 = vmul.f32 %v230, %v1254
        %v1767 = vmul.f32 %v231, %v1255
        %v1768 = vmul.f32 %v232, %v1256
        %v1769 = vmul.f32 %v233, %v1257
        %v1770 = vmul.f32 %v234, %v1258
        %v1771 = vmul.f32 %v235, %v1259
        %v1772 = vmul.f32 %v236, %v1260
        %v1773 = vmul.f32 %v237, %v1261
        %v1774 = vmul.f32 %v238, %v1262
        %v1775 = vmul.f32 %v239, %v1263
        %v1776 = vmul.f32 %v240, %v1264
        %v1777 = vmul.f32 %v241, %v1265
        %v1778 = vmul.f32 %v242, %v1266
        %v1779 = vmul.f32 %v243, %v1267
        %v1780 = vmul.f32 %v244, %v1268
        %v1781 = vmul.f32 %v245, %v1269
        %v1782 = vmul.f32 %v246, %v1270
        %v1783 = vmul.f32 %v247, %v1271
        %v1784 = vmul.f32 %v248, %v1272
        %v1785 = vmul.f32 %v249, %v1273
        %v1786 = vmul.f32 %v250, %v1274
        %v1787 = vmul.f32 %v251, %v1275
        %v1788 = vmul.f32 %v252, %v1276
        %v1789 = vmul.f32 %v253, %v1277
        %v1790 = vmul.f32 %v254, %v1278
        %v1791 = vmul.f32 %v255, %v1279
        %v1792 = vmul.f32 %v256, %v1280
        %v1793 = vmul.f32 %v257, %v1281
        %v1794 = vmul.f32 %v258, %v1282
        %v1795 = vmul.f32 %v259, %v1283
        %v1796 = vmul.f32 %v260, %v1284
        %v1797 = vmul.f32 %v261, %v1285
        %v1798 = vmul.f32 %v262, %v1286
        %v1799 = vmul.f32 %v263, %v1287
        %v1800 = vmul.f32 %v264, %v1288
        %v1801 = vmul.f32 %v265, %v1289
        %v1802 = vmul.f32 %v266, %v1290
        %v1803 = vmul.f32 %v267, %v1291
        %v1804 = vmul.f32 %v268, %v1292
        %v1805 = vmul.f32 %v269, %v1293
        %v1806 = vmul.f32 %v270, %v1294
        %v1807 = vmul.f32 %v271, %v1295
        %v1808 = vmul.f32 %v272, %v1296
        %v1809 = vmul.f32 %v273, %v1297
        %v1810 = vmul.f32 %v274, %v1298
        %v1811 = vmul.f32 %v275, %v1299
        %v1812 = vmul.f32 %v276, %v1300
        %v1813 = vmul.f32 %v277, %v1301
        %v1814 = vmul.f32 %v278, %v1302
        %v1815 = vmul.f32 %v279, %v1303
        %v1816 = vmul.f32 %v280, %v1304
        %v1817 = vmul.f32 %v281, %v1305
        %v1818 = vmul.f32 %v282, %v1306
        %v1819 = vmul.f32 %v283, %v1307
        %v1820 = vmul.f32 %v284, %v1308
        %v1821 = vmul.f32 %v285, %v1309
        %v1822 = vmul.f32 %v286, %v1310
        %v1823 = vmul.f32 %v287, %v1311
        %v1824 = vmul.f32 %v288, %v1312
        %v1825 = vmul.f32 %v289, %v1313
        %v1826 = vmul.f32 %v290, %v1314
        %v1827 = vmul.f32 %v291, %v1315
        %v1828 = vmul.f32 %v292, %v1316
        %v1829 = vmul.f32 %v293, %v1317
        %v1830 = vmul.f32 %v294, %v1318
        %v1831 = vmul.f32 %v295, %v1319
        %v1832 = vmul.f32 %v296, %v1320
        %v1833 = vmul.f32 %v297, %v1321
        %v1834 = vmul.f32 %v298, %v1322
        %v1835 = vmul.f32 %v299, %v1323
        %v1836 = vmul.f32 %v300, %v1324
        %v1837 = vmul.f32 %v301, %v1325
        %v1838 = vmul.f32 %v302, %v1326
        %v1839 = vmul.f32 %v303, %v1327
        %v1840 = vmul.f32 %v304, %v1328
        %v1841 = vmul.f32 %v305, %v1329
        %v1842 = vmul.f32 %v306, %v1330
        %v1843 = vmul.f32 %v307, %v1331
        %v1844 = vmul.f32 %v308, %v1332
        %v1845 = vmul.f32 %v309, %v1333
        %v1846 = vmul.f32 %v310, %v1334
        %v1847 = vmul.f32 %v311, %v1335
        %v1848 = vmul.f32 %v312, %v1336
        %v1849 = vmul.f32 %v313, %v1337
        %v1850 = vmul.f32 %v314, %v1338
        %v1851 = vmul.f32 %v315, %v1339
        %v1852 = vmul.f32 %v316, %v1340
        %v1853 = vmul.f32 %v317, %v1341
        %v1854 = vmul.f32 %v318, %v1342
        %v1855 = vmul.f32 %v319, %v1343
        %v1856 = vmul.f32 %v320, %v1344
        %v1857 = vmul.f32 %v321, %v1345
        %v1858 = vmul.f32 %v322, %v1346
        %v1859 = vmul.f32 %v323, %v1347
        %v1860 = vmul.f32 %v324, %v1348
        %v1861 = vmul.f32 %v325, %v1349
        %v1862 = vmul.f32 %v326, %v1350
        %v1863 = vmul.f32 %v327, %v1351
        %v1864 = vmul.f32 %v328, %v1352
        %v1865 = vmul.f32 %v329, %v1353
        %v1866 = vmul.f32 %v330, %v1354
        %v1867 = vmul.f32 %v331, %v1355
        %v1868 = vmul.f32 %v332, %v1356
        %v1869 = vmul.f32 %v333, %v1357
        %v1870 = vmul.f32 %v334, %v1358
        %v1871 = vmul.f32 %v335, %v1359
        %v1872 = vmul.f32 %v336, %v1360
        %v1873 = vmul.f32 %v337, %v1361
        %v1874 = vmul.f32 %v338, %v1362
        %v1875 = vmul.f32 %v339, %v1363
        %v1876 = vmul.f32 %v340, %v1364
        %v1877 = vmul.f32 %v341, %v1365
        %v1878 = vmul.f32 %v342, %v1366
        %v1879 = vmul.f32 %v343, %v1367
        %v1880 = vmul.f32 %v344, %v1368
        %v1881 = vmul.f32 %v345, %v1369
        %v1882 = vmul.f32 %v346, %v1370
        %v1883 = vmul.f32 %v347, %v1371
        %v1884 = vmul.f32 %v348, %v1372
        %v1885 = vmul.f32 %v349, %v1373
        %v1886 = vmul.f32 %v350, %v1374
        %v1887 = vmul.f32 %v351, %v1375
        %v1888 = vmul.f32 %v352, %v1376
        %v1889 = vmul.f32 %v353, %v1377
        %v1890 = vmul.f32 %v354, %v1378
        %v1891 = vmul.f32 %v355, %v1379
        %v1892 = vmul.f32 %v356, %v1380
        %v1893 = vmul.f32 %v357, %v1381
        %v1894 = vmul.f32 %v358, %v1382
        %v1895 = vmul.f32 %v359, %v1383
        %v1896 = vmul.f32 %v360, %v1384
        %v1897 = vmul.f32 %v361, %v1385
        %v1898 = vmul.f32 %v362, %v1386
        %v1899 = vmul.f32 %v363, %v1387
        %v1900 = vmul.f32 %v364, %v1388
        %v1901 = vmul.f32 %v365, %v1389
        %v1902 = vmul.f32 %v366, %v1390
        %v1903 = vmul.f32 %v367, %v1391
        %v1904 = vmul.f32 %v368, %v1392
        %v1905 = vmul.f32 %v369, %v1393
        %v1906 = vmul.f32 %v370, %v1394
        %v1907 = vmul.f32 %v371, %v1395
        %v1908 = vmul.f32 %v372, %v1396
        %v1909 = vmul.f32 %v373, %v1397
        %v1910 = vmul.f32 %v374, %v1398
        %v1911 = vmul.f32 %v375, %v1399
        %v1912 = vmul.f32 %v376, %v1400
        %v1913 = vmul.f32 %v377, %v1401
        %v1914 = vmul.f32 %v378, %v1402
        %v1915 = vmul.f32 %v379, %v1403
        %v1916 = vmul.f32 %v380, %v1404
        %v1917 = vmul.f32 %v381, %v1405
        %v1918 = vmul.f32 %v382, %v1406
        %v1919 = vmul.f32 %v383, %v1407
        %v1920 = vmul.f32 %v384, %v1408
        %v1921 = vmul.f32 %v385, %v1409
        %v1922 = vmul.f32 %v386, %v1410
        %v1923 = vmul.f32 %v387, %v1411
        %v1924 = vmul.f32 %v388, %v1412
        %v1925 = vmul.f32 %v389, %v1413
        %v1926 = vmul.f32 %v390, %v1414
        %v1927 = vmul.f32 %v391, %v1415
        %v1928 = vmul.f32 %v392, %v1416
        %v1929 = vmul.f32 %v393, %v1417
        %v1930 = vmul.f32 %v394, %v1418
        %v1931 = vmul.f32 %v395, %v1419
        %v1932 = vmul.f32 %v396, %v1420
        %v1933 = vmul.f32 %v397, %v1421
        %v1934 = vmul.f32 %v398, %v1422
        %v1935 = vmul.f32 %v399, %v1423
        %v1936 = vmul.f32 %v400, %v1424
        %v1937 = vmul.f32 %v401, %v1425
        %v1938 = vmul.f32 %v402, %v1426
        %v1939 = vmul.f32 %v403, %v1427
        %v1940 = vmul.f32 %v404, %v1428
        %v1941 = vmul.f32 %v405, %v1429
        %v1942 = vmul.f32 %v406, %v1430
        %v1943 = vmul.f32 %v407, %v1431
        %v1944 = vmul.f32 %v408, %v1432
        %v1945 = vmul.f32 %v409, %v1433
        %v1946 = vmul.f32 %v410, %v1434
        %v1947 = vmul.f32 %v411, %v1435
        %v1948 = vmul.f32 %v412, %v1436
        %v1949 = vmul.f32 %v413, %v1437
        %v1950 = vmul.f32 %v414, %v1438
        %v1951 = vmul.f32 %v415, %v1439
        %v1952 = vmul.f32 %v416, %v1440
        %v1953 = vmul.f32 %v417, %v1441
        %v1954 = vmul.f32 %v418, %v1442
        %v1955 = vmul.f32 %v419, %v1443
        %v1956 = vmul.f32 %v420, %v1444
        %v1957 = vmul.f32 %v421, %v1445
        %v1958 = vmul.f32 %v422, %v1446
        %v1959 = vmul.f32 %v423, %v1447
        %v1960 = vmul.f32 %v424, %v1448
        %v1961 = vmul.f32 %v425, %v1449
        %v1962 = vmul.f32 %v426, %v1450
        %v1963 = vmul.f32 %v427, %v1451
        %v1964 = vmul.f32 %v428, %v1452
        %v1965 = vmul.f32 %v429, %v1453
        %v1966 = vmul.f32 %v430, %v1454
        %v1967 = vmul.f32 %v431, %v1455
        %v1968 = vmul.f32 %v432, %v1456
        %v1969 = vmul.f32 %v433, %v1457
        %v1970 = vmul.f32 %v434, %v1458
        %v1971 = vmul.f32 %v435, %v1459
        %v1972 = vmul.f32 %v436, %v1460
        %v1973 = vmul.f32 %v437, %v1461
        %v1974 = vmul.f32 %v438, %v1462
        %v1975 = vmul.f32 %v439, %v1463
        %v1976 = vmul.f32 %v440, %v1464
        %v1977 = vmul.f32 %v441, %v1465
        %v1978 = vmul.f32 %v442, %v1466
        %v1979 = vmul.f32 %v443, %v1467
        %v1980 = vmul.f32 %v444, %v1468
        %v1981 = vmul.f32 %v445, %v1469
        %v1982 = vmul.f32 %v446, %v1470
        %v1983 = vmul.f32 %v447, %v1471
        %v1984 = vmul.f32 %v448, %v1472
        %v1985 = vmul.f32 %v449, %v1473
        %v1986 = vmul.f32 %v450, %v1474
        %v1987 = vmul.f32 %v451, %v1475
        %v1988 = vmul.f32 %v452, %v1476
        %v1989 = vmul.f32 %v453, %v1477
        %v1990 = vmul.f32 %v454, %v1478
        %v1991 = vmul.f32 %v455, %v1479
        %v1992 = vmul.f32 %v456, %v1480
        %v1993 = vmul.f32 %v457, %v1481
        %v1994 = vmul.f32 %v458, %v1482
        %v1995 = vmul.f32 %v459, %v1483
        %v1996 = vmul.f32 %v460, %v1484
        %v1997 = vmul.f32 %v461, %v1485
        %v1998 = vmul.f32 %v462, %v1486
        %v1999 = vmul.f32 %v463, %v1487
        %v2000 = vmul.f32 %v464, %v1488
        %v2001 = vmul.f32 %v465, %v1489
        %v2002 = vmul.f32 %v466, %v1490
        %v2003 = vmul.f32 %v467, %v1491
        %v2004 = vmul.f32 %v468, %v1492
        %v2005 = vmul.f32 %v469, %v1493
        %v2006 = vmul.f32 %v470, %v1494
        %v2007 = vmul.f32 %v471, %v1495
        %v2008 = vmul.f32 %v472, %v1496
        %v2009 = vmul.f32 %v473, %v1497
        %v2010 = vmul.f32 %v474, %v1498
        %v2011 = vmul.f32 %v475, %v1499
        %v2012 = vmul.f32 %v476, %v1500
        %v2013 = vmul.f32 %v477, %v1501
        %v2014 = vmul.f32 %v478, %v1502
        %v2015 = vmul.f32 %v479, %v1503
        %v2016 = vmul.f32 %v480, %v1504
        %v2017 = vmul.f32 %v481, %v1505
        %v2018 = vmul.f32 %v482, %v1506
        %v2019 = vmul.f32 %v483, %v1507
        %v2020 = vmul.f32 %v484, %v1508
        %v2021 = vmul.f32 %v485, %v1509
        %v2022 = vmul.f32 %v486, %v1510
        %v2023 = vmul.f32 %v487, %v1511
        %v2024 = vmul.f32 %v488, %v1512
        %v2025 = vmul.f32 %v489, %v1513
        %v2026 = vmul.f32 %v490, %v1514
        %v2027 = vmul.f32 %v491, %v1515
        %v2028 = vmul.f32 %v492, %v1516
        %v2029 = vmul.f32 %v493, %v1517
        %v2030 = vmul.f32 %v494, %v1518
        %v2031 = vmul.f32 %v495, %v1519
        %v2032 = vmul.f32 %v496, %v1520
        %v2033 = vmul.f32 %v497, %v1521
        %v2034 = vmul.f32 %v498, %v1522
        %v2035 = vmul.f32 %v499, %v1523
        %v2036 = vmul.f32 %v500, %v1524
        %v2037 = vmul.f32 %v501, %v1525
        %v2038 = vmul.f32 %v502, %v1526
        %v2039 = vmul.f32 %v503, %v1527
        %v2040 = vmul.f32 %v504, %v1528
        %v2041 = vmul.f32 %v505, %v1529
        %v2042 = vmul.f32 %v506, %v1530
        %v2043 = vmul.f32 %v507, %v1531
        %v2044 = vmul.f32 %v508, %v1532
        %v2045 = vmul.f32 %v509, %v1533
        %v2046 = vmul.f32 %v510, %v1534
        %v2047 = vmul.f32 %v511, %v1535
        %v2048 = vmul.f32 %v512, %v1536
        %v2049 = vmul.f32 %v513, %v1537
        %v2050 = vmul.f32 %v514, %v1538
        %v2051 = vmul.f32 %v515, %v1539
        %v2052 = vmul.f32 %v516, %v1540
        %v2053 = vmul.f32 %v517, %v1541
        %v2054 = vmul.f32 %v518, %v1542
        %v2055 = vmul.f32 %v519, %v1543
        %v2056 = vmul.f32 %v520, %v1544
        %v2057 = vmul.f32 %v521, %v1545
        %v2058 = vmul.f32 %v522, %v1546
        %v2059 = vmul.f32 %v523, %v1547
        %v2060 = vmul.f32 %v524, %v1548
        %v2061 = vmul.f32 %v525, %v1549
        %v2062 = vmul.f32 %v526, %v1550
        %v2063 = vmul.f32 %v527, %v1551
        %v2064 = vmul.f32 %v528, %v1552
        %v2065 = vmul.f32 %v529, %v1553
        %v2066 = vmul.f32 %v530, %v1554
        %v2067 = vmul.f32 %v531, %v1555
        %v2068 = vmul.f32 %v532, %v1556
        %v2069 = vmul.f32 %v533, %v1557
        %v2070 = vmul.f32 %v534, %v1558
        %v2071 = vmul.f32 %v535, %v1559
        %v2072 = vmul.f32 %v536, %v1560
        %v2073 = vmul.f32 %v537, %v1561
        %v2074 = vmul.f32 %v538, %v1562
        %v2075 = vmul.f32 %v539, %v1563
        %v2076 = vmul.f32 %v540, %v1564
        %v2077 = vmul.f32 %v541, %v1565
        %v2078 = vmul.f32 %v542, %v1566
        %v2079 = vmul.f32 %v543, %v1567
        %v2080 = vmul.f32 %v544, %v1568
        %v2081 = vmul.f32 %v545, %v1569
        %v2082 = vmul.f32 %v546, %v1570
        %v2083 = vmul.f32 %v547, %v1571
        %v2084 = vmul.f32 %v548, %v1572
        %v2085 = vmul.f32 %v549, %v1573
        %v2086 = vmul.f32 %v550, %v1574
        %v2087 = vmul.f32 %v551, %v1575
        %v2088 = vmul.f32 %v552, %v1576
        %v2089 = vmul.f32 %v553, %v1577
        %v2090 = vmul.f32 %v554, %v1578
        %v2091 = vmul.f32 %v555, %v1579
        %v2092 = vmul.f32 %v556, %v1580
        %v2093 = vmul.f32 %v557, %v1581
        %v2094 = vmul.f32 %v558, %v1582
        %v2095 = vmul.f32 %v559, %v1583
        %v2096 = vmul.f32 %v560, %v1584
        %v2097 = vmul.f32 %v561, %v1585
        %v2098 = vmul.f32 %v562, %v1586
        %v2099 = vmul.f32 %v563, %v1587
        %v2100 = vmul.f32 %v564, %v1588
        %v2101 = vmul.f32 %v565, %v1589
        %v2102 = vmul.f32 %v566, %v1590
        %v2103 = vmul.f32 %v567, %v1591
        %v2104 = vmul.f32 %v568, %v1592
        %v2105 = vmul.f32 %v569, %v1593
        %v2106 = vmul.f32 %v570, %v1594
        %v2107 = vmul.f32 %v571, %v1595
        %v2108 = vmul.f32 %v572, %v1596
        %v2109 = vmul.f32 %v573, %v1597
        %v2110 = vmul.f32 %v574, %v1598
        %v2111 = vmul.f32 %v575, %v1599
        %v2112 = vmul.f32 %v576, %v1600
        %v2113 = vmul.f32 %v577, %v1601
        %v2114 = vmul.f32 %v578, %v1602
        %v2115 = vmul.f32 %v579, %v1603
        %v2116 = vmul.f32 %v580, %v1604
        %v2117 = vmul.f32 %v581, %v1605
        %v2118 = vmul.f32 %v582, %v1606
        %v2119 = vmul.f32 %v583, %v1607
        %v2120 = vmul.f32 %v584, %v1608
        %v2121 = vmul.f32 %v585, %v1609
        %v2122 = vmul.f32 %v586, %v1610
        %v2123 = vmul.f32 %v587, %v1611
        %v2124 = vmul.f32 %v588, %v1612
        %v2125 = vmul.f32 %v589, %v1613
        %v2126 = vmul.f32 %v590, %v1614
        %v2127 = vmul.f32 %v591, %v1615
        %v2128 = vmul.f32 %v592, %v1616
        %v2129 = vmul.f32 %v593, %v1617
        %v2130 = vmul.f32 %v594, %v1618
        %v2131 = vmul.f32 %v595, %v1619
        %v2132 = vmul.f32 %v596, %v1620
        %v2133 = vmul.f32 %v597, %v1621
        %v2134 = vmul.f32 %v598, %v1622
        %v2135 = vmul.f32 %v599, %v1623
        %v2136 = vmul.f32 %v600, %v1624
        %v2137 = vmul.f32 %v601, %v1625
        %v2138 = vmul.f32 %v602, %v1626
        %v2139 = vmul.f32 %v603, %v1627
        %v2140 = vmul.f32 %v604, %v1628
        %v2141 = vmul.f32 %v605, %v1629
        %v2142 = vmul.f32 %v606, %v1630
        %v2143 = vmul.f32 %v607, %v1631
        %v2144 = vmul.f32 %v608, %v1632
        %v2145 = vmul.f32 %v609, %v1633
        %v2146 = vmul.f32 %v610, %v1634
        %v2147 = vmul.f32 %v611, %v1635
        %v2148 = vmul.f32 %v612, %v1636
        %v2149 = vmul.f32 %v613, %v1637
        %v2150 = vmul.f32 %v614, %v1638
        %v2151 = vmul.f32 %v615, %v1639
        %v2152 = vmul.f32 %v616, %v1640
        %v2153 = vmul.f32 %v617, %v1641
        %v2154 = vmul.f32 %v618, %v1642
        %v2155 = vmul.f32 %v619, %v1643
        %v2156 = vmul.f32 %v620, %v1644
        %v2157 = vmul.f32 %v621, %v1645
        %v2158 = vmul.f32 %v622, %v1646
        %v2159 = vmul.f32 %v623, %v1647
        %v2160 = vmul.f32 %v624, %v1648
        %v2161 = vmul.f32 %v625, %v1649
        %v2162 = vmul.f32 %v626, %v1650
        %v2163 = vmul.f32 %v627, %v1651
        %v2164 = vmul.f32 %v628, %v1652
        %v2165 = vmul.f32 %v629, %v1653
        %v2166 = vmul.f32 %v630, %v1654
        %v2167 = vmul.f32 %v631, %v1655
        %v2168 = vmul.f32 %v632, %v1656
        %v2169 = vmul.f32 %v633, %v1657
        %v2170 = vmul.f32 %v634, %v1658
        %v2171 = vmul.f32 %v635, %v1659
        %v2172 = vmul.f32 %v636, %v1660
        %v2173 = vmul.f32 %v637, %v1661
        %v2174 = vmul.f32 %v638, %v1662
        %v2175 = vmul.f32 %v639, %v1663
        %v2176 = vmul.f32 %v640, %v1664
        %v2177 = vmul.f32 %v641, %v1665
        %v2178 = vmul.f32 %v642, %v1666
        %v2179 = vmul.f32 %v643, %v1667
        %v2180 = vmul.f32 %v644, %v1668
        %v2181 = vmul.f32 %v645, %v1669
        %v2182 = vmul.f32 %v646, %v1670
        %v2183 = vmul.f32 %v647, %v1671
        %v2184 = vmul.f32 %v648, %v1672
        %v2185 = vmul.f32 %v649, %v1673
        %2186 = vst [vmem:[%s135] sm:$0xff] %v1674
        %2187 = vst [vmem:[%s135 + $0x8] sm:$0xff] %v1675
        %2188 = vst [vmem:[%s135 + $0x10] sm:$0xff] %v1676
        %2189 = vst [vmem:[%s135 + $0x18] sm:$0xff] %v1677
        %2190 = vst [vmem:[%s135 + $0x20] sm:$0xff] %v1678
        %2191 = vst [vmem:[%s135 + $0x28] sm:$0xff] %v1679
        %2192 = vst [vmem:[%s135 + $0x30] sm:$0xff] %v1680
        %2193 = vst [vmem:[%s135 + $0x38] sm:$0xff] %v1681
        %2194 = vst [vmem:[%s135 + $0x40] sm:$0xff] %v1682
        %2195 = vst [vmem:[%s135 + $0x48] sm:$0xff] %v1683
        %2196 = vst [vmem:[%s135 + $0x50] sm:$0xff] %v1684
        %2197 = vst [vmem:[%s135 + $0x58] sm:$0xff] %v1685
        %2198 = vst [vmem:[%s135 + $0x60] sm:$0xff] %v1686
        %2199 = vst [vmem:[%s135 + $0x68] sm:$0xff] %v1687
        %2200 = vst [vmem:[%s135 + $0x70] sm:$0xff] %v1688
        %2201 = vst [vmem:[%s135 + $0x78] sm:$0xff] %v1689
        %2202 = vst [vmem:[%s135 + $0x80] sm:$0xff] %v1690
        %2203 = vst [vmem:[%s135 + $0x88] sm:$0xff] %v1691
        %2204 = vst [vmem:[%s135 + $0x90] sm:$0xff] %v1692
        %2205 = vst [vmem:[%s135 + $0x98] sm:$0xff] %v1693
        %2206 = vst [vmem:[%s135 + $0xa0] sm:$0xff] %v1694
        %2207 = vst [vmem:[%s135 + $0xa8] sm:$0xff] %v1695
        %2208 = vst [vmem:[%s135 + $0xb0] sm:$0xff] %v1696
        %2209 = vst [vmem:[%s135 + $0xb8] sm:$0xff] %v1697
        %2210 = vst [vmem:[%s135 + $0xc0] sm:$0xff] %v1698
        %2211 = vst [vmem:[%s135 + $0xc8] sm:$0xff] %v1699
        %2212 = vst [vmem:[%s135 + $0xd0] sm:$0xff] %v1700
        %2213 = vst [vmem:[%s135 + $0xd8] sm:$0xff] %v1701
        %2214 = vst [vmem:[%s135 + $0xe0] sm:$0xff] %v1702
        %2215 = vst [vmem:[%s135 + $0xe8] sm:$0xff] %v1703
        %2216 = vst [vmem:[%s135 + $0xf0] sm:$0xff] %v1704
        %2217 = vst [vmem:[%s135 + $0xf8] sm:$0xff] %v1705
        %2218 = vst [vmem:[%s135 + $0x100] sm:$0xff] %v1706
        %2219 = vst [vmem:[%s135 + $0x108] sm:$0xff] %v1707
        %2220 = vst [vmem:[%s135 + $0x110] sm:$0xff] %v1708
        %2221 = vst [vmem:[%s135 + $0x118] sm:$0xff] %v1709
        %2222 = vst [vmem:[%s135 + $0x120] sm:$0xff] %v1710
        %2223 = vst [vmem:[%s135 + $0x128] sm:$0xff] %v1711
        %2224 = vst [vmem:[%s135 + $0x130] sm:$0xff] %v1712
        %2225 = vst [vmem:[%s135 + $0x138] sm:$0xff] %v1713
        %2226 = vst [vmem:[%s135 + $0x140] sm:$0xff] %v1714
        %2227 = vst [vmem:[%s135 + $0x148] sm:$0xff] %v1715
        %2228 = vst [vmem:[%s135 + $0x150] sm:$0xff] %v1716
        %2229 = vst [vmem:[%s135 + $0x158] sm:$0xff] %v1717
        %2230 = vst [vmem:[%s135 + $0x160] sm:$0xff] %v1718
        %2231 = vst [vmem:[%s135 + $0x168] sm:$0xff] %v1719
        %2232 = vst [vmem:[%s135 + $0x170] sm:$0xff] %v1720
        %2233 = vst [vmem:[%s135 + $0x178] sm:$0xff] %v1721
        %2234 = vst [vmem:[%s135 + $0x180] sm:$0xff] %v1722
        %2235 = vst [vmem:[%s135 + $0x188] sm:$0xff] %v1723
        %2236 = vst [vmem:[%s135 + $0x190] sm:$0xff] %v1724
        %2237 = vst [vmem:[%s135 + $0x198] sm:$0xff] %v1725
        %2238 = vst [vmem:[%s135 + $0x1a0] sm:$0xff] %v1726
        %2239 = vst [vmem:[%s135 + $0x1a8] sm:$0xff] %v1727
        %2240 = vst [vmem:[%s135 + $0x1b0] sm:$0xff] %v1728
        %2241 = vst [vmem:[%s135 + $0x1b8] sm:$0xff] %v1729
        %2242 = vst [vmem:[%s135 + $0x1c0] sm:$0xff] %v1730
        %2243 = vst [vmem:[%s135 + $0x1c8] sm:$0xff] %v1731
        %2244 = vst [vmem:[%s135 + $0x1d0] sm:$0xff] %v1732
        %2245 = vst [vmem:[%s135 + $0x1d8] sm:$0xff] %v1733
        %2246 = vst [vmem:[%s135 + $0x1e0] sm:$0xff] %v1734
        %2247 = vst [vmem:[%s135 + $0x1e8] sm:$0xff] %v1735
        %2248 = vst [vmem:[%s135 + $0x1f0] sm:$0xff] %v1736
        %2249 = vst [vmem:[%s135 + $0x1f8] sm:$0xff] %v1737
        %2250 = vst [vmem:[%s135 + $0x200] sm:$0xff] %v1738
        %2251 = vst [vmem:[%s135 + $0x208] sm:$0xff] %v1739
        %2252 = vst [vmem:[%s135 + $0x210] sm:$0xff] %v1740
        %2253 = vst [vmem:[%s135 + $0x218] sm:$0xff] %v1741
        %2254 = vst [vmem:[%s135 + $0x220] sm:$0xff] %v1742
        %2255 = vst [vmem:[%s135 + $0x228] sm:$0xff] %v1743
        %2256 = vst [vmem:[%s135 + $0x230] sm:$0xff] %v1744
        %2257 = vst [vmem:[%s135 + $0x238] sm:$0xff] %v1745
        %2258 = vst [vmem:[%s135 + $0x240] sm:$0xff] %v1746
        %2259 = vst [vmem:[%s135 + $0x248] sm:$0xff] %v1747
        %2260 = vst [vmem:[%s135 + $0x250] sm:$0xff] %v1748
        %2261 = vst [vmem:[%s135 + $0x258] sm:$0xff] %v1749
        %2262 = vst [vmem:[%s135 + $0x260] sm:$0xff] %v1750
        %2263 = vst [vmem:[%s135 + $0x268] sm:$0xff] %v1751
        %2264 = vst [vmem:[%s135 + $0x270] sm:$0xff] %v1752
        %2265 = vst [vmem:[%s135 + $0x278] sm:$0xff] %v1753
        %2266 = vst [vmem:[%s135 + $0x280] sm:$0xff] %v1754
        %2267 = vst [vmem:[%s135 + $0x288] sm:$0xff] %v1755
        %2268 = vst [vmem:[%s135 + $0x290] sm:$0xff] %v1756
        %2269 = vst [vmem:[%s135 + $0x298] sm:$0xff] %v1757
        %2270 = vst [vmem:[%s135 + $0x2a0] sm:$0xff] %v1758
        %2271 = vst [vmem:[%s135 + $0x2a8] sm:$0xff] %v1759
        %2272 = vst [vmem:[%s135 + $0x2b0] sm:$0xff] %v1760
        %2273 = vst [vmem:[%s135 + $0x2b8] sm:$0xff] %v1761
        %2274 = vst [vmem:[%s135 + $0x2c0] sm:$0xff] %v1762
        %2275 = vst [vmem:[%s135 + $0x2c8] sm:$0xff] %v1763
        %2276 = vst [vmem:[%s135 + $0x2d0] sm:$0xff] %v1764
        %2277 = vst [vmem:[%s135 + $0x2d8] sm:$0xff] %v1765
        %2278 = vst [vmem:[%s135 + $0x2e0] sm:$0xff] %v1766
        %2279 = vst [vmem:[%s135 + $0x2e8] sm:$0xff] %v1767
        %2280 = vst [vmem:[%s135 + $0x2f0] sm:$0xff] %v1768
        %2281 = vst [vmem:[%s135 + $0x2f8] sm:$0xff] %v1769
        %2282 = vst [vmem:[%s135 + $0x300] sm:$0xff] %v1770
        %2283 = vst [vmem:[%s135 + $0x308] sm:$0xff] %v1771
        %2284 = vst [vmem:[%s135 + $0x310] sm:$0xff] %v1772
        %2285 = vst [vmem:[%s135 + $0x318] sm:$0xff] %v1773
        %2286 = vst [vmem:[%s135 + $0x320] sm:$0xff] %v1774
        %2287 = vst [vmem:[%s135 + $0x328] sm:$0xff] %v1775
        %2288 = vst [vmem:[%s135 + $0x330] sm:$0xff] %v1776
        %2289 = vst [vmem:[%s135 + $0x338] sm:$0xff] %v1777
        %2290 = vst [vmem:[%s135 + $0x340] sm:$0xff] %v1778
        %2291 = vst [vmem:[%s135 + $0x348] sm:$0xff] %v1779
        %2292 = vst [vmem:[%s135 + $0x350] sm:$0xff] %v1780
        %2293 = vst [vmem:[%s135 + $0x358] sm:$0xff] %v1781
        %2294 = vst [vmem:[%s135 + $0x360] sm:$0xff] %v1782
        %2295 = vst [vmem:[%s135 + $0x368] sm:$0xff] %v1783
        %2296 = vst [vmem:[%s135 + $0x370] sm:$0xff] %v1784
        %2297 = vst [vmem:[%s135 + $0x378] sm:$0xff] %v1785
        %2298 = vst [vmem:[%s135 + $0x380] sm:$0xff] %v1786
        %2299 = vst [vmem:[%s135 + $0x388] sm:$0xff] %v1787
        %2300 = vst [vmem:[%s135 + $0x390] sm:$0xff] %v1788
        %2301 = vst [vmem:[%s135 + $0x398] sm:$0xff] %v1789
        %2302 = vst [vmem:[%s135 + $0x3a0] sm:$0xff] %v1790
        %2303 = vst [vmem:[%s135 + $0x3a8] sm:$0xff] %v1791
        %2304 = vst [vmem:[%s135 + $0x3b0] sm:$0xff] %v1792
        %2305 = vst [vmem:[%s135 + $0x3b8] sm:$0xff] %v1793
        %2306 = vst [vmem:[%s135 + $0x3c0] sm:$0xff] %v1794
        %2307 = vst [vmem:[%s135 + $0x3c8] sm:$0xff] %v1795
        %2308 = vst [vmem:[%s135 + $0x3d0] sm:$0xff] %v1796
        %2309 = vst [vmem:[%s135 + $0x3d8] sm:$0xff] %v1797
        %2310 = vst [vmem:[%s135 + $0x3e0] sm:$0xff] %v1798
        %2311 = vst [vmem:[%s135 + $0x3e8] sm:$0xff] %v1799
        %2312 = vst [vmem:[%s135 + $0x3f0] sm:$0xff] %v1800
        %2313 = vst [vmem:[%s135 + $0x3f8] sm:$0xff] %v1801
        %2314 = vst [vmem:[%s135 + $0x400] sm:$0xff] %v1802
        %2315 = vst [vmem:[%s135 + $0x408] sm:$0xff] %v1803
        %2316 = vst [vmem:[%s135 + $0x410] sm:$0xff] %v1804
        %2317 = vst [vmem:[%s135 + $0x418] sm:$0xff] %v1805
        %2318 = vst [vmem:[%s135 + $0x420] sm:$0xff] %v1806
        %2319 = vst [vmem:[%s135 + $0x428] sm:$0xff] %v1807
        %2320 = vst [vmem:[%s135 + $0x430] sm:$0xff] %v1808
        %2321 = vst [vmem:[%s135 + $0x438] sm:$0xff] %v1809
        %2322 = vst [vmem:[%s135 + $0x440] sm:$0xff] %v1810
        %2323 = vst [vmem:[%s135 + $0x448] sm:$0xff] %v1811
        %2324 = vst [vmem:[%s135 + $0x450] sm:$0xff] %v1812
        %2325 = vst [vmem:[%s135 + $0x458] sm:$0xff] %v1813
        %2326 = vst [vmem:[%s135 + $0x460] sm:$0xff] %v1814
        %2327 = vst [vmem:[%s135 + $0x468] sm:$0xff] %v1815
        %2328 = vst [vmem:[%s135 + $0x470] sm:$0xff] %v1816
        %2329 = vst [vmem:[%s135 + $0x478] sm:$0xff] %v1817
        %2330 = vst [vmem:[%s135 + $0x480] sm:$0xff] %v1818
        %2331 = vst [vmem:[%s135 + $0x488] sm:$0xff] %v1819
        %2332 = vst [vmem:[%s135 + $0x490] sm:$0xff] %v1820
        %2333 = vst [vmem:[%s135 + $0x498] sm:$0xff] %v1821
        %2334 = vst [vmem:[%s135 + $0x4a0] sm:$0xff] %v1822
        %2335 = vst [vmem:[%s135 + $0x4a8] sm:$0xff] %v1823
        %2336 = vst [vmem:[%s135 + $0x4b0] sm:$0xff] %v1824
        %2337 = vst [vmem:[%s135 + $0x4b8] sm:$0xff] %v1825
        %2338 = vst [vmem:[%s135 + $0x4c0] sm:$0xff] %v1826
        %2339 = vst [vmem:[%s135 + $0x4c8] sm:$0xff] %v1827
        %2340 = vst [vmem:[%s135 + $0x4d0] sm:$0xff] %v1828
        %2341 = vst [vmem:[%s135 + $0x4d8] sm:$0xff] %v1829
        %2342 = vst [vmem:[%s135 + $0x4e0] sm:$0xff] %v1830
        %2343 = vst [vmem:[%s135 + $0x4e8] sm:$0xff] %v1831
        %2344 = vst [vmem:[%s135 + $0x4f0] sm:$0xff] %v1832
        %2345 = vst [vmem:[%s135 + $0x4f8] sm:$0xff] %v1833
        %2346 = vst [vmem:[%s135 + $0x500] sm:$0xff] %v1834
        %2347 = vst [vmem:[%s135 + $0x508] sm:$0xff] %v1835
        %2348 = vst [vmem:[%s135 + $0x510] sm:$0xff] %v1836
        %2349 = vst [vmem:[%s135 + $0x518] sm:$0xff] %v1837
        %2350 = vst [vmem:[%s135 + $0x520] sm:$0xff] %v1838
        %2351 = vst [vmem:[%s135 + $0x528] sm:$0xff] %v1839
        %2352 = vst [vmem:[%s135 + $0x530] sm:$0xff] %v1840
        %2353 = vst [vmem:[%s135 + $0x538] sm:$0xff] %v1841
        %2354 = vst [vmem:[%s135 + $0x540] sm:$0xff] %v1842
        %2355 = vst [vmem:[%s135 + $0x548] sm:$0xff] %v1843
        %2356 = vst [vmem:[%s135 + $0x550] sm:$0xff] %v1844
        %2357 = vst [vmem:[%s135 + $0x558] sm:$0xff] %v1845
        %2358 = vst [vmem:[%s135 + $0x560] sm:$0xff] %v1846
        %2359 = vst [vmem:[%s135 + $0x568] sm:$0xff] %v1847
        %2360 = vst [vmem:[%s135 + $0x570] sm:$0xff] %v1848
        %2361 = vst [vmem:[%s135 + $0x578] sm:$0xff] %v1849
        %2362 = vst [vmem:[%s135 + $0x580] sm:$0xff] %v1850
        %2363 = vst [vmem:[%s135 + $0x588] sm:$0xff] %v1851
        %2364 = vst [vmem:[%s135 + $0x590] sm:$0xff] %v1852
        %2365 = vst [vmem:[%s135 + $0x598] sm:$0xff] %v1853
        %2366 = vst [vmem:[%s135 + $0x5a0] sm:$0xff] %v1854
        %2367 = vst [vmem:[%s135 + $0x5a8] sm:$0xff] %v1855
        %2368 = vst [vmem:[%s135 + $0x5b0] sm:$0xff] %v1856
        %2369 = vst [vmem:[%s135 + $0x5b8] sm:$0xff] %v1857
        %2370 = vst [vmem:[%s135 + $0x5c0] sm:$0xff] %v1858
        %2371 = vst [vmem:[%s135 + $0x5c8] sm:$0xff] %v1859
        %2372 = vst [vmem:[%s135 + $0x5d0] sm:$0xff] %v1860
        %2373 = vst [vmem:[%s135 + $0x5d8] sm:$0xff] %v1861
        %2374 = vst [vmem:[%s135 + $0x5e0] sm:$0xff] %v1862
        %2375 = vst [vmem:[%s135 + $0x5e8] sm:$0xff] %v1863
        %2376 = vst [vmem:[%s135 + $0x5f0] sm:$0xff] %v1864
        %2377 = vst [vmem:[%s135 + $0x5f8] sm:$0xff] %v1865
        %2378 = vst [vmem:[%s135 + $0x600] sm:$0xff] %v1866
        %2379 = vst [vmem:[%s135 + $0x608] sm:$0xff] %v1867
        %2380 = vst [vmem:[%s135 + $0x610] sm:$0xff] %v1868
        %2381 = vst [vmem:[%s135 + $0x618] sm:$0xff] %v1869
        %2382 = vst [vmem:[%s135 + $0x620] sm:$0xff] %v1870
        %2383 = vst [vmem:[%s135 + $0x628] sm:$0xff] %v1871
        %2384 = vst [vmem:[%s135 + $0x630] sm:$0xff] %v1872
        %2385 = vst [vmem:[%s135 + $0x638] sm:$0xff] %v1873
        %2386 = vst [vmem:[%s135 + $0x640] sm:$0xff] %v1874
        %2387 = vst [vmem:[%s135 + $0x648] sm:$0xff] %v1875
        %2388 = vst [vmem:[%s135 + $0x650] sm:$0xff] %v1876
        %2389 = vst [vmem:[%s135 + $0x658] sm:$0xff] %v1877
        %2390 = vst [vmem:[%s135 + $0x660] sm:$0xff] %v1878
        %2391 = vst [vmem:[%s135 + $0x668] sm:$0xff] %v1879
        %2392 = vst [vmem:[%s135 + $0x670] sm:$0xff] %v1880
        %2393 = vst [vmem:[%s135 + $0x678] sm:$0xff] %v1881
        %2394 = vst [vmem:[%s135 + $0x680] sm:$0xff] %v1882
        %2395 = vst [vmem:[%s135 + $0x688] sm:$0xff] %v1883
        %2396 = vst [vmem:[%s135 + $0x690] sm:$0xff] %v1884
        %2397 = vst [vmem:[%s135 + $0x698] sm:$0xff] %v1885
        %2398 = vst [vmem:[%s135 + $0x6a0] sm:$0xff] %v1886
        %2399 = vst [vmem:[%s135 + $0x6a8] sm:$0xff] %v1887
        %2400 = vst [vmem:[%s135 + $0x6b0] sm:$0xff] %v1888
        %2401 = vst [vmem:[%s135 + $0x6b8] sm:$0xff] %v1889
        %2402 = vst [vmem:[%s135 + $0x6c0] sm:$0xff] %v1890
        %2403 = vst [vmem:[%s135 + $0x6c8] sm:$0xff] %v1891
        %2404 = vst [vmem:[%s135 + $0x6d0] sm:$0xff] %v1892
        %2405 = vst [vmem:[%s135 + $0x6d8] sm:$0xff] %v1893
        %2406 = vst [vmem:[%s135 + $0x6e0] sm:$0xff] %v1894
        %2407 = vst [vmem:[%s135 + $0x6e8] sm:$0xff] %v1895
        %2408 = vst [vmem:[%s135 + $0x6f0] sm:$0xff] %v1896
        %2409 = vst [vmem:[%s135 + $0x6f8] sm:$0xff] %v1897
        %2410 = vst [vmem:[%s135 + $0x700] sm:$0xff] %v1898
        %2411 = vst [vmem:[%s135 + $0x708] sm:$0xff] %v1899
        %2412 = vst [vmem:[%s135 + $0x710] sm:$0xff] %v1900
        %2413 = vst [vmem:[%s135 + $0x718] sm:$0xff] %v1901
        %2414 = vst [vmem:[%s135 + $0x720] sm:$0xff] %v1902
        %2415 = vst [vmem:[%s135 + $0x728] sm:$0xff] %v1903
        %2416 = vst [vmem:[%s135 + $0x730] sm:$0xff] %v1904
        %2417 = vst [vmem:[%s135 + $0x738] sm:$0xff] %v1905
        %2418 = vst [vmem:[%s135 + $0x740] sm:$0xff] %v1906
        %2419 = vst [vmem:[%s135 + $0x748] sm:$0xff] %v1907
        %2420 = vst [vmem:[%s135 + $0x750] sm:$0xff] %v1908
        %2421 = vst [vmem:[%s135 + $0x758] sm:$0xff] %v1909
        %2422 = vst [vmem:[%s135 + $0x760] sm:$0xff] %v1910
        %2423 = vst [vmem:[%s135 + $0x768] sm:$0xff] %v1911
        %2424 = vst [vmem:[%s135 + $0x770] sm:$0xff] %v1912
        %2425 = vst [vmem:[%s135 + $0x778] sm:$0xff] %v1913
        %2426 = vst [vmem:[%s135 + $0x780] sm:$0xff] %v1914
        %2427 = vst [vmem:[%s135 + $0x788] sm:$0xff] %v1915
        %2428 = vst [vmem:[%s135 + $0x790] sm:$0xff] %v1916
        %2429 = vst [vmem:[%s135 + $0x798] sm:$0xff] %v1917
        %2430 = vst [vmem:[%s135 + $0x7a0] sm:$0xff] %v1918
        %2431 = vst [vmem:[%s135 + $0x7a8] sm:$0xff] %v1919
        %2432 = vst [vmem:[%s135 + $0x7b0] sm:$0xff] %v1920
        %2433 = vst [vmem:[%s135 + $0x7b8] sm:$0xff] %v1921
        %2434 = vst [vmem:[%s135 + $0x7c0] sm:$0xff] %v1922
        %2435 = vst [vmem:[%s135 + $0x7c8] sm:$0xff] %v1923
        %2436 = vst [vmem:[%s135 + $0x7d0] sm:$0xff] %v1924
        %2437 = vst [vmem:[%s135 + $0x7d8] sm:$0xff] %v1925
        %2438 = vst [vmem:[%s135 + $0x7e0] sm:$0xff] %v1926
        %2439 = vst [vmem:[%s135 + $0x7e8] sm:$0xff] %v1927
        %2440 = vst [vmem:[%s135 + $0x7f0] sm:$0xff] %v1928
        %2441 = vst [vmem:[%s135 + $0x7f8] sm:$0xff] %v1929
        %2442 = vst [vmem:[%s135 + $0x800] sm:$0xff] %v1930
        %2443 = vst [vmem:[%s135 + $0x808] sm:$0xff] %v1931
        %2444 = vst [vmem:[%s135 + $0x810] sm:$0xff] %v1932
        %2445 = vst [vmem:[%s135 + $0x818] sm:$0xff] %v1933
        %2446 = vst [vmem:[%s135 + $0x820] sm:$0xff] %v1934
        %2447 = vst [vmem:[%s135 + $0x828] sm:$0xff] %v1935
        %2448 = vst [vmem:[%s135 + $0x830] sm:$0xff] %v1936
        %2449 = vst [vmem:[%s135 + $0x838] sm:$0xff] %v1937
        %2450 = vst [vmem:[%s135 + $0x840] sm:$0xff] %v1938
        %2451 = vst [vmem:[%s135 + $0x848] sm:$0xff] %v1939
        %2452 = vst [vmem:[%s135 + $0x850] sm:$0xff] %v1940
        %2453 = vst [vmem:[%s135 + $0x858] sm:$0xff] %v1941
        %2454 = vst [vmem:[%s135 + $0x860] sm:$0xff] %v1942
        %2455 = vst [vmem:[%s135 + $0x868] sm:$0xff] %v1943
        %2456 = vst [vmem:[%s135 + $0x870] sm:$0xff] %v1944
        %2457 = vst [vmem:[%s135 + $0x878] sm:$0xff] %v1945
        %2458 = vst [vmem:[%s135 + $0x880] sm:$0xff] %v1946
        %2459 = vst [vmem:[%s135 + $0x888] sm:$0xff] %v1947
        %2460 = vst [vmem:[%s135 + $0x890] sm:$0xff] %v1948
        %2461 = vst [vmem:[%s135 + $0x898] sm:$0xff] %v1949
        %2462 = vst [vmem:[%s135 + $0x8a0] sm:$0xff] %v1950
        %2463 = vst [vmem:[%s135 + $0x8a8] sm:$0xff] %v1951
        %2464 = vst [vmem:[%s135 + $0x8b0] sm:$0xff] %v1952
        %2465 = vst [vmem:[%s135 + $0x8b8] sm:$0xff] %v1953
        %2466 = vst [vmem:[%s135 + $0x8c0] sm:$0xff] %v1954
        %2467 = vst [vmem:[%s135 + $0x8c8] sm:$0xff] %v1955
        %2468 = vst [vmem:[%s135 + $0x8d0] sm:$0xff] %v1956
        %2469 = vst [vmem:[%s135 + $0x8d8] sm:$0xff] %v1957
        %2470 = vst [vmem:[%s135 + $0x8e0] sm:$0xff] %v1958
        %2471 = vst [vmem:[%s135 + $0x8e8] sm:$0xff] %v1959
        %2472 = vst [vmem:[%s135 + $0x8f0] sm:$0xff] %v1960
        %2473 = vst [vmem:[%s135 + $0x8f8] sm:$0xff] %v1961
        %2474 = vst [vmem:[%s135 + $0x900] sm:$0xff] %v1962
        %2475 = vst [vmem:[%s135 + $0x908] sm:$0xff] %v1963
        %2476 = vst [vmem:[%s135 + $0x910] sm:$0xff] %v1964
        %2477 = vst [vmem:[%s135 + $0x918] sm:$0xff] %v1965
        %2478 = vst [vmem:[%s135 + $0x920] sm:$0xff] %v1966
        %2479 = vst [vmem:[%s135 + $0x928] sm:$0xff] %v1967
        %2480 = vst [vmem:[%s135 + $0x930] sm:$0xff] %v1968
        %2481 = vst [vmem:[%s135 + $0x938] sm:$0xff] %v1969
        %2482 = vst [vmem:[%s135 + $0x940] sm:$0xff] %v1970
        %2483 = vst [vmem:[%s135 + $0x948] sm:$0xff] %v1971
        %2484 = vst [vmem:[%s135 + $0x950] sm:$0xff] %v1972
        %2485 = vst [vmem:[%s135 + $0x958] sm:$0xff] %v1973
        %2486 = vst [vmem:[%s135 + $0x960] sm:$0xff] %v1974
        %2487 = vst [vmem:[%s135 + $0x968] sm:$0xff] %v1975
        %2488 = vst [vmem:[%s135 + $0x970] sm:$0xff] %v1976
        %2489 = vst [vmem:[%s135 + $0x978] sm:$0xff] %v1977
        %2490 = vst [vmem:[%s135 + $0x980] sm:$0xff] %v1978
        %2491 = vst [vmem:[%s135 + $0x988] sm:$0xff] %v1979
        %2492 = vst [vmem:[%s135 + $0x990] sm:$0xff] %v1980
        %2493 = vst [vmem:[%s135 + $0x998] sm:$0xff] %v1981
        %2494 = vst [vmem:[%s135 + $0x9a0] sm:$0xff] %v1982
        %2495 = vst [vmem:[%s135 + $0x9a8] sm:$0xff] %v1983
        %2496 = vst [vmem:[%s135 + $0x9b0] sm:$0xff] %v1984
        %2497 = vst [vmem:[%s135 + $0x9b8] sm:$0xff] %v1985
        %2498 = vst [vmem:[%s135 + $0x9c0] sm:$0xff] %v1986
        %2499 = vst [vmem:[%s135 + $0x9c8] sm:$0xff] %v1987
        %2500 = vst [vmem:[%s135 + $0x9d0] sm:$0xff] %v1988
        %2501 = vst [vmem:[%s135 + $0x9d8] sm:$0xff] %v1989
        %2502 = vst [vmem:[%s135 + $0x9e0] sm:$0xff] %v1990
        %2503 = vst [vmem:[%s135 + $0x9e8] sm:$0xff] %v1991
        %2504 = vst [vmem:[%s135 + $0x9f0] sm:$0xff] %v1992
        %2505 = vst [vmem:[%s135 + $0x9f8] sm:$0xff] %v1993
        %2506 = vst [vmem:[%s135 + $0xa00] sm:$0xff] %v1994
        %2507 = vst [vmem:[%s135 + $0xa08] sm:$0xff] %v1995
        %2508 = vst [vmem:[%s135 + $0xa10] sm:$0xff] %v1996
        %2509 = vst [vmem:[%s135 + $0xa18] sm:$0xff] %v1997
        %2510 = vst [vmem:[%s135 + $0xa20] sm:$0xff] %v1998
        %2511 = vst [vmem:[%s135 + $0xa28] sm:$0xff] %v1999
        %2512 = vst [vmem:[%s135 + $0xa30] sm:$0xff] %v2000
        %2513 = vst [vmem:[%s135 + $0xa38] sm:$0xff] %v2001
        %2514 = vst [vmem:[%s135 + $0xa40] sm:$0xff] %v2002
        %2515 = vst [vmem:[%s135 + $0xa48] sm:$0xff] %v2003
        %2516 = vst [vmem:[%s135 + $0xa50] sm:$0xff] %v2004
        %2517 = vst [vmem:[%s135 + $0xa58] sm:$0xff] %v2005
        %2518 = vst [vmem:[%s135 + $0xa60] sm:$0xff] %v2006
        %2519 = vst [vmem:[%s135 + $0xa68] sm:$0xff] %v2007
        %2520 = vst [vmem:[%s135 + $0xa70] sm:$0xff] %v2008
        %2521 = vst [vmem:[%s135 + $0xa78] sm:$0xff] %v2009
        %2522 = vst [vmem:[%s135 + $0xa80] sm:$0xff] %v2010
        %2523 = vst [vmem:[%s135 + $0xa88] sm:$0xff] %v2011
        %2524 = vst [vmem:[%s135 + $0xa90] sm:$0xff] %v2012
        %2525 = vst [vmem:[%s135 + $0xa98] sm:$0xff] %v2013
        %2526 = vst [vmem:[%s135 + $0xaa0] sm:$0xff] %v2014
        %2527 = vst [vmem:[%s135 + $0xaa8] sm:$0xff] %v2015
        %2528 = vst [vmem:[%s135 + $0xab0] sm:$0xff] %v2016
        %2529 = vst [vmem:[%s135 + $0xab8] sm:$0xff] %v2017
        %2530 = vst [vmem:[%s135 + $0xac0] sm:$0xff] %v2018
        %2531 = vst [vmem:[%s135 + $0xac8] sm:$0xff] %v2019
        %2532 = vst [vmem:[%s135 + $0xad0] sm:$0xff] %v2020
        %2533 = vst [vmem:[%s135 + $0xad8] sm:$0xff] %v2021
        %2534 = vst [vmem:[%s135 + $0xae0] sm:$0xff] %v2022
        %2535 = vst [vmem:[%s135 + $0xae8] sm:$0xff] %v2023
        %2536 = vst [vmem:[%s135 + $0xaf0] sm:$0xff] %v2024
        %2537 = vst [vmem:[%s135 + $0xaf8] sm:$0xff] %v2025
        %2538 = vst [vmem:[%s135 + $0xb00] sm:$0xff] %v2026
        %2539 = vst [vmem:[%s135 + $0xb08] sm:$0xff] %v2027
        %2540 = vst [vmem:[%s135 + $0xb10] sm:$0xff] %v2028
        %2541 = vst [vmem:[%s135 + $0xb18] sm:$0xff] %v2029
        %2542 = vst [vmem:[%s135 + $0xb20] sm:$0xff] %v2030
        %2543 = vst [vmem:[%s135 + $0xb28] sm:$0xff] %v2031
        %2544 = vst [vmem:[%s135 + $0xb30] sm:$0xff] %v2032
        %2545 = vst [vmem:[%s135 + $0xb38] sm:$0xff] %v2033
        %2546 = vst [vmem:[%s135 + $0xb40] sm:$0xff] %v2034
        %2547 = vst [vmem:[%s135 + $0xb48] sm:$0xff] %v2035
        %2548 = vst [vmem:[%s135 + $0xb50] sm:$0xff] %v2036
        %2549 = vst [vmem:[%s135 + $0xb58] sm:$0xff] %v2037
        %2550 = vst [vmem:[%s135 + $0xb60] sm:$0xff] %v2038
        %2551 = vst [vmem:[%s135 + $0xb68] sm:$0xff] %v2039
        %2552 = vst [vmem:[%s135 + $0xb70] sm:$0xff] %v2040
        %2553 = vst [vmem:[%s135 + $0xb78] sm:$0xff] %v2041
        %2554 = vst [vmem:[%s135 + $0xb80] sm:$0xff] %v2042
        %2555 = vst [vmem:[%s135 + $0xb88] sm:$0xff] %v2043
        %2556 = vst [vmem:[%s135 + $0xb90] sm:$0xff] %v2044
        %2557 = vst [vmem:[%s135 + $0xb98] sm:$0xff] %v2045
        %2558 = vst [vmem:[%s135 + $0xba0] sm:$0xff] %v2046
        %2559 = vst [vmem:[%s135 + $0xba8] sm:$0xff] %v2047
        %2560 = vst [vmem:[%s135 + $0xbb0] sm:$0xff] %v2048
        %2561 = vst [vmem:[%s135 + $0xbb8] sm:$0xff] %v2049
        %2562 = vst [vmem:[%s135 + $0xbc0] sm:$0xff] %v2050
        %2563 = vst [vmem:[%s135 + $0xbc8] sm:$0xff] %v2051
        %2564 = vst [vmem:[%s135 + $0xbd0] sm:$0xff] %v2052
        %2565 = vst [vmem:[%s135 + $0xbd8] sm:$0xff] %v2053
        %2566 = vst [vmem:[%s135 + $0xbe0] sm:$0xff] %v2054
        %2567 = vst [vmem:[%s135 + $0xbe8] sm:$0xff] %v2055
        %2568 = vst [vmem:[%s135 + $0xbf0] sm:$0xff] %v2056
        %2569 = vst [vmem:[%s135 + $0xbf8] sm:$0xff] %v2057
        %2570 = vst [vmem:[%s135 + $0xc00] sm:$0xff] %v2058
        %2571 = vst [vmem:[%s135 + $0xc08] sm:$0xff] %v2059
        %2572 = vst [vmem:[%s135 + $0xc10] sm:$0xff] %v2060
        %2573 = vst [vmem:[%s135 + $0xc18] sm:$0xff] %v2061
        %2574 = vst [vmem:[%s135 + $0xc20] sm:$0xff] %v2062
        %2575 = vst [vmem:[%s135 + $0xc28] sm:$0xff] %v2063
        %2576 = vst [vmem:[%s135 + $0xc30] sm:$0xff] %v2064
        %2577 = vst [vmem:[%s135 + $0xc38] sm:$0xff] %v2065
        %2578 = vst [vmem:[%s135 + $0xc40] sm:$0xff] %v2066
        %2579 = vst [vmem:[%s135 + $0xc48] sm:$0xff] %v2067
        %2580 = vst [vmem:[%s135 + $0xc50] sm:$0xff] %v2068
        %2581 = vst [vmem:[%s135 + $0xc58] sm:$0xff] %v2069
        %2582 = vst [vmem:[%s135 + $0xc60] sm:$0xff] %v2070
        %2583 = vst [vmem:[%s135 + $0xc68] sm:$0xff] %v2071
        %2584 = vst [vmem:[%s135 + $0xc70] sm:$0xff] %v2072
        %2585 = vst [vmem:[%s135 + $0xc78] sm:$0xff] %v2073
        %2586 = vst [vmem:[%s135 + $0xc80] sm:$0xff] %v2074
        %2587 = vst [vmem:[%s135 + $0xc88] sm:$0xff] %v2075
        %2588 = vst [vmem:[%s135 + $0xc90] sm:$0xff] %v2076
        %2589 = vst [vmem:[%s135 + $0xc98] sm:$0xff] %v2077
        %2590 = vst [vmem:[%s135 + $0xca0] sm:$0xff] %v2078
        %2591 = vst [vmem:[%s135 + $0xca8] sm:$0xff] %v2079
        %2592 = vst [vmem:[%s135 + $0xcb0] sm:$0xff] %v2080
        %2593 = vst [vmem:[%s135 + $0xcb8] sm:$0xff] %v2081
        %2594 = vst [vmem:[%s135 + $0xcc0] sm:$0xff] %v2082
        %2595 = vst [vmem:[%s135 + $0xcc8] sm:$0xff] %v2083
        %2596 = vst [vmem:[%s135 + $0xcd0] sm:$0xff] %v2084
        %2597 = vst [vmem:[%s135 + $0xcd8] sm:$0xff] %v2085
        %2598 = vst [vmem:[%s135 + $0xce0] sm:$0xff] %v2086
        %2599 = vst [vmem:[%s135 + $0xce8] sm:$0xff] %v2087
        %2600 = vst [vmem:[%s135 + $0xcf0] sm:$0xff] %v2088
        %2601 = vst [vmem:[%s135 + $0xcf8] sm:$0xff] %v2089
        %2602 = vst [vmem:[%s135 + $0xd00] sm:$0xff] %v2090
        %2603 = vst [vmem:[%s135 + $0xd08] sm:$0xff] %v2091
        %2604 = vst [vmem:[%s135 + $0xd10] sm:$0xff] %v2092
        %2605 = vst [vmem:[%s135 + $0xd18] sm:$0xff] %v2093
        %2606 = vst [vmem:[%s135 + $0xd20] sm:$0xff] %v2094
        %2607 = vst [vmem:[%s135 + $0xd28] sm:$0xff] %v2095
        %2608 = vst [vmem:[%s135 + $0xd30] sm:$0xff] %v2096
        %2609 = vst [vmem:[%s135 + $0xd38] sm:$0xff] %v2097
        %2610 = vst [vmem:[%s135 + $0xd40] sm:$0xff] %v2098
        %2611 = vst [vmem:[%s135 + $0xd48] sm:$0xff] %v2099
        %2612 = vst [vmem:[%s135 + $0xd50] sm:$0xff] %v2100
        %2613 = vst [vmem:[%s135 + $0xd58] sm:$0xff] %v2101
        %2614 = vst [vmem:[%s135 + $0xd60] sm:$0xff] %v2102
        %2615 = vst [vmem:[%s135 + $0xd68] sm:$0xff] %v2103
        %2616 = vst [vmem:[%s135 + $0xd70] sm:$0xff] %v2104
        %2617 = vst [vmem:[%s135 + $0xd78] sm:$0xff] %v2105
        %2618 = vst [vmem:[%s135 + $0xd80] sm:$0xff] %v2106
        %2619 = vst [vmem:[%s135 + $0xd88] sm:$0xff] %v2107
        %2620 = vst [vmem:[%s135 + $0xd90] sm:$0xff] %v2108
        %2621 = vst [vmem:[%s135 + $0xd98] sm:$0xff] %v2109
        %2622 = vst [vmem:[%s135 + $0xda0] sm:$0xff] %v2110
        %2623 = vst [vmem:[%s135 + $0xda8] sm:$0xff] %v2111
        %2624 = vst [vmem:[%s135 + $0xdb0] sm:$0xff] %v2112
        %2625 = vst [vmem:[%s135 + $0xdb8] sm:$0xff] %v2113
        %2626 = vst [vmem:[%s135 + $0xdc0] sm:$0xff] %v2114
        %2627 = vst [vmem:[%s135 + $0xdc8] sm:$0xff] %v2115
        %2628 = vst [vmem:[%s135 + $0xdd0] sm:$0xff] %v2116
        %2629 = vst [vmem:[%s135 + $0xdd8] sm:$0xff] %v2117
        %2630 = vst [vmem:[%s135 + $0xde0] sm:$0xff] %v2118
        %2631 = vst [vmem:[%s135 + $0xde8] sm:$0xff] %v2119
        %2632 = vst [vmem:[%s135 + $0xdf0] sm:$0xff] %v2120
        %2633 = vst [vmem:[%s135 + $0xdf8] sm:$0xff] %v2121
        %2634 = vst [vmem:[%s135 + $0xe00] sm:$0xff] %v2122
        %2635 = vst [vmem:[%s135 + $0xe08] sm:$0xff] %v2123
        %2636 = vst [vmem:[%s135 + $0xe10] sm:$0xff] %v2124
        %2637 = vst [vmem:[%s135 + $0xe18] sm:$0xff] %v2125
        %2638 = vst [vmem:[%s135 + $0xe20] sm:$0xff] %v2126
        %2639 = vst [vmem:[%s135 + $0xe28] sm:$0xff] %v2127
        %2640 = vst [vmem:[%s135 + $0xe30] sm:$0xff] %v2128
        %2641 = vst [vmem:[%s135 + $0xe38] sm:$0xff] %v2129
        %2642 = vst [vmem:[%s135 + $0xe40] sm:$0xff] %v2130
        %2643 = vst [vmem:[%s135 + $0xe48] sm:$0xff] %v2131
        %2644 = vst [vmem:[%s135 + $0xe50] sm:$0xff] %v2132
        %2645 = vst [vmem:[%s135 + $0xe58] sm:$0xff] %v2133
        %2646 = vst [vmem:[%s135 + $0xe60] sm:$0xff] %v2134
        %2647 = vst [vmem:[%s135 + $0xe68] sm:$0xff] %v2135
        %2648 = vst [vmem:[%s135 + $0xe70] sm:$0xff] %v2136
        %2649 = vst [vmem:[%s135 + $0xe78] sm:$0xff] %v2137
        %2650 = vst [vmem:[%s135 + $0xe80] sm:$0xff] %v2138
        %2651 = vst [vmem:[%s135 + $0xe88] sm:$0xff] %v2139
        %2652 = vst [vmem:[%s135 + $0xe90] sm:$0xff] %v2140
        %2653 = vst [vmem:[%s135 + $0xe98] sm:$0xff] %v2141
        %2654 = vst [vmem:[%s135 + $0xea0] sm:$0xff] %v2142
        %2655 = vst [vmem:[%s135 + $0xea8] sm:$0xff] %v2143
        %2656 = vst [vmem:[%s135 + $0xeb0] sm:$0xff] %v2144
        %2657 = vst [vmem:[%s135 + $0xeb8] sm:$0xff] %v2145
        %2658 = vst [vmem:[%s135 + $0xec0] sm:$0xff] %v2146
        %2659 = vst [vmem:[%s135 + $0xec8] sm:$0xff] %v2147
        %2660 = vst [vmem:[%s135 + $0xed0] sm:$0xff] %v2148
        %2661 = vst [vmem:[%s135 + $0xed8] sm:$0xff] %v2149
        %2662 = vst [vmem:[%s135 + $0xee0] sm:$0xff] %v2150
        %2663 = vst [vmem:[%s135 + $0xee8] sm:$0xff] %v2151
        %2664 = vst [vmem:[%s135 + $0xef0] sm:$0xff] %v2152
        %2665 = vst [vmem:[%s135 + $0xef8] sm:$0xff] %v2153
        %2666 = vst [vmem:[%s135 + $0xf00] sm:$0xff] %v2154
        %2667 = vst [vmem:[%s135 + $0xf08] sm:$0xff] %v2155
        %2668 = vst [vmem:[%s135 + $0xf10] sm:$0xff] %v2156
        %2669 = vst [vmem:[%s135 + $0xf18] sm:$0xff] %v2157
        %2670 = vst [vmem:[%s135 + $0xf20] sm:$0xff] %v2158
        %2671 = vst [vmem:[%s135 + $0xf28] sm:$0xff] %v2159
        %2672 = vst [vmem:[%s135 + $0xf30] sm:$0xff] %v2160
        %2673 = vst [vmem:[%s135 + $0xf38] sm:$0xff] %v2161
        %2674 = vst [vmem:[%s135 + $0xf40] sm:$0xff] %v2162
        %2675 = vst [vmem:[%s135 + $0xf48] sm:$0xff] %v2163
        %2676 = vst [vmem:[%s135 + $0xf50] sm:$0xff] %v2164
        %2677 = vst [vmem:[%s135 + $0xf58] sm:$0xff] %v2165
        %2678 = vst [vmem:[%s135 + $0xf60] sm:$0xff] %v2166
        %2679 = vst [vmem:[%s135 + $0xf68] sm:$0xff] %v2167
        %2680 = vst [vmem:[%s135 + $0xf70] sm:$0xff] %v2168
        %2681 = vst [vmem:[%s135 + $0xf78] sm:$0xff] %v2169
        %2682 = vst [vmem:[%s135 + $0xf80] sm:$0xff] %v2170
        %2683 = vst [vmem:[%s135 + $0xf88] sm:$0xff] %v2171
        %2684 = vst [vmem:[%s135 + $0xf90] sm:$0xff] %v2172
        %2685 = vst [vmem:[%s135 + $0xf98] sm:$0xff] %v2173
        %2686 = vst [vmem:[%s135 + $0xfa0] sm:$0xff] %v2174
        %2687 = vst [vmem:[%s135 + $0xfa8] sm:$0xff] %v2175
        %2688 = vst [vmem:[%s135 + $0xfb0] sm:$0xff] %v2176
        %2689 = vst [vmem:[%s135 + $0xfb8] sm:$0xff] %v2177
        %2690 = vst [vmem:[%s135 + $0xfc0] sm:$0xff] %v2178
        %2691 = vst [vmem:[%s135 + $0xfc8] sm:$0xff] %v2179
        %2692 = vst [vmem:[%s135 + $0xfd0] sm:$0xff] %v2180
        %2693 = vst [vmem:[%s135 + $0xfd8] sm:$0xff] %v2181
        %2694 = vst [vmem:[%s135 + $0xfe0] sm:$0xff] %v2182
        %2695 = vst [vmem:[%s135 + $0xfe8] sm:$0xff] %v2183
        %2696 = vst [vmem:[%s135 + $0xff0] sm:$0xff] %v2184
        %2697 = vst [vmem:[%s135 + $0xff8] sm:$0xff] %v2185
        %s2698 = sand.u32 %s52, 1
        %s2699 = scalar_lea.sflag [#allocation4], %s2698
        %s2700 = sand.u32 %s52, 1
        %s2701 = smul.addr %s2700, 4096
        %s2702 = scalar_lea.vmem [#allocation5], %s2701
        // Predicated region
        $region29: #{tpu_custom_call.1} parent=23 // pred_check
          %p2703 = pneg %p62
        $region30: #{tpu_custom_call.1} parent=23 // pred_check_branch
          %2705 = sbr.rel (%p2703) target = $region32
        $region31: #{tpu_custom_call.1} parent=23 // pred_region
          %s2706 = smul.u32 64, %s18
          %s2708 = ssub.s32 65536, 65536
          %2709 = vsyncadd %s2699, %s2708
          %s2710 = smul.addr %s2706, 8
          %s2711 = smul.addr %s2710, 128
          %s2712 = scalar_lea.hbm %s1, %s2711
          %s2713 = sshll.u32 %s2702, 4
          %s2714 = int_to_ptr.vmem [resolvable:$true] %s2713
          %2719 = dma.vmem_to_hbm [thread:$0]  %s2714, 65536, %s2712, %s2699, 1024, 1024, 64
        $region32: #{tpu_custom_call.1} parent=23 // pred_fallthru
          _
      $region24: #{tpu_custom_call.1} parent=5 // pred_fallthru
        _
      %p2720 = scmp.le.s32.totalorder 2, %s13
      // Predicated region
      $region33: #{tpu_custom_call.1} parent=5 // pred_check
        %p2721 = pneg %p2720
      $region34: #{tpu_custom_call.1} parent=5 // pred_check_branch
        %2723 = sbr.rel (%p2721) target = $region36
      $region35: #{tpu_custom_call.1} parent=5 // pred_region
        %s2724 = ssub.s32 %s13, 2
        // Predicated region
        $region37: #{tpu_custom_call.1} parent=35 // pred_check
          %p2725 = pneg %p68
        $region38: #{tpu_custom_call.1} parent=35 // pred_check_branch
          %2727 = sbr.rel (%p2725) target = $region40
        $region39: #{tpu_custom_call.1} parent=35 // pred_region
          %s2728 = sand.u32 %s53, 1
          %s2729 = scalar_lea.sflag [#allocation4], %s2728
          %s2730 = sand.u32 %s53, 1
          %s2731 = smul.addr %s2730, 4096
          %s2732 = scalar_lea.vmem [#allocation5], %s2731
          %2733 = dma.done %s2729, 65536
        $region40: #{tpu_custom_call.1} parent=35 // pred_fallthru
          _
      $region36: #{tpu_custom_call.1} parent=5 // pred_fallthru
        _
    $region6: #{tpu_custom_call.1} parent=1 // loop_footer
      %s17 = sadd.s32 1, %s13
    $region7: #{tpu_custom_call.1} parent=1 // loop_footer_branch
      %12 = sbr.rel target = $region3
    $region8: #{tpu_custom_call.1} parent=1 // loop_exit
      _
    %2734 = vsyncpa [#allocation3], 1
    %s2735 = scalar_lea.sflag [#allocation3], 1
    %2736 = vsyncpa %s2735, 1
    %2737 = vsyncpa [#allocation4], 1
    %s2738 = scalar_lea.sflag [#allocation4], 1
    %2739 = vsyncpa %s2738, 1

</llo_original>
